<compile_context>
chip_gen: v6e
topology: v6e:2x2x1
jax: 0.10.0
libtpu: 0.0.40
codegen_flags: <defaults>
</compile_context>

<pallas_src>
import functools

import jax
import jax.numpy as jnp
from jax.experimental import pallas as pl
from jax.experimental.pallas import tpu as pltpu

F32 = jnp.float32
BF16 = jnp.bfloat16
BN_EPS = 1e-5
DEFAULT_TILE_N = 2048        # per-step point tile (lane dim); multiple of 128
VMEM_LIMIT = 48 * 1024 * 1024


def _round_up(a, m):
    return -(-a // m) * m


# ----------------------------- kernel ---------------------------------------


def conv_stack_max_kernel(x_ref, w1t_ref, b1t_ref, w2t_ref, b2t_ref, w3t_ref, b3t_ref,
                          out_ref, acc_ref, *, final_relu):
    """Fused channel-major conv/BN/ReLU stack + running max over a tile of points.

    x_ref  : (1, Cin, TN) f32 (native PyTorch layout slab)
    w1t_ref: (1, C1, Cin) f32          b1t_ref: (C1, 1) f32
    w2t_ref: (C2, C1) bf16             b2t_ref: (C2, 1) f32
    w3t_ref: (C3, C2) bf16             b3t_ref: (C3, 1) f32
    out_ref: (1, 1, C3, 1) f32 (one block per (batch, split))
    acc_ref: (C3, ACC_W) f32 VMEM scratch carrying the wide running max across n.
    """
    n = pl.program_id(2)

    @pl.when(n == 0)
    def _():
        acc_ref[...] = jnp.full_like(acc_ref, -jnp.inf)

    x = x_ref[0]                      # (Cin, TN) f32
    w1t = w1t_ref[0]                  # (C1, Cin) f32
    cin = x.shape[0]

    # layer 1 on the VPU: Cin broadcast FMAs in f32 (K=3 would waste MXU pushes).
    h = w1t[:, 0:1] * x[0:1, :]
    for j in range(1, cin):
        h = h + w1t[:, j:j + 1] * x[j:j + 1, :]
    h = jnp.maximum(h + b1t_ref[...], 0.0)                                   # (C1, TN)

    # layers 2/3 on the MXU: bf16 operands, f32 accumulation, channel-major.
    h = jnp.dot(w2t_ref[...], h.astype(BF16), preferred_element_type=F32)
    h = jnp.maximum(h + b2t_ref[...], 0.0)                                   # (C2, TN)
    h = jnp.dot(w3t_ref[...], h.astype(BF16), preferred_element_type=F32)    # (C3, TN)

    # Per-tile running max over points: keep the accumulator ACC_W (<=128) lanes wide so
    # the tile reduction is pure VPU element-wise maxima over lane-aligned slices.
    # The bn3 bias and final ReLU are hoisted past the max (exact) into the finalize.
    tn = h.shape[1]
    acc_w = acc_ref.shape[1]
    m = acc_ref[...]
    for i in range(tn // acc_w):
        m = jnp.maximum(m, h[:, i * acc_w:(i + 1) * acc_w])
    acc_ref[...] = m

    @pl.when(n == pl.num_programs(2) - 1)
    def _():
        r = jnp.max(acc_ref[...], axis=1, keepdims=True) + b3t_ref[...]      # (C3, 1)
        if final_relu:
            r = jnp.maximum(r, 0.0)
        out_ref[0, 0] = r


# ----------------------------- wrappers --------------------------------------


def conv_stack_max(x_bcn, conv_params, *, final_relu,
                   tile_n=DEFAULT_TILE_N, n_splits=2):
    """x_bcn: (B, Cin, N) f32 in native layout.  Returns (B, C3) f32 = max over points."""
    w1t, b1, w2t, b2, w3t, b3 = conv_params
    B, cin, N = x_bcn.shape
    if w1t.ndim == 2:                                   # shared first-layer weight
        w1t = w1t[None]                                 # (1, C1, Cin)
    c1, c2, c3 = w1t.shape[1], w2t.shape[0], w3t.shape[0]
    assert tile_n % 128 == 0, "point tile must be a multiple of 128 lanes"

    # --- plan the point tiling -------------------------------------------------
    # A single tile may have an arbitrary lane extent (block == full dim); otherwise
    # tiles must be 128-lane multiples.  Padding uses duplicated points (max-invariant).
    if N <= 128 or (n_splits <= 1 and N <= tile_n):
        tn, nt, n_splits = N, 1, 1
    else:
        n_splits = max(1, n_splits)
        nt = pl.cdiv(N, n_splits * tile_n)                        # tiles per split
        tn = _round_up(pl.cdiv(N, n_splits * nt), 128)            # 128-multiple tile
    n_pad = n_splits * nt * tn
    if n_pad != N:
        pad = jnp.broadcast_to(x_bcn[:, :, :1], (B, cin, n_pad - N))
        x_bcn = jnp.concatenate([x_bcn, pad], axis=2)

    acc_w = min(tn, 128)
    w1_map = ((lambda b, s, n: (b, 0, 0)) if w1t.shape[0] > 1
              else (lambda b, s, n: (0, 0, 0)))
    kernel = functools.partial(conv_stack_max_kernel, final_relu=final_relu)

    out = pl.pallas_call(
        kernel,
        out_shape=jax.ShapeDtypeStruct((B, n_splits, c3, 1), F32),
        grid=(B, n_splits, nt),
        in_specs=[
            pl.BlockSpec((1, cin, tn), lambda b, s, n, nt=nt: (b, 0, s * nt + n)),
            pl.BlockSpec((1, c1, cin), w1_map),
            pl.BlockSpec((c1, 1), lambda b, s, n: (0, 0)),
            pl.BlockSpec((c2, c1), lambda b, s, n: (0, 0)),
            pl.BlockSpec((c2, 1), lambda b, s, n: (0, 0)),
            pl.BlockSpec((c3, c2), lambda b, s, n: (0, 0)),
            pl.BlockSpec((c3, 1), lambda b, s, n: (0, 0)),
        ],
        out_specs=pl.BlockSpec((1, 1, c3, 1), lambda b, s, n: (b, s, 0, 0)),
        scratch_shapes=[pltpu.VMEM((c3, acc_w), F32)],
        compiler_params=pltpu.CompilerParams(
            dimension_semantics=("parallel", "parallel", "arbitrary"),
            vmem_limit_bytes=VMEM_LIMIT),
    )(x_bcn, w1t, b1, w2t, b2, w3t, b3)

    return jnp.max(out[..., 0], axis=1)                 # combine core splits -> (B, C3)


def stn_fc_head(g, params, iden):
    # Tiny (<=B rows, 9-lane output) GEMMs: left to XLA per perf review (layout-hostile).
    w1, b1, w2, b2, w3, b3 = params
    h = jnp.maximum(jnp.dot(g.astype(BF16), w1, preferred_element_type=F32) + b1, 0.0)
    h = jnp.maximum(jnp.dot(h.astype(BF16), w2, preferred_element_type=F32) + b2, 0.0)
    h = jnp.dot(h.astype(BF16), w3, preferred_element_type=F32) + b3
    return h + iden                                      # (B, 9)


# --------------------------- parameter setup ---------------------------------


def _fold_bn(W, cb, gamma, beta, mu, var):
    # eval-mode BN folded into the preceding linear/conv(k=1).
    s = gamma / jnp.sqrt(var + BN_EPS)
    return W * s[:, None], (cb - mu) * s + beta          # (Cout, Cin) f32, (Cout,) f32


def _rand_lbn(key, cin, cout):
    ks = jax.random.split(key, 6)
    W = 0.1 * jax.random.normal(ks[0], (cout, cin), F32)  # PyTorch (out, in[, 1])
    cb = 0.1 * jax.random.normal(ks[1], (cout,), F32)
    gamma = 1.0 + 0.1 * jax.random.normal(ks[2], (cout,), F32)
    beta = 0.1 * jax.random.normal(ks[3], (cout,), F32)
    mu = 0.1 * jax.random.normal(ks[4], (cout,), F32)
    var = 0.9 + 0.2 * jax.random.uniform(ks[5], (cout,), F32)
    return _fold_bn(W, cb, gamma, beta, mu, var)


def _conv_bn_params(key, cin, cout, w_dtype):
    # channel-major storage for the fused conv kernel: (Cout, Cin) weight, (Cout, 1) bias.
    wt, b = _rand_lbn(key, cin, cout)
    return wt.astype(w_dtype), b[:, None].astype(F32)


def _fc_bn_params(key, cin, cout):
    # row-major storage for the XLA FC head: (Cin, Cout) weight, (1, Cout) bias.
    wt, b = _rand_lbn(key, cin, cout)
    return wt.T.astype(BF16), b[None, :].astype(F32)


def _fc_params(key, cin, cout):
    kw, kb = jax.random.split(key)
    W = 0.1 * jax.random.normal(kw, (cout, cin), F32)
    b = 0.1 * jax.random.normal(kb, (cout,), F32)
    return W.T.astype(BF16), b[None, :].astype(F32)


def init_params(key):
    k = jax.random.split(key, 9)
    stn_conv = (*_conv_bn_params(k[0], 3, 64, F32),       # layer 1 stays f32 (VPU path)
                *_conv_bn_params(k[1], 64, 128, BF16),
                *_conv_bn_params(k[2], 128, 1024, BF16))
    stn_fc = (*_fc_bn_params(k[3], 1024, 512),
              *_fc_bn_params(k[4], 512, 256),
              *_fc_params(k[5], 256, 9))
    feat_conv = (*_conv_bn_params(k[6], 3, 64, F32),
                 *_conv_bn_params(k[7], 64, 128, BF16),
                 *_conv_bn_params(k[8], 128, 1024, BF16))
    iden = jnp.eye(3, dtype=F32).reshape(1, 9)
    return dict(stn_conv=stn_conv, stn_fc=stn_fc, feat_conv=feat_conv, iden=iden)


# ------------------------------ forward --------------------------------------


def pointnetfeat_forward(x_bcn, params, tile_n=DEFAULT_TILE_N, n_splits=2):
    """x_bcn: (B, 3, N) f32 (PyTorch NCW, kept native — no wrapper transpose).

    Returns (global_feat (B, 1024), trans (B, 3, 3), None).
    """
    x_bcn = x_bcn.astype(F32)
    B = x_bcn.shape[0]

    # STN3d: fused conv stack (+relu after bn3, hoisted past the max) then tiny FC head.
    g_stn = conv_stack_max(x_bcn, params["stn_conv"], final_relu=True,
                           tile_n=tile_n, n_splits=n_splits)
    trans = stn_fc_head(g_stn, params["stn_fc"], params["iden"]).reshape(B, 3, 3)

    # Main path: fold trans into conv1's weight -> same fused kernel (no relu after bn3).
    fw1t, fb1, fw2t, fb2, fw3t, fb3 = params["feat_conv"]
    # w1t_eff[b, c, j] = sum_i fw1t[c, i] * trans[b, j, i]   (channel-major fold, f32)
    w1t_eff = jnp.einsum("ci,bji->bcj", fw1t, trans)       # (B, 64, 3) f32
    glob = conv_stack_max(x_bcn, (w1t_eff, fb1, fw2t, fb2, fw3t, fb3),
                          final_relu=False, tile_n=tile_n, n_splits=n_splits)
    return glob, trans, None                               # trans_feat is None


# --------------------------- reference (plain JAX) ----------------------------


def _reference(x_bcn, params):
    x = x_bcn.astype(F32)

    def stack_max(xb, w1t, b1, w2t, b2, w3t, b3, final_relu):
        if w1t.ndim == 2:
            w1t = w1t[None]
        h = w1t[:, :, 0:1] * xb[:, 0:1, :]
        for j in range(1, xb.shape[1]):
            h = h + w1t[:, :, j:j + 1] * xb[:, j:j + 1, :]
        h = jnp.maximum(h + b1[None], 0.0)
        h = jnp.einsum("dc,bcn->bdn", w2t, h.astype(BF16), preferred_element_type=F32)
        h = jnp.maximum(h + b2[None], 0.0)
        h = jnp.einsum("dc,bcn->bdn", w3t, h.astype(BF16), preferred_element_type=F32)
        g = jnp.max(h, axis=2) + b3[:, 0][None]
        if final_relu:
            g = jnp.maximum(g, 0.0)
        return g

    g = stack_max(x, *params["stn_conv"], True)
    trans = stn_fc_head(g, params["stn_fc"], params["iden"]).reshape(-1, 3, 3)
    fw1t, fb1, fw2t, fb2, fw3t, fb3 = params["feat_conv"]
    w1t_eff = jnp.einsum("ci,bji->bcj", fw1t, trans)
    glob = stack_max(x, w1t_eff, fb1, fw2t, fb2, fw3t, fb3, False)
    return glob, trans


# ----------------------------------- test ------------------------------------


if __name__ == "__main__":
    key = jax.random.PRNGKey(0)
    kparam, kx, kx2 = jax.random.split(key, 3)
    params = init_params(kparam)

    # Single-tile path (N <= 128 -> exact-width tile, no core split).
    B, N = 2, 16
    x = jax.random.normal(kx, (B, 3, N), F32)
    glob, trans, trans_feat = pointnetfeat_forward(x, params)
    jax.block_until_ready((glob, trans))
    ref_glob, ref_trans = _reference(x, params)
    assert glob.shape == (B, 1024) and trans.shape == (B, 3, 3) and trans_feat is None
    assert jnp.allclose(trans, ref_trans, atol=2e-3, rtol=2e-3)
    assert jnp.allclose(glob, ref_glob, atol=2e-3, rtol=2e-3)

    # Multi-tile running-max + 2-way core-split path with duplicate-point padding:
    # N=300, tile_n=128 -> 2 splits x 2 tiles of 128 points, padded 300 -> 512.
    N2 = 300
    x2 = jax.random.normal(kx2, (B, 3, N2), F32)
    glob2, trans2, _ = pointnetfeat_forward(x2, params, tile_n=128)
    jax.block_until_ready((glob2, trans2))
    ref_glob2, ref_trans2 = _reference(x2, params)
    assert glob2.shape == (B, 1024) and trans2.shape == (B, 3, 3)
    assert jnp.allclose(trans2, ref_trans2, atol=2e-3, rtol=2e-3)
    assert jnp.allclose(glob2, ref_glob2, atol=2e-3, rtol=2e-3)

    print("KERNEL_OK")
</pallas_src>

<mosaic_0001>
module attributes {stable_mosaic.version = 11 : i64} {
  func.func @conv_stack_max_kernel(%arg0: i32, %arg1: i32, %arg2: i32, %arg3: memref<1x3x16xf32, #tpu.memory_space<vmem>>, %arg4: memref<1x64x3xf32, #tpu.memory_space<vmem>>, %arg5: memref<64x1xf32, #tpu.memory_space<vmem>>, %arg6: memref<128x64xbf16, #tpu.memory_space<vmem>>, %arg7: memref<128x1xf32, #tpu.memory_space<vmem>>, %arg8: memref<1024x128xbf16, #tpu.memory_space<vmem>>, %arg9: memref<1024x1xf32, #tpu.memory_space<vmem>>, %arg10: memref<1x1x1024x1xf32, #tpu.memory_space<vmem>>, %arg11: memref<1024x16xf32, #tpu.memory_space<vmem>>) attributes {dimension_semantics = [#tpu.dimension_semantics<parallel>, #tpu.dimension_semantics<parallel>, #tpu.dimension_semantics<arbitrary>], iteration_bounds = array<i64: 2, 1, 1>, scalar_prefetch = 0 : i64, scratch_operands = 1 : i64, tpu.core_type = #tpu.core_type<tc>, window_params = [{transform_indices = @transform_0, window_bounds = array<i64: 1, 3, 16>}, {pipeline_mode = #tpu.pipeline_mode<synchronous>, transform_indices = @transform_1, window_bounds = array<i64: 1, 64, 3>}, {pipeline_mode = #tpu.pipeline_mode<synchronous>, transform_indices = @transform_2, window_bounds = array<i64: 64, 1>}, {pipeline_mode = #tpu.pipeline_mode<synchronous>, transform_indices = @transform_3, window_bounds = array<i64: 128, 64>}, {pipeline_mode = #tpu.pipeline_mode<synchronous>, transform_indices = @transform_4, window_bounds = array<i64: 128, 1>}, {pipeline_mode = #tpu.pipeline_mode<synchronous>, transform_indices = @transform_5, window_bounds = array<i64: 1024, 128>}, {pipeline_mode = #tpu.pipeline_mode<synchronous>, transform_indices = @transform_6, window_bounds = array<i64: 1024, 1>}, {transform_indices = @transform_7, window_bounds = array<i64: 1, 1, 1024, 1>}]} {
    %c0_i32 = arith.constant 0 : i32
    %0 = arith.cmpi eq, %arg2, %c0_i32 : i32
    %1 = arith.extui %0 : i1 to i32
    %c0_i32_0 = arith.constant 0 : i32
    %2 = arith.cmpi ne, %1, %c0_i32_0 : i32
    scf.if %2 {
      %cst_23 = arith.constant 0xFF800000 : f32
      %46 = vector.broadcast %cst_23 : f32 to vector<1024x16xf32>
      %c0_24 = arith.constant 0 : index
      %c0_25 = arith.constant 0 : index
      %47 = vector.load %arg11[%c0_24, %c0_25] : memref<1024x16xf32, #tpu.memory_space<vmem>>, vector<1024x16xf32>
      tpu.vector_store %arg11[%c0_24, %c0_25], %46 {strides = array<i32>} : memref<1024x16xf32, #tpu.memory_space<vmem>>, vector<1024x16xf32>,
    } else {
    }
    %c0 = arith.constant 0 : index
    %c0_1 = arith.constant 0 : index
    %c0_2 = arith.constant 0 : index
    %3 = vector.load %arg3[%c0, %c0_1, %c0_2] : memref<1x3x16xf32, #tpu.memory_space<vmem>>, vector<1x3x16xf32>
    %4 = vector.shape_cast %3 : vector<1x3x16xf32> to vector<3x16xf32>
    %c0_3 = arith.constant 0 : index
    %c0_4 = arith.constant 0 : index
    %c0_5 = arith.constant 0 : index
    %5 = vector.load %arg4[%c0_3, %c0_4, %c0_5] : memref<1x64x3xf32, #tpu.memory_space<vmem>>, vector<1x64x3xf32>
    %6 = vector.shape_cast %5 : vector<1x64x3xf32> to vector<64x3xf32>
    %7 = vector.extract_strided_slice %6 {offsets = [0, 0], sizes = [64, 1], strides = [1, 1]} : vector<64x3xf32> to vector<64x1xf32>
    %8 = vector.extract_strided_slice %4 {offsets = [0, 0], sizes = [1, 16], strides = [1, 1]} : vector<3x16xf32> to vector<1x16xf32>
    %9 = vector.broadcast %7 : vector<64x1xf32> to vector<64x16xf32>
    %10 = vector.broadcast %8 : vector<1x16xf32> to vector<64x16xf32>
    %11 = arith.mulf %9, %10 : vector<64x16xf32>
    %12 = vector.extract_strided_slice %6 {offsets = [0, 1], sizes = [64, 1], strides = [1, 1]} : vector<64x3xf32> to vector<64x1xf32>
    %13 = vector.extract_strided_slice %4 {offsets = [1, 0], sizes = [1, 16], strides = [1, 1]} : vector<3x16xf32> to vector<1x16xf32>
    %14 = vector.broadcast %12 : vector<64x1xf32> to vector<64x16xf32>
    %15 = vector.broadcast %13 : vector<1x16xf32> to vector<64x16xf32>
    %16 = arith.mulf %14, %15 : vector<64x16xf32>
    %17 = arith.addf %11, %16 : vector<64x16xf32>
    %18 = vector.extract_strided_slice %6 {offsets = [0, 2], sizes = [64, 1], strides = [1, 1]} : vector<64x3xf32> to vector<64x1xf32>
    %19 = vector.extract_strided_slice %4 {offsets = [2, 0], sizes = [1, 16], strides = [1, 1]} : vector<3x16xf32> to vector<1x16xf32>
    %20 = vector.broadcast %18 : vector<64x1xf32> to vector<64x16xf32>
    %21 = vector.broadcast %19 : vector<1x16xf32> to vector<64x16xf32>
    %22 = arith.mulf %20, %21 : vector<64x16xf32>
    %23 = arith.addf %17, %22 : vector<64x16xf32>
    %c0_6 = arith.constant 0 : index
    %c0_7 = arith.constant 0 : index
    %24 = vector.load %arg5[%c0_6, %c0_7] : memref<64x1xf32, #tpu.memory_space<vmem>>, vector<64x1xf32>
    %25 = vector.broadcast %24 : vector<64x1xf32> to vector<64x16xf32>
    %26 = arith.addf %23, %25 : vector<64x16xf32>
    %cst = arith.constant 0.000000e+00 : f32
    %27 = vector.broadcast %cst : f32 to vector<64x16xf32>
    %28 = arith.maximumf %26, %27 : vector<64x16xf32>
    %c0_8 = arith.constant 0 : index
    %c0_9 = arith.constant 0 : index
    %29 = vector.load %arg6[%c0_8, %c0_9] : memref<128x64xbf16, #tpu.memory_space<vmem>>, vector<128x64xbf16>
    %30 = arith.truncf %28 : vector<64x16xf32> to vector<64x16xbf16>
    %cst_10 = arith.constant dense<0.000000e+00> : vector<128x16xf32>
    %31 = tpu.matmul %29, %30, %cst_10 {dimension_numbers = #tpu.dot_dimension_numbers<[1], [0], [0], [1], [0, 0, 1, 1], [], []>} : vector<128x64xbf16>, vector<64x16xbf16>, vector<128x16xf32> -> vector<128x16xf32>
    %c0_11 = arith.constant 0 : index
    %c0_12 = arith.constant 0 : index
    %32 = vector.load %arg7[%c0_11, %c0_12] : memref<128x1xf32, #tpu.memory_space<vmem>>, vector<128x1xf32>
    %33 = vector.broadcast %32 : vector<128x1xf32> to vector<128x16xf32>
    %34 = arith.addf %31, %33 : vector<128x16xf32>
    %cst_13 = arith.constant 0.000000e+00 : f32
    %35 = vector.broadcast %cst_13 : f32 to vector<128x16xf32>
    %36 = arith.maximumf %34, %35 : vector<128x16xf32>
    %c0_14 = arith.constant 0 : index
    %c0_15 = arith.constant 0 : index
    %37 = vector.load %arg8[%c0_14, %c0_15] : memref<1024x128xbf16, #tpu.memory_space<vmem>>, vector<1024x128xbf16>
    %38 = arith.truncf %36 : vector<128x16xf32> to vector<128x16xbf16>
    %cst_16 = arith.constant dense<0.000000e+00> : vector<1024x16xf32>
    %39 = tpu.matmul %37, %38, %cst_16 {dimension_numbers = #tpu.dot_dimension_numbers<[1], [0], [0], [1], [0, 0, 1, 1], [], []>} : vector<1024x128xbf16>, vector<128x16xbf16>, vector<1024x16xf32> -> vector<1024x16xf32>
    %c0_17 = arith.constant 0 : index
    %c0_18 = arith.constant 0 : index
    %40 = vector.load %arg11[%c0_17, %c0_18] : memref<1024x16xf32, #tpu.memory_space<vmem>>, vector<1024x16xf32>
    %41 = arith.maximumf %40, %39 : vector<1024x16xf32>
    %c0_19 = arith.constant 0 : index
    %c0_20 = arith.constant 0 : index
    %42 = vector.load %arg11[%c0_19, %c0_20] : memref<1024x16xf32, #tpu.memory_space<vmem>>, vector<1024x16xf32>
    tpu.vector_store %arg11[%c0_19, %c0_20], %41 {strides = array<i32>} : memref<1024x16xf32, #tpu.memory_space<vmem>>, vector<1024x16xf32>,
    %c0_i32_21 = arith.constant 0 : i32
    %43 = arith.cmpi eq, %arg2, %c0_i32_21 : i32
    %44 = arith.extui %43 : i1 to i32
    %c0_i32_22 = arith.constant 0 : i32
    %45 = arith.cmpi ne, %44, %c0_i32_22 : i32
    scf.if %45 {
      %c0_23 = arith.constant 0 : index
      %c0_24 = arith.constant 0 : index
      %46 = vector.load %arg11[%c0_23, %c0_24] : memref<1024x16xf32, #tpu.memory_space<vmem>>, vector<1024x16xf32>
      %cst_25 = arith.constant dense<0xFF800000> : vector<1024xf32>
      %47 = vector.multi_reduction <maximumf>, %46, %cst_25 [1] : vector<1024x16xf32> to vector<1024xf32>
      %48 = vector.shape_cast %47 : vector<1024xf32> to vector<1024x1xf32>
      %c0_26 = arith.constant 0 : index
      %c0_27 = arith.constant 0 : index
      %49 = vector.load %arg9[%c0_26, %c0_27] : memref<1024x1xf32, #tpu.memory_space<vmem>>, vector<1024x1xf32>
      %50 = arith.addf %48, %49 : vector<1024x1xf32>
      %cst_28 = arith.constant 0.000000e+00 : f32
      %51 = vector.broadcast %cst_28 : f32 to vector<1024x1xf32>
      %52 = arith.maximumf %50, %51 : vector<1024x1xf32>
      %c0_29 = arith.constant 0 : index
      %c0_30 = arith.constant 0 : index
      %c0_31 = arith.constant 0 : index
      %c0_32 = arith.constant 0 : index
      %53 = vector.load %arg10[%c0_29, %c0_30, %c0_31, %c0_32] : memref<1x1x1024x1xf32, #tpu.memory_space<vmem>>, vector<1x1x1024x1xf32>
      %54 = vector.shape_cast %53 : vector<1x1x1024x1xf32> to vector<1024x1xf32>
      %55 = vector.shape_cast %52 : vector<1024x1xf32> to vector<1x1x1024x1xf32>
      tpu.vector_store %arg10[%c0_29, %c0_30, %c0_31, %c0_32], %55 {strides = array<i32>} : memref<1x1x1024x1xf32, #tpu.memory_space<vmem>>, vector<1x1x1024x1xf32>,
    } else {
    }
    return
  }
  func.func @transform_0(%arg0: i32, %arg1: i32, %arg2: i32) -> (i32, i32, i32) {
    %c1_i32 = arith.constant 1 : i32
    %0 = arith.muli %arg1, %c1_i32 : i32
    %1 = arith.addi %0, %arg2 : i32
    %c0_i32 = arith.constant 0 : i32
    %c0_i32_0 = arith.constant 0 : i32
    return %arg0, %c0_i32, %1 : i32, i32, i32
  }
  func.func @transform_1(%arg0: i32, %arg1: i32, %arg2: i32) -> (i32, i32, i32) {
    %c0_i32 = arith.constant 0 : i32
    %c0_i32_0 = arith.constant 0 : i32
    %c0_i32_1 = arith.constant 0 : i32
    %c0_i32_2 = arith.constant 0 : i32
    return %c0_i32, %c0_i32_0, %c0_i32_1 : i32, i32, i32
  }
  func.func @transform_2(%arg0: i32, %arg1: i32, %arg2: i32) -> (i32, i32) {
    %c0_i32 = arith.constant 0 : i32
    %c0_i32_0 = arith.constant 0 : i32
    %c0_i32_1 = arith.constant 0 : i32
    return %c0_i32, %c0_i32_0 : i32, i32
  }
  func.func @transform_3(%arg0: i32, %arg1: i32, %arg2: i32) -> (i32, i32) {
    %c0_i32 = arith.constant 0 : i32
    %c0_i32_0 = arith.constant 0 : i32
    %c0_i32_1 = arith.constant 0 : i32
    return %c0_i32, %c0_i32_0 : i32, i32
  }
  func.func @transform_4(%arg0: i32, %arg1: i32, %arg2: i32) -> (i32, i32) {
    %c0_i32 = arith.constant 0 : i32
    %c0_i32_0 = arith.constant 0 : i32
    %c0_i32_1 = arith.constant 0 : i32
    return %c0_i32, %c0_i32_0 : i32, i32
  }
  func.func @transform_5(%arg0: i32, %arg1: i32, %arg2: i32) -> (i32, i32) {
    %c0_i32 = arith.constant 0 : i32
    %c0_i32_0 = arith.constant 0 : i32
    %c0_i32_1 = arith.constant 0 : i32
    return %c0_i32, %c0_i32_0 : i32, i32
  }
  func.func @transform_6(%arg0: i32, %arg1: i32, %arg2: i32) -> (i32, i32) {
    %c0_i32 = arith.constant 0 : i32
    %c0_i32_0 = arith.constant 0 : i32
    %c0_i32_1 = arith.constant 0 : i32
    return %c0_i32, %c0_i32_0 : i32, i32
  }
  func.func @transform_7(%arg0: i32, %arg1: i32, %arg2: i32) -> (i32, i32, i32, i32) {
    %c0_i32 = arith.constant 0 : i32
    %c0_i32_0 = arith.constant 0 : i32
    %c0_i32_1 = arith.constant 0 : i32
    return %arg0, %arg1, %c0_i32, %c0_i32_0 : i32, i32, i32, i32
  }
}

</mosaic_0001>

<llo_original>
// kernel: tpu_custom_call.1
$region0: #{tpu_custom_call.1}
  #allocation0 [shape = 'u32[]', space=smem, size = 0x4, offset = 0x4, fixed_abs, tag = 'smem constant byte address 0x4 - core index']
  #allocation1 [shape = 'u32[144,128]{1,0:T(1,128)}', space=vmem, size = 0x12000, scoped, tag = 'internal scratch']
  #allocation2 [shape = 'f32[1024,16]{1,0:T(8,128)}', space=vmem, size = 0x80000, scoped, tag = 'scratch operand']
  %s0 = inlined_call_operand.vmem [shape: f32[2,3,16], index: 0, kind: input, shape index: {}]
  %s1 = inlined_call_operand.vmem [shape: f32[1,64,3], index: 1, kind: input, shape index: {}]
  %s2 = inlined_call_operand.vmem [shape: f32[64,1], index: 2, kind: input, shape index: {}]
  %s3 = inlined_call_operand.vmem [shape: bf16[128,64], index: 3, kind: input, shape index: {}]
  %s4 = inlined_call_operand.vmem [shape: f32[128,1], index: 4, kind: input, shape index: {}]
  %s5 = inlined_call_operand.vmem [shape: bf16[1024,128], index: 5, kind: input, shape index: {}]
  %s6 = inlined_call_operand.vmem [shape: f32[1024,1], index: 6, kind: input, shape index: {}]
  %s7 = inlined_call_operand.vmem [shape: f32[2,1,1024,1], index: 7, kind: output, shape index: {}]
  %s8 = sld [smem:[#allocation0]]
  $region69: #{tpu_custom_call.1} parent=0
    _
  %s10 = ssub.s32 1, %s8
  %s11 = scalar_select 0, %s10, %s8
  loop: start=0, step=1, limit=4
  $region2: #{tpu_custom_call.1} parent=0 // loop_pre_header
    _
  $region3: #{tpu_custom_call.1} parent=0 // loop_header
    %s13 = sphi 0, %s17
    %p14 = scmp.ge.s32.totalorder %s13, 4
    %s20 = sphi 0, %s39
    %s21 = sphi 0, %s35
    %s22 = sphi 0, %s31
    %s23 = sphi 0, %s20
    %s24 = sphi 0, %s21
    %s25 = sphi 0, %s22
    %s26 = sphi 0, %s23
    %s27 = sphi 0, %s24
    %s28 = sphi 0, %s25
    %s46 = sphi 0, %s48
    %s49 = sphi 0, %s46
    %s50 = sphi 0, %s49
    %s66 = sphi 0, %s50
    %s70 = sphi 0, %s70
    %s72 = sphi 0, %s70
    %s73 = sphi 0, %s72
    %s87 = sphi 0, %s73
    %s91 = sphi 0, %s91
    %s93 = sphi 0, %s91
    %s94 = sphi 0, %s93
    %s108 = sphi 0, %s94
    %s112 = sphi 0, %s112
    %s114 = sphi 0, %s112
    %s115 = sphi 0, %s114
    %s129 = sphi 0, %s115
    %s133 = sphi 0, %s133
    %s135 = sphi 0, %s133
    %s136 = sphi 0, %s135
    %s150 = sphi 0, %s136
    %s154 = sphi 0, %s154
    %s156 = sphi 0, %s154
    %s157 = sphi 0, %s156
    %s171 = sphi 0, %s157
    %s175 = sphi 0, %s175
    %s177 = sphi 0, %s175
    %s178 = sphi 0, %s177
    %s192 = sphi 0, %s178
    %s200 = sphi 0, %s202
    %s203 = sphi 0, %s200
    %s204 = sphi 0, %s203
    %s220 = sphi 0, %s204
  $region4: #{tpu_custom_call.1} parent=0 // loop_header_branch
    %16 = sbr.rel (%p14) target = $region8
  $region5: #{tpu_custom_call.1} parent=0 // loop_body
    %s18 = ssub.s32 %s13, 1
    %s19 = ssub.s32 %s13, 2
    %s29 = sadd.s32 1, %s22
    %p30 = scmp.ge.s32.totalorder %s29, 1
    %s31 = scalar_select %p30, 0, %s29
    %s32 = sadd.s32 1, %s21
    %s33 = scalar_select %p30, %s32, %s21
    %p34 = scmp.ge.s32.totalorder %s33, 1
    %s35 = scalar_select %p34, 0, %s33
    %s36 = sadd.s32 1, %s20
    %s37 = scalar_select %p34, %s36, %s20
    %p38 = scmp.ge.s32.totalorder %s37, 2
    %s39 = scalar_select %p38, 0, %s37
    %s40 = sadd.s32 %s21, %s22
    %s41 = sadd.s32 %s35, %s31
    %s42 = ssub.s32 %s20, %s39
    %s43 = ssub.s32 %s40, %s41
    %s44 = sor.u32 %s42, %s43
    %p45 = scmp.eq.s32.totalorder %s44, 0
    %s47 = sadd.s32 %s46, 1
    %s48 = scalar_select %p45, %s46, %s47
    %p51 = pneg %p45
    %p52 = scmp.eq.s32.totalorder %s13, 1
    %p53 = por %p51, %p52
    %p54 = scmp.ne.s32.totalorder %s46, %s49
    %p55 = scmp.eq.s32.totalorder %s13, 0
    %p56 = por %p54, %p55
    %p57 = scmp.ne.s32.totalorder %s46, %s49
    %p58 = scmp.eq.s32.totalorder %s18, 1
    %p59 = por %p57, %p58
    %p60 = scmp.ne.s32.totalorder %s49, %s50
    %p61 = scmp.eq.s32.totalorder %s18, 0
    %p62 = por %p60, %p61
    %p63 = scmp.ne.s32.totalorder %s49, %s50
    %p64 = scmp.eq.s32.totalorder %s19, 1
    %p65 = por %p63, %p64
    %p67 = scmp.ne.s32.totalorder %s50, %s66
    %p68 = scmp.eq.s32.totalorder %s19, 0
    %p69 = por %p67, %p68
    %s71 = sadd.s32 %s70, 1
    %p74 = scmp.eq.s32.totalorder %s13, 1
    %p75 = scmp.ne.s32.totalorder %s70, %s72
    %p76 = scmp.eq.s32.totalorder %s13, 0
    %p77 = por %p75, %p76
    %p78 = scmp.ne.s32.totalorder %s70, %s72
    %p79 = scmp.eq.s32.totalorder %s18, 1
    %p80 = por %p78, %p79
    %p81 = scmp.ne.s32.totalorder %s72, %s73
    %p82 = scmp.eq.s32.totalorder %s18, 0
    %p83 = por %p81, %p82
    %p84 = scmp.ne.s32.totalorder %s72, %s73
    %p85 = scmp.eq.s32.totalorder %s19, 1
    %p86 = por %p84, %p85
    %p88 = scmp.ne.s32.totalorder %s73, %s87
    %p89 = scmp.eq.s32.totalorder %s19, 0
    %p90 = por %p88, %p89
    %s92 = sadd.s32 %s91, 1
    %p95 = scmp.eq.s32.totalorder %s13, 1
    %p96 = scmp.ne.s32.totalorder %s91, %s93
    %p97 = scmp.eq.s32.totalorder %s13, 0
    %p98 = por %p96, %p97
    %p99 = scmp.ne.s32.totalorder %s91, %s93
    %p100 = scmp.eq.s32.totalorder %s18, 1
    %p101 = por %p99, %p100
    %p102 = scmp.ne.s32.totalorder %s93, %s94
    %p103 = scmp.eq.s32.totalorder %s18, 0
    %p104 = por %p102, %p103
    %p105 = scmp.ne.s32.totalorder %s93, %s94
    %p106 = scmp.eq.s32.totalorder %s19, 1
    %p107 = por %p105, %p106
    %p109 = scmp.ne.s32.totalorder %s94, %s108
    %p110 = scmp.eq.s32.totalorder %s19, 0
    %p111 = por %p109, %p110
    %s113 = sadd.s32 %s112, 1
    %p116 = scmp.eq.s32.totalorder %s13, 1
    %p117 = scmp.ne.s32.totalorder %s112, %s114
    %p118 = scmp.eq.s32.totalorder %s13, 0
    %p119 = por %p117, %p118
    %p120 = scmp.ne.s32.totalorder %s112, %s114
    %p121 = scmp.eq.s32.totalorder %s18, 1
    %p122 = por %p120, %p121
    %p123 = scmp.ne.s32.totalorder %s114, %s115
    %p124 = scmp.eq.s32.totalorder %s18, 0
    %p125 = por %p123, %p124
    %p126 = scmp.ne.s32.totalorder %s114, %s115
    %p127 = scmp.eq.s32.totalorder %s19, 1
    %p128 = por %p126, %p127
    %p130 = scmp.ne.s32.totalorder %s115, %s129
    %p131 = scmp.eq.s32.totalorder %s19, 0
    %p132 = por %p130, %p131
    %s134 = sadd.s32 %s133, 1
    %p137 = scmp.eq.s32.totalorder %s13, 1
    %p138 = scmp.ne.s32.totalorder %s133, %s135
    %p139 = scmp.eq.s32.totalorder %s13, 0
    %p140 = por %p138, %p139
    %p141 = scmp.ne.s32.totalorder %s133, %s135
    %p142 = scmp.eq.s32.totalorder %s18, 1
    %p143 = por %p141, %p142
    %p144 = scmp.ne.s32.totalorder %s135, %s136
    %p145 = scmp.eq.s32.totalorder %s18, 0
    %p146 = por %p144, %p145
    %p147 = scmp.ne.s32.totalorder %s135, %s136
    %p148 = scmp.eq.s32.totalorder %s19, 1
    %p149 = por %p147, %p148
    %p151 = scmp.ne.s32.totalorder %s136, %s150
    %p152 = scmp.eq.s32.totalorder %s19, 0
    %p153 = por %p151, %p152
    %s155 = sadd.s32 %s154, 1
    %p158 = scmp.eq.s32.totalorder %s13, 1
    %p159 = scmp.ne.s32.totalorder %s154, %s156
    %p160 = scmp.eq.s32.totalorder %s13, 0
    %p161 = por %p159, %p160
    %p162 = scmp.ne.s32.totalorder %s154, %s156
    %p163 = scmp.eq.s32.totalorder %s18, 1
    %p164 = por %p162, %p163
    %p165 = scmp.ne.s32.totalorder %s156, %s157
    %p166 = scmp.eq.s32.totalorder %s18, 0
    %p167 = por %p165, %p166
    %p168 = scmp.ne.s32.totalorder %s156, %s157
    %p169 = scmp.eq.s32.totalorder %s19, 1
    %p170 = por %p168, %p169
    %p172 = scmp.ne.s32.totalorder %s157, %s171
    %p173 = scmp.eq.s32.totalorder %s19, 0
    %p174 = por %p172, %p173
    %s176 = sadd.s32 %s175, 1
    %p179 = scmp.eq.s32.totalorder %s13, 1
    %p180 = scmp.ne.s32.totalorder %s175, %s177
    %p181 = scmp.eq.s32.totalorder %s13, 0
    %p182 = por %p180, %p181
    %p183 = scmp.ne.s32.totalorder %s175, %s177
    %p184 = scmp.eq.s32.totalorder %s18, 1
    %p185 = por %p183, %p184
    %p186 = scmp.ne.s32.totalorder %s177, %s178
    %p187 = scmp.eq.s32.totalorder %s18, 0
    %p188 = por %p186, %p187
    %p189 = scmp.ne.s32.totalorder %s177, %s178
    %p190 = scmp.eq.s32.totalorder %s19, 1
    %p191 = por %p189, %p190
    %p193 = scmp.ne.s32.totalorder %s178, %s192
    %p194 = scmp.eq.s32.totalorder %s19, 0
    %p195 = por %p193, %p194
    %s196 = ssub.s32 %s20, %s39
    %s197 = ssub.s32 %s21, %s35
    %s198 = sor.u32 %s196, %s197
    %p199 = scmp.eq.s32.totalorder %s198, 0
    %s201 = sadd.s32 %s200, 1
    %s202 = scalar_select %p199, %s200, %s201
    %p205 = pneg %p199
    %p206 = scmp.eq.s32.totalorder %s13, 1
    %p207 = por %p205, %p206
    %p208 = scmp.ne.s32.totalorder %s200, %s203
    %p209 = scmp.eq.s32.totalorder %s13, 0
    %p210 = por %p208, %p209
    %p211 = scmp.ne.s32.totalorder %s200, %s203
    %p212 = scmp.eq.s32.totalorder %s18, 1
    %p213 = por %p211, %p212
    %p214 = scmp.ne.s32.totalorder %s203, %s204
    %p215 = scmp.eq.s32.totalorder %s18, 0
    %p216 = por %p214, %p215
    %p217 = scmp.ne.s32.totalorder %s203, %s204
    %p218 = scmp.eq.s32.totalorder %s19, 1
    %p219 = por %p217, %p218
    %p221 = scmp.ne.s32.totalorder %s204, %s220
    %p222 = scmp.eq.s32.totalorder %s19, 0
    %p223 = por %p221, %p222
    %p224 = scmp.le.s32.totalorder 1, %s13
    %p225 = scmp.lt.s32.totalorder %s13, 3
    %p226 = pnand %p224, %p225
    %p227 = pneg %p226
    // Predicated region
    $region9: #{tpu_custom_call.1} parent=5 // pred_check
      _
    $region10: #{tpu_custom_call.1} parent=5 // pred_check_branch
      %229 = sbr.rel (%p226) target = $region12
    $region11: #{tpu_custom_call.1} parent=5 // pred_region
      %s230 = ssub.s32 %s13, 1
      // Predicated region
      $region13: #{tpu_custom_call.1} parent=11 // pred_check
        %p231 = pneg %p83
      $region14: #{tpu_custom_call.1} parent=11 // pred_check_branch
        %233 = sbr.rel (%p231) target = $region16
      $region15: #{tpu_custom_call.1} parent=11 // pred_region
        _
      $region16: #{tpu_custom_call.1} parent=11 // pred_fallthru
        _
      // Predicated region
      $region17: #{tpu_custom_call.1} parent=11 // pred_check
        %p234 = pneg %p104
      $region18: #{tpu_custom_call.1} parent=11 // pred_check_branch
        %236 = sbr.rel (%p234) target = $region20
      $region19: #{tpu_custom_call.1} parent=11 // pred_region
        _
      $region20: #{tpu_custom_call.1} parent=11 // pred_fallthru
        _
      // Predicated region
      $region21: #{tpu_custom_call.1} parent=11 // pred_check
        %p237 = pneg %p125
      $region22: #{tpu_custom_call.1} parent=11 // pred_check_branch
        %239 = sbr.rel (%p237) target = $region24
      $region23: #{tpu_custom_call.1} parent=11 // pred_region
        _
      $region24: #{tpu_custom_call.1} parent=11 // pred_fallthru
        _
      // Predicated region
      $region25: #{tpu_custom_call.1} parent=11 // pred_check
        %p240 = pneg %p146
      $region26: #{tpu_custom_call.1} parent=11 // pred_check_branch
        %242 = sbr.rel (%p240) target = $region28
      $region27: #{tpu_custom_call.1} parent=11 // pred_region
        _
      $region28: #{tpu_custom_call.1} parent=11 // pred_fallthru
        _
      // Predicated region
      $region29: #{tpu_custom_call.1} parent=11 // pred_check
        %p243 = pneg %p167
      $region30: #{tpu_custom_call.1} parent=11 // pred_check_branch
        %245 = sbr.rel (%p243) target = $region32
      $region31: #{tpu_custom_call.1} parent=11 // pred_region
        _
      $region32: #{tpu_custom_call.1} parent=11 // pred_fallthru
        _
      // Predicated region
      $region33: #{tpu_custom_call.1} parent=11 // pred_check
        %p246 = pneg %p188
      $region34: #{tpu_custom_call.1} parent=11 // pred_check_branch
        %248 = sbr.rel (%p246) target = $region36
      $region35: #{tpu_custom_call.1} parent=11 // pred_region
        _
      $region36: #{tpu_custom_call.1} parent=11 // pred_fallthru
        _
    $region12: #{tpu_custom_call.1} parent=5 // pred_fallthru
      _
    %p249 = scmp.lt.s32.totalorder %s13, 2
    // Predicated region
    $region37: #{tpu_custom_call.1} parent=5 // pred_check
      %p250 = pneg %p249
    $region38: #{tpu_custom_call.1} parent=5 // pred_check_branch
      %252 = sbr.rel (%p250) target = $region40
    $region39: #{tpu_custom_call.1} parent=5 // pred_region
      // Predicated region
      $region41: #{tpu_custom_call.1} parent=39 // pred_check
        %p253 = pneg %p56
      $region42: #{tpu_custom_call.1} parent=39 // pred_check_branch
        %255 = sbr.rel (%p253) target = $region44
      $region43: #{tpu_custom_call.1} parent=39 // pred_region
        %s256 = sadd.s32 %s21, %s22
        %p257 = scmp.lt.s32.totalorder %s20, 1
        %s258 = scalar_select %p257, %s20, 1
        %p259 = scmp.lt.s32.totalorder %s256, 0
        %s260 = scalar_select %p259, %s256, 0
        %s261 = sadd.s32 %s260, %s258
        %s262 = smul.addr %s261, 4
        %s263 = scalar_lea.vmem %s0, %s262
        %s264 = sadd.s32 %s21, %s22
      $region44: #{tpu_custom_call.1} parent=39 // pred_fallthru
        _
    $region40: #{tpu_custom_call.1} parent=5 // pred_fallthru
      _
    %p265 = scmp.le.s32.totalorder 1, %s13
    %p266 = scmp.lt.s32.totalorder %s13, 3
    %p267 = pnand %p265, %p266
    %p268 = pneg %p267
    // Predicated region
    $region45: #{tpu_custom_call.1} parent=5 // pred_check
      _
    $region46: #{tpu_custom_call.1} parent=5 // pred_check_branch
      %270 = sbr.rel (%p267) target = $region48
    $region47: #{tpu_custom_call.1} parent=5 // pred_region
      %s271 = ssub.s32 %s13, 1
      %s272 = sadd.s32 %s24, %s25
      %p273 = scmp.lt.s32.totalorder %s23, 1
      %s274 = scalar_select %p273, %s23, 1
      %p275 = scmp.lt.s32.totalorder %s272, 0
      %s276 = scalar_select %p275, %s272, 0
      %s277 = sadd.s32 %s276, %s274
      %s278 = smul.addr %s277, 4
      %s279 = scalar_lea.vmem %s0, %s278
      %p280 = pneg %p62
      %p281 = pneg %p59
      %p282 = pneg %p83
      %p283 = pneg %p80
      %p284 = pneg %p104
      %p285 = pneg %p101
      %p286 = pneg %p125
      %p287 = pneg %p122
      %p288 = pneg %p146
      %p289 = pneg %p143
      %p290 = pneg %p167
      %p291 = pneg %p164
      %p292 = pneg %p188
      %p293 = pneg %p185
      %p294 = pneg %p216
      %p295 = pneg %p213
      %p296 = scmp.lt.s32.totalorder %s23, 1
      %s297 = scalar_select %p296, %s23, 1
      %p298 = scmp.lt.s32.totalorder %s24, 0
      %s299 = scalar_select %p298, %s24, 0
      %s300 = smul.addr %s299, 128
      %s301 = smul.addr %s297, 128
      %s302 = sadd.s32 %s300, %s301
      %s303 = smul.addr %s302, 8
      %s304 = scalar_lea.vmem %s7, %s303
      %s305 = sadd.s32 %s24, %s25
      %p306 = scmp.lt.s32.totalorder %s23, 1
      %s307 = scalar_select %p306, %s23, 1
      %p308 = scmp.lt.s32.totalorder %s305, 0
      %s309 = scalar_select %p308, %s305, 0
      %s310 = sadd.s32 %s309, %s307
      %s311 = smul.addr %s310, 4
      %s312 = scalar_lea.vmem %s0, %s311
      %s313 = sadd.s32 %s24, %s25
      %p314 = scmp.lt.s32.totalorder %s23, 1
      %s315 = scalar_select %p314, %s23, 1
      %p316 = scmp.lt.s32.totalorder %s24, 0
      %s317 = scalar_select %p316, %s24, 0
      %s318 = smul.addr %s317, 128
      %s319 = smul.addr %s315, 128
      %s320 = sadd.s32 %s318, %s319
      %s321 = smul.addr %s320, 8
      %s322 = scalar_lea.vmem %s7, %s321
      %p324 = scmp.eq.s32.totalorder %s25, 0
      // Predicated region
      $region49: #{tpu_custom_call.1} parent=47 // pred_check
        %p325 = pneg %p324
      $region50: #{tpu_custom_call.1} parent=47 // pred_check_branch
        %327 = sbr.rel (%p325) target = $region52
      $region51: #{tpu_custom_call.1} parent=47 // pred_region
        %vm328 = vcmask 130048
        %329 = vst.msk [vmem:[#allocation2] sm:$0xff] %vm328, -inf
        %330 = vst.msk [vmem:[#allocation2 + $0x8] sm:$0xff] %vm328, -inf
        %331 = vst.msk [vmem:[#allocation2 + $0x10] sm:$0xff] %vm328, -inf
        %332 = vst.msk [vmem:[#allocation2 + $0x18] sm:$0xff] %vm328, -inf
        %333 = vst.msk [vmem:[#allocation2 + $0x20] sm:$0xff] %vm328, -inf
        %334 = vst.msk [vmem:[#allocation2 + $0x28] sm:$0xff] %vm328, -inf
        %335 = vst.msk [vmem:[#allocation2 + $0x30] sm:$0xff] %vm328, -inf
        %336 = vst.msk [vmem:[#allocation2 + $0x38] sm:$0xff] %vm328, -inf
        %337 = vst.msk [vmem:[#allocation2 + $0x40] sm:$0xff] %vm328, -inf
        %338 = vst.msk [vmem:[#allocation2 + $0x48] sm:$0xff] %vm328, -inf
        %339 = vst.msk [vmem:[#allocation2 + $0x50] sm:$0xff] %vm328, -inf
        %340 = vst.msk [vmem:[#allocation2 + $0x58] sm:$0xff] %vm328, -inf
        %341 = vst.msk [vmem:[#allocation2 + $0x60] sm:$0xff] %vm328, -inf
        %342 = vst.msk [vmem:[#allocation2 + $0x68] sm:$0xff] %vm328, -inf
        %343 = vst.msk [vmem:[#allocation2 + $0x70] sm:$0xff] %vm328, -inf
        %344 = vst.msk [vmem:[#allocation2 + $0x78] sm:$0xff] %vm328, -inf
        %345 = vst.msk [vmem:[#allocation2 + $0x80] sm:$0xff] %vm328, -inf
        %346 = vst.msk [vmem:[#allocation2 + $0x88] sm:$0xff] %vm328, -inf
        %347 = vst.msk [vmem:[#allocation2 + $0x90] sm:$0xff] %vm328, -inf
        %348 = vst.msk [vmem:[#allocation2 + $0x98] sm:$0xff] %vm328, -inf
        %349 = vst.msk [vmem:[#allocation2 + $0xa0] sm:$0xff] %vm328, -inf
        %350 = vst.msk [vmem:[#allocation2 + $0xa8] sm:$0xff] %vm328, -inf
        %351 = vst.msk [vmem:[#allocation2 + $0xb0] sm:$0xff] %vm328, -inf
        %352 = vst.msk [vmem:[#allocation2 + $0xb8] sm:$0xff] %vm328, -inf
        %353 = vst.msk [vmem:[#allocation2 + $0xc0] sm:$0xff] %vm328, -inf
        %354 = vst.msk [vmem:[#allocation2 + $0xc8] sm:$0xff] %vm328, -inf
        %355 = vst.msk [vmem:[#allocation2 + $0xd0] sm:$0xff] %vm328, -inf
        %356 = vst.msk [vmem:[#allocation2 + $0xd8] sm:$0xff] %vm328, -inf
        %357 = vst.msk [vmem:[#allocation2 + $0xe0] sm:$0xff] %vm328, -inf
        %358 = vst.msk [vmem:[#allocation2 + $0xe8] sm:$0xff] %vm328, -inf
        %359 = vst.msk [vmem:[#allocation2 + $0xf0] sm:$0xff] %vm328, -inf
        %360 = vst.msk [vmem:[#allocation2 + $0xf8] sm:$0xff] %vm328, -inf
        %361 = vst.msk [vmem:[#allocation2 + $0x100] sm:$0xff] %vm328, -inf
        %362 = vst.msk [vmem:[#allocation2 + $0x108] sm:$0xff] %vm328, -inf
        %363 = vst.msk [vmem:[#allocation2 + $0x110] sm:$0xff] %vm328, -inf
        %364 = vst.msk [vmem:[#allocation2 + $0x118] sm:$0xff] %vm328, -inf
        %365 = vst.msk [vmem:[#allocation2 + $0x120] sm:$0xff] %vm328, -inf
        %366 = vst.msk [vmem:[#allocation2 + $0x128] sm:$0xff] %vm328, -inf
        %367 = vst.msk [vmem:[#allocation2 + $0x130] sm:$0xff] %vm328, -inf
        %368 = vst.msk [vmem:[#allocation2 + $0x138] sm:$0xff] %vm328, -inf
        %369 = vst.msk [vmem:[#allocation2 + $0x140] sm:$0xff] %vm328, -inf
        %370 = vst.msk [vmem:[#allocation2 + $0x148] sm:$0xff] %vm328, -inf
        %371 = vst.msk [vmem:[#allocation2 + $0x150] sm:$0xff] %vm328, -inf
        %372 = vst.msk [vmem:[#allocation2 + $0x158] sm:$0xff] %vm328, -inf
        %373 = vst.msk [vmem:[#allocation2 + $0x160] sm:$0xff] %vm328, -inf
        %374 = vst.msk [vmem:[#allocation2 + $0x168] sm:$0xff] %vm328, -inf
        %375 = vst.msk [vmem:[#allocation2 + $0x170] sm:$0xff] %vm328, -inf
        %376 = vst.msk [vmem:[#allocation2 + $0x178] sm:$0xff] %vm328, -inf
        %377 = vst.msk [vmem:[#allocation2 + $0x180] sm:$0xff] %vm328, -inf
        %378 = vst.msk [vmem:[#allocation2 + $0x188] sm:$0xff] %vm328, -inf
        %379 = vst.msk [vmem:[#allocation2 + $0x190] sm:$0xff] %vm328, -inf
        %380 = vst.msk [vmem:[#allocation2 + $0x198] sm:$0xff] %vm328, -inf
        %381 = vst.msk [vmem:[#allocation2 + $0x1a0] sm:$0xff] %vm328, -inf
        %382 = vst.msk [vmem:[#allocation2 + $0x1a8] sm:$0xff] %vm328, -inf
        %383 = vst.msk [vmem:[#allocation2 + $0x1b0] sm:$0xff] %vm328, -inf
        %384 = vst.msk [vmem:[#allocation2 + $0x1b8] sm:$0xff] %vm328, -inf
        %385 = vst.msk [vmem:[#allocation2 + $0x1c0] sm:$0xff] %vm328, -inf
        %386 = vst.msk [vmem:[#allocation2 + $0x1c8] sm:$0xff] %vm328, -inf
        %387 = vst.msk [vmem:[#allocation2 + $0x1d0] sm:$0xff] %vm328, -inf
        %388 = vst.msk [vmem:[#allocation2 + $0x1d8] sm:$0xff] %vm328, -inf
        %389 = vst.msk [vmem:[#allocation2 + $0x1e0] sm:$0xff] %vm328, -inf
        %390 = vst.msk [vmem:[#allocation2 + $0x1e8] sm:$0xff] %vm328, -inf
        %391 = vst.msk [vmem:[#allocation2 + $0x1f0] sm:$0xff] %vm328, -inf
        %392 = vst.msk [vmem:[#allocation2 + $0x1f8] sm:$0xff] %vm328, -inf
        %393 = vst.msk [vmem:[#allocation2 + $0x200] sm:$0xff] %vm328, -inf
        %394 = vst.msk [vmem:[#allocation2 + $0x208] sm:$0xff] %vm328, -inf
        %395 = vst.msk [vmem:[#allocation2 + $0x210] sm:$0xff] %vm328, -inf
        %396 = vst.msk [vmem:[#allocation2 + $0x218] sm:$0xff] %vm328, -inf
        %397 = vst.msk [vmem:[#allocation2 + $0x220] sm:$0xff] %vm328, -inf
        %398 = vst.msk [vmem:[#allocation2 + $0x228] sm:$0xff] %vm328, -inf
        %399 = vst.msk [vmem:[#allocation2 + $0x230] sm:$0xff] %vm328, -inf
        %400 = vst.msk [vmem:[#allocation2 + $0x238] sm:$0xff] %vm328, -inf
        %401 = vst.msk [vmem:[#allocation2 + $0x240] sm:$0xff] %vm328, -inf
        %402 = vst.msk [vmem:[#allocation2 + $0x248] sm:$0xff] %vm328, -inf
        %403 = vst.msk [vmem:[#allocation2 + $0x250] sm:$0xff] %vm328, -inf
        %404 = vst.msk [vmem:[#allocation2 + $0x258] sm:$0xff] %vm328, -inf
        %405 = vst.msk [vmem:[#allocation2 + $0x260] sm:$0xff] %vm328, -inf
        %406 = vst.msk [vmem:[#allocation2 + $0x268] sm:$0xff] %vm328, -inf
        %407 = vst.msk [vmem:[#allocation2 + $0x270] sm:$0xff] %vm328, -inf
        %408 = vst.msk [vmem:[#allocation2 + $0x278] sm:$0xff] %vm328, -inf
        %409 = vst.msk [vmem:[#allocation2 + $0x280] sm:$0xff] %vm328, -inf
        %410 = vst.msk [vmem:[#allocation2 + $0x288] sm:$0xff] %vm328, -inf
        %411 = vst.msk [vmem:[#allocation2 + $0x290] sm:$0xff] %vm328, -inf
        %412 = vst.msk [vmem:[#allocation2 + $0x298] sm:$0xff] %vm328, -inf
        %413 = vst.msk [vmem:[#allocation2 + $0x2a0] sm:$0xff] %vm328, -inf
        %414 = vst.msk [vmem:[#allocation2 + $0x2a8] sm:$0xff] %vm328, -inf
        %415 = vst.msk [vmem:[#allocation2 + $0x2b0] sm:$0xff] %vm328, -inf
        %416 = vst.msk [vmem:[#allocation2 + $0x2b8] sm:$0xff] %vm328, -inf
        %417 = vst.msk [vmem:[#allocation2 + $0x2c0] sm:$0xff] %vm328, -inf
        %418 = vst.msk [vmem:[#allocation2 + $0x2c8] sm:$0xff] %vm328, -inf
        %419 = vst.msk [vmem:[#allocation2 + $0x2d0] sm:$0xff] %vm328, -inf
        %420 = vst.msk [vmem:[#allocation2 + $0x2d8] sm:$0xff] %vm328, -inf
        %421 = vst.msk [vmem:[#allocation2 + $0x2e0] sm:$0xff] %vm328, -inf
        %422 = vst.msk [vmem:[#allocation2 + $0x2e8] sm:$0xff] %vm328, -inf
        %423 = vst.msk [vmem:[#allocation2 + $0x2f0] sm:$0xff] %vm328, -inf
        %424 = vst.msk [vmem:[#allocation2 + $0x2f8] sm:$0xff] %vm328, -inf
        %425 = vst.msk [vmem:[#allocation2 + $0x300] sm:$0xff] %vm328, -inf
        %426 = vst.msk [vmem:[#allocation2 + $0x308] sm:$0xff] %vm328, -inf
        %427 = vst.msk [vmem:[#allocation2 + $0x310] sm:$0xff] %vm328, -inf
        %428 = vst.msk [vmem:[#allocation2 + $0x318] sm:$0xff] %vm328, -inf
        %429 = vst.msk [vmem:[#allocation2 + $0x320] sm:$0xff] %vm328, -inf
        %430 = vst.msk [vmem:[#allocation2 + $0x328] sm:$0xff] %vm328, -inf
        %431 = vst.msk [vmem:[#allocation2 + $0x330] sm:$0xff] %vm328, -inf
        %432 = vst.msk [vmem:[#allocation2 + $0x338] sm:$0xff] %vm328, -inf
        %433 = vst.msk [vmem:[#allocation2 + $0x340] sm:$0xff] %vm328, -inf
        %434 = vst.msk [vmem:[#allocation2 + $0x348] sm:$0xff] %vm328, -inf
        %435 = vst.msk [vmem:[#allocation2 + $0x350] sm:$0xff] %vm328, -inf
        %436 = vst.msk [vmem:[#allocation2 + $0x358] sm:$0xff] %vm328, -inf
        %437 = vst.msk [vmem:[#allocation2 + $0x360] sm:$0xff] %vm328, -inf
        %438 = vst.msk [vmem:[#allocation2 + $0x368] sm:$0xff] %vm328, -inf
        %439 = vst.msk [vmem:[#allocation2 + $0x370] sm:$0xff] %vm328, -inf
        %440 = vst.msk [vmem:[#allocation2 + $0x378] sm:$0xff] %vm328, -inf
        %441 = vst.msk [vmem:[#allocation2 + $0x380] sm:$0xff] %vm328, -inf
        %442 = vst.msk [vmem:[#allocation2 + $0x388] sm:$0xff] %vm328, -inf
        %443 = vst.msk [vmem:[#allocation2 + $0x390] sm:$0xff] %vm328, -inf
        %444 = vst.msk [vmem:[#allocation2 + $0x398] sm:$0xff] %vm328, -inf
        %445 = vst.msk [vmem:[#allocation2 + $0x3a0] sm:$0xff] %vm328, -inf
        %446 = vst.msk [vmem:[#allocation2 + $0x3a8] sm:$0xff] %vm328, -inf
        %447 = vst.msk [vmem:[#allocation2 + $0x3b0] sm:$0xff] %vm328, -inf
        %448 = vst.msk [vmem:[#allocation2 + $0x3b8] sm:$0xff] %vm328, -inf
        %449 = vst.msk [vmem:[#allocation2 + $0x3c0] sm:$0xff] %vm328, -inf
        %450 = vst.msk [vmem:[#allocation2 + $0x3c8] sm:$0xff] %vm328, -inf
        %451 = vst.msk [vmem:[#allocation2 + $0x3d0] sm:$0xff] %vm328, -inf
        %452 = vst.msk [vmem:[#allocation2 + $0x3d8] sm:$0xff] %vm328, -inf
        %453 = vst.msk [vmem:[#allocation2 + $0x3e0] sm:$0xff] %vm328, -inf
        %454 = vst.msk [vmem:[#allocation2 + $0x3e8] sm:$0xff] %vm328, -inf
        %455 = vst.msk [vmem:[#allocation2 + $0x3f0] sm:$0xff] %vm328, -inf
        %456 = vst.msk [vmem:[#allocation2 + $0x3f8] sm:$0xff] %vm328, -inf
      $region52: #{tpu_custom_call.1} parent=47 // pred_fallthru
        _
      %v457 = vld [vmem:[%s312] sm:$0x7]
      %v458 = vld [vmem:[%s1] sm:$0xff]
      %v459 = vld [vmem:[%s1 + $0x8] sm:$0xff]
      %v460 = vld [vmem:[%s1 + $0x10] sm:$0xff]
      %v461 = vld [vmem:[%s1 + $0x18] sm:$0xff]
      %v462 = vld [vmem:[%s1 + $0x20] sm:$0xff]
      %v463 = vld [vmem:[%s1 + $0x28] sm:$0xff]
      %v464 = vld [vmem:[%s1 + $0x30] sm:$0xff]
      %v465 = vld [vmem:[%s1 + $0x38] sm:$0xff]
      %467 = vset.pattern.permute.xlu0 0
      %468 = vperm.xlu0 %467, %v458
      %v469 = vpop.permute.xlu0 %468
      %472 = vset.pattern.permute.xlu0 0
      %473 = vperm.xlu0 %472, %v459
      %v474 = vpop.permute.xlu0 %473
      %477 = vset.pattern.permute.xlu0 0
      %478 = vperm.xlu0 %477, %v460
      %v479 = vpop.permute.xlu0 %478
      %482 = vset.pattern.permute.xlu0 0
      %483 = vperm.xlu0 %482, %v461
      %v484 = vpop.permute.xlu0 %483
      %487 = vset.pattern.permute.xlu0 0
      %488 = vperm.xlu0 %487, %v462
      %v489 = vpop.permute.xlu0 %488
      %492 = vset.pattern.permute.xlu0 0
      %493 = vperm.xlu0 %492, %v463
      %v494 = vpop.permute.xlu0 %493
      %497 = vset.pattern.permute.xlu0 0
      %498 = vperm.xlu0 %497, %v464
      %v499 = vpop.permute.xlu0 %498
      %502 = vset.pattern.permute.xlu0 0
      %503 = vperm.xlu0 %502, %v465
      %v504 = vpop.permute.xlu0 %503
      %v506 = vlaneseq
      %v507 = vshrl.u32 %v506, 7
      %v508 = vsub.s32 0, %v507
      %v509 = vrot.slane %v457, %v508
      %v510 = vmul.f32 %v469, %v509
      %v511 = vmul.f32 %v474, %v509
      %v512 = vmul.f32 %v479, %v509
      %v513 = vmul.f32 %v484, %v509
      %v514 = vmul.f32 %v489, %v509
      %v515 = vmul.f32 %v494, %v509
      %v516 = vmul.f32 %v499, %v509
      %v517 = vmul.f32 %v504, %v509
      %518 = vset.pattern.permute.xlu0 1
      %519 = vperm.xlu0 %518, %v458
      %v520 = vpop.permute.xlu0 %519
      %522 = vset.pattern.permute.xlu0 1
      %523 = vperm.xlu0 %522, %v459
      %v524 = vpop.permute.xlu0 %523
      %526 = vset.pattern.permute.xlu0 1
      %527 = vperm.xlu0 %526, %v460
      %v528 = vpop.permute.xlu0 %527
      %530 = vset.pattern.permute.xlu0 1
      %531 = vperm.xlu0 %530, %v461
      %v532 = vpop.permute.xlu0 %531
      %534 = vset.pattern.permute.xlu0 1
      %535 = vperm.xlu0 %534, %v462
      %v536 = vpop.permute.xlu0 %535
      %538 = vset.pattern.permute.xlu0 1
      %539 = vperm.xlu0 %538, %v463
      %v540 = vpop.permute.xlu0 %539
      %542 = vset.pattern.permute.xlu0 1
      %543 = vperm.xlu0 %542, %v464
      %v544 = vpop.permute.xlu0 %543
      %546 = vset.pattern.permute.xlu0 1
      %547 = vperm.xlu0 %546, %v465
      %v548 = vpop.permute.xlu0 %547
      %v550 = vlaneseq
      %v551 = vshrl.u32 %v550, 7
      %v552 = vsub.s32 1, %v551
      %v553 = vrot.slane %v457, %v552
      %v554 = vmul.f32 %v520, %v553
      %v555 = vmul.f32 %v524, %v553
      %v556 = vmul.f32 %v528, %v553
      %v557 = vmul.f32 %v532, %v553
      %v558 = vmul.f32 %v536, %v553
      %v559 = vmul.f32 %v540, %v553
      %v560 = vmul.f32 %v544, %v553
      %v561 = vmul.f32 %v548, %v553
      %v562 = vadd.f32 %v510, %v554
      %v563 = vadd.f32 %v511, %v555
      %v564 = vadd.f32 %v512, %v556
      %v565 = vadd.f32 %v513, %v557
      %v566 = vadd.f32 %v514, %v558
      %v567 = vadd.f32 %v515, %v559
      %v568 = vadd.f32 %v516, %v560
      %v569 = vadd.f32 %v517, %v561
      %570 = vset.pattern.permute.xlu0 2
      %571 = vperm.xlu0 %570, %v458
      %v572 = vpop.permute.xlu0 %571
      %574 = vset.pattern.permute.xlu0 2
      %575 = vperm.xlu0 %574, %v459
      %v576 = vpop.permute.xlu0 %575
      %578 = vset.pattern.permute.xlu0 2
      %579 = vperm.xlu0 %578, %v460
      %v580 = vpop.permute.xlu0 %579
      %582 = vset.pattern.permute.xlu0 2
      %583 = vperm.xlu0 %582, %v461
      %v584 = vpop.permute.xlu0 %583
      %586 = vset.pattern.permute.xlu0 2
      %587 = vperm.xlu0 %586, %v462
      %v588 = vpop.permute.xlu0 %587
      %590 = vset.pattern.permute.xlu0 2
      %591 = vperm.xlu0 %590, %v463
      %v592 = vpop.permute.xlu0 %591
      %594 = vset.pattern.permute.xlu0 2
      %595 = vperm.xlu0 %594, %v464
      %v596 = vpop.permute.xlu0 %595
      %598 = vset.pattern.permute.xlu0 2
      %599 = vperm.xlu0 %598, %v465
      %v600 = vpop.permute.xlu0 %599
      %v602 = vlaneseq
      %v603 = vshrl.u32 %v602, 7
      %v604 = vsub.s32 2, %v603
      %v605 = vrot.slane %v457, %v604
      %v606 = vmul.f32 %v572, %v605
      %v607 = vmul.f32 %v576, %v605
      %v608 = vmul.f32 %v580, %v605
      %v609 = vmul.f32 %v584, %v605
      %v610 = vmul.f32 %v588, %v605
      %v611 = vmul.f32 %v592, %v605
      %v612 = vmul.f32 %v596, %v605
      %v613 = vmul.f32 %v600, %v605
      %v614 = vadd.f32 %v562, %v606
      %v615 = vadd.f32 %v563, %v607
      %v616 = vadd.f32 %v564, %v608
      %v617 = vadd.f32 %v565, %v609
      %v618 = vadd.f32 %v566, %v610
      %v619 = vadd.f32 %v567, %v611
      %v620 = vadd.f32 %v568, %v612
      %v621 = vadd.f32 %v569, %v613
      %v622 = vld [vmem:[%s2] sm:$0xff]
      %v623 = vld [vmem:[%s2 + $0x8] sm:$0xff]
      %v624 = vld [vmem:[%s2 + $0x10] sm:$0xff]
      %v625 = vld [vmem:[%s2 + $0x18] sm:$0xff]
      %v626 = vld [vmem:[%s2 + $0x20] sm:$0xff]
      %v627 = vld [vmem:[%s2 + $0x28] sm:$0xff]
      %v628 = vld [vmem:[%s2 + $0x30] sm:$0xff]
      %v629 = vld [vmem:[%s2 + $0x38] sm:$0xff]
      %631 = vset.pattern.permute.xlu0 0
      %632 = vperm.xlu0 %631, %v622
      %v633 = vpop.permute.xlu0 %632
      %636 = vset.pattern.permute.xlu0 0
      %637 = vperm.xlu0 %636, %v623
      %v638 = vpop.permute.xlu0 %637
      %641 = vset.pattern.permute.xlu0 0
      %642 = vperm.xlu0 %641, %v624
      %v643 = vpop.permute.xlu0 %642
      %646 = vset.pattern.permute.xlu0 0
      %647 = vperm.xlu0 %646, %v625
      %v648 = vpop.permute.xlu0 %647
      %651 = vset.pattern.permute.xlu0 0
      %652 = vperm.xlu0 %651, %v626
      %v653 = vpop.permute.xlu0 %652
      %656 = vset.pattern.permute.xlu0 0
      %657 = vperm.xlu0 %656, %v627
      %v658 = vpop.permute.xlu0 %657
      %661 = vset.pattern.permute.xlu0 0
      %662 = vperm.xlu0 %661, %v628
      %v663 = vpop.permute.xlu0 %662
      %666 = vset.pattern.permute.xlu0 0
      %667 = vperm.xlu0 %666, %v629
      %v668 = vpop.permute.xlu0 %667
      %v670 = vadd.f32 %v614, %v633
      %v671 = vadd.f32 %v615, %v638
      %v672 = vadd.f32 %v616, %v643
      %v673 = vadd.f32 %v617, %v648
      %v674 = vadd.f32 %v618, %v653
      %v675 = vadd.f32 %v619, %v658
      %v676 = vadd.f32 %v620, %v663
      %v677 = vadd.f32 %v621, %v668
      %v678 = vmax.f32 %v670, 0.0
      %v679 = vmax.f32 %v671, 0.0
      %v680 = vmax.f32 %v672, 0.0
      %v681 = vmax.f32 %v673, 0.0
      %v682 = vmax.f32 %v674, 0.0
      %v683 = vmax.f32 %v675, 0.0
      %v684 = vmax.f32 %v676, 0.0
      %v685 = vmax.f32 %v677, 0.0
      %v686 = vld [vmem:[%s3] sm:$0xf]
      %v687 = vld [vmem:[%s3 + $0x4] sm:$0xf]
      %v688 = vld [vmem:[%s3 + $0x8] sm:$0xf]
      %v689 = vld [vmem:[%s3 + $0xc] sm:$0xf]
      %v690 = vld [vmem:[%s3 + $0x10] sm:$0xf]
      %v691 = vld [vmem:[%s3 + $0x14] sm:$0xf]
      %v692 = vld [vmem:[%s3 + $0x18] sm:$0xf]
      %v693 = vld [vmem:[%s3 + $0x1c] sm:$0xf]
      %v694 = vld [vmem:[%s3 + $0x20] sm:$0xf]
      %v695 = vld [vmem:[%s3 + $0x24] sm:$0xf]
      %v696 = vld [vmem:[%s3 + $0x28] sm:$0xf]
      %v697 = vld [vmem:[%s3 + $0x2c] sm:$0xf]
      %v698 = vld [vmem:[%s3 + $0x30] sm:$0xf]
      %v699 = vld [vmem:[%s3 + $0x34] sm:$0xf]
      %v700 = vld [vmem:[%s3 + $0x38] sm:$0xf]
      %v701 = vld [vmem:[%s3 + $0x3c] sm:$0xf]
      %v702 = vpack.c.bf16 %v679, %v678
      %v703 = vpack.c.bf16 %v681, %v680
      %v704 = vpack.c.bf16 %v683, %v682
      %v705 = vpack.c.bf16 %v685, %v684
      %v706 = vld [vmem:[%s4] sm:$0xff]
      %v707 = vld [vmem:[%s4 + $0x8] sm:$0xff]
      %v708 = vld [vmem:[%s4 + $0x10] sm:$0xff]
      %v709 = vld [vmem:[%s4 + $0x18] sm:$0xff]
      %v710 = vld [vmem:[%s4 + $0x20] sm:$0xff]
      %v711 = vld [vmem:[%s4 + $0x28] sm:$0xff]
      %v712 = vld [vmem:[%s4 + $0x30] sm:$0xff]
      %v713 = vld [vmem:[%s4 + $0x38] sm:$0xff]
      %v714 = vld [vmem:[%s4 + $0x40] sm:$0xff]
      %v715 = vld [vmem:[%s4 + $0x48] sm:$0xff]
      %v716 = vld [vmem:[%s4 + $0x50] sm:$0xff]
      %v717 = vld [vmem:[%s4 + $0x58] sm:$0xff]
      %v718 = vld [vmem:[%s4 + $0x60] sm:$0xff]
      %v719 = vld [vmem:[%s4 + $0x68] sm:$0xff]
      %v720 = vld [vmem:[%s4 + $0x70] sm:$0xff]
      %v721 = vld [vmem:[%s4 + $0x78] sm:$0xff]
      %723 = vset.pattern.permute.xlu0 0
      %724 = vperm.xlu0 %723, %v706
      %v725 = vpop.permute.xlu0 %724
      %728 = vset.pattern.permute.xlu0 0
      %729 = vperm.xlu0 %728, %v707
      %v730 = vpop.permute.xlu0 %729
      %733 = vset.pattern.permute.xlu0 0
      %734 = vperm.xlu0 %733, %v708
      %v735 = vpop.permute.xlu0 %734
      %738 = vset.pattern.permute.xlu0 0
      %739 = vperm.xlu0 %738, %v709
      %v740 = vpop.permute.xlu0 %739
      %743 = vset.pattern.permute.xlu0 0
      %744 = vperm.xlu0 %743, %v710
      %v745 = vpop.permute.xlu0 %744
      %748 = vset.pattern.permute.xlu0 0
      %749 = vperm.xlu0 %748, %v711
      %v750 = vpop.permute.xlu0 %749
      %753 = vset.pattern.permute.xlu0 0
      %754 = vperm.xlu0 %753, %v712
      %v755 = vpop.permute.xlu0 %754
      %758 = vset.pattern.permute.xlu0 0
      %759 = vperm.xlu0 %758, %v713
      %v760 = vpop.permute.xlu0 %759
      %763 = vset.pattern.permute.xlu0 0
      %764 = vperm.xlu0 %763, %v714
      %v765 = vpop.permute.xlu0 %764
      %768 = vset.pattern.permute.xlu0 0
      %769 = vperm.xlu0 %768, %v715
      %v770 = vpop.permute.xlu0 %769
      %773 = vset.pattern.permute.xlu0 0
      %774 = vperm.xlu0 %773, %v716
      %v775 = vpop.permute.xlu0 %774
      %778 = vset.pattern.permute.xlu0 0
      %779 = vperm.xlu0 %778, %v717
      %v780 = vpop.permute.xlu0 %779
      %783 = vset.pattern.permute.xlu0 0
      %784 = vperm.xlu0 %783, %v718
      %v785 = vpop.permute.xlu0 %784
      %788 = vset.pattern.permute.xlu0 0
      %789 = vperm.xlu0 %788, %v719
      %v790 = vpop.permute.xlu0 %789
      %793 = vset.pattern.permute.xlu0 0
      %794 = vperm.xlu0 %793, %v720
      %v795 = vpop.permute.xlu0 %794
      %798 = vset.pattern.permute.xlu0 0
      %799 = vperm.xlu0 %798, %v721
      %v800 = vpop.permute.xlu0 %799
      %v818 = vunpack.c.l.b16 %v686
      %v819 = vunpack.c.l.b16 %v687
      %v820 = vunpack.c.l.b16 %v688
      %v821 = vunpack.c.l.b16 %v689
      %v822 = vunpack.c.l.b16 %v690
      %v823 = vunpack.c.l.b16 %v691
      %v824 = vunpack.c.l.b16 %v692
      %v825 = vunpack.c.l.b16 %v693
      %v826 = vunpack.c.l.b16 %v694
      %v827 = vunpack.c.l.b16 %v695
      %v828 = vunpack.c.l.b16 %v696
      %v829 = vunpack.c.l.b16 %v697
      %v830 = vunpack.c.l.b16 %v698
      %v831 = vunpack.c.l.b16 %v699
      %v832 = vunpack.c.l.b16 %v700
      %v833 = vunpack.c.l.b16 %v701
      %v834 = vpack.c.b16 %v819, %v818
      %v835 = vpack.c.b16 %v821, %v820
      %v836 = vpack.c.b16 %v823, %v822
      %v837 = vpack.c.b16 %v825, %v824
      %v838 = vpack.c.b16 %v827, %v826
      %v839 = vpack.c.b16 %v829, %v828
      %v840 = vpack.c.b16 %v831, %v830
      %v841 = vpack.c.b16 %v833, %v832
      %vm842 = vcmask 523264
      %v844 = vsel %vm842, %v834, 0
      %v847 = vsel %vm842, %v835, 0
      %v850 = vsel %vm842, %v836, 0
      %v853 = vsel %vm842, %v837, 0
      %v856 = vsel %vm842, %v838, 0
      %v859 = vsel %vm842, %v839, 0
      %v862 = vsel %vm842, %v840, 0
      %v865 = vsel %vm842, %v841, 0
      %867 = vmatprep.subr.bf16.mxu0 0
      %868 = vmatpush1.bf16.msra.mxu0 0
      %869 = vmatprep.subr.bf16.mxu0 0
      %870 = vmatpush1.bf16.msra.mxu0 0
      %871 = vmatprep.subr.bf16.mxu0 0
      %872 = vmatpush1.bf16.msra.mxu0 0
      %873 = vmatprep.subr.bf16.mxu0 0
      %874 = vmatpush1.bf16.msra.mxu0 0
      %875 = vmatprep.subr.bf16.mxu0 0
      %876 = vmatpush1.bf16.msra.mxu0 %v705
      %877 = vmatprep.subr.bf16.mxu0 0
      %878 = vmatpush1.bf16.msra.mxu0 %v704
      %879 = vmatprep.subr.bf16.mxu0 0
      %880 = vmatpush1.bf16.msra.mxu0 %v703
      %881 = vmatprep.subr.bf16.mxu0 0
      %882 = vmatpush1.bf16.msra.mxu0 %v702
      %883 = vmatprep.subr.bf16.mxu0 0
      %884 = vmatpush2.bf16.msra.mxu0 0
      %885 = vmatprep.subr.bf16.mxu0 0
      %886 = vmatpush2.bf16.msra.mxu0 0
      %887 = vmatprep.subr.bf16.mxu0 0
      %888 = vmatpush2.bf16.msra.mxu0 0
      %889 = vmatprep.subr.bf16.mxu0 0
      %890 = vmatpush2.bf16.msra.mxu0 0
      %891 = vmatprep.subr.bf16.mxu0 0
      %892 = vmatpush2.bf16.msra.mxu0 0
      %893 = vmatprep.subr.bf16.mxu0 0
      %894 = vmatpush2.bf16.msra.mxu0 0
      %895 = vmatprep.subr.bf16.mxu0 0
      %896 = vmatpush2.bf16.msra.mxu0 0
      %897 = vmatprep.subr.bf16.mxu0 0
      %898 = vmatpush2.bf16.msra.mxu0 0
      %899 = vmatprep.mubr.bf16.mxu0 0
      %900 = vmatmul.mubr.bf16.gmra.mxu0 %v844
      %v901 = vpop.f32.mrf.mxu0
      %v902 = vadd.f32 %v725, %v901
      %v903 = vpop.f32.mrf.mxu0
      %v904 = vpop.f32.mrf.mxu0
      %v905 = vadd.f32 %v730, %v904
      %v906 = vpop.f32.mrf.mxu0
      %907 = vmatprep.mubr.bf16.mxu0 0
      %908 = vmatmul.mubr.bf16.gmra.mxu0 %v847
      %v909 = vpop.f32.mrf.mxu0
      %v910 = vadd.f32 %v735, %v909
      %v911 = vpop.f32.mrf.mxu0
      %v912 = vpop.f32.mrf.mxu0
      %v913 = vadd.f32 %v740, %v912
      %v914 = vpop.f32.mrf.mxu0
      %915 = vmatprep.mubr.bf16.mxu0 0
      %916 = vmatmul.mubr.bf16.gmra.mxu0 %v850
      %v917 = vpop.f32.mrf.mxu0
      %v918 = vadd.f32 %v745, %v917
      %v919 = vpop.f32.mrf.mxu0
      %v920 = vpop.f32.mrf.mxu0
      %v921 = vadd.f32 %v750, %v920
      %v922 = vpop.f32.mrf.mxu0
      %923 = vmatprep.mubr.bf16.mxu0 0
      %924 = vmatmul.mubr.bf16.gmra.mxu0 %v853
      %v925 = vpop.f32.mrf.mxu0
      %v926 = vadd.f32 %v755, %v925
      %v927 = vpop.f32.mrf.mxu0
      %v928 = vpop.f32.mrf.mxu0
      %v929 = vadd.f32 %v760, %v928
      %v930 = vpop.f32.mrf.mxu0
      %931 = vmatprep.mubr.bf16.mxu0 0
      %932 = vmatmul.mubr.bf16.gmra.mxu0 %v856
      %v933 = vpop.f32.mrf.mxu0
      %v934 = vadd.f32 %v765, %v933
      %v935 = vpop.f32.mrf.mxu0
      %v936 = vpop.f32.mrf.mxu0
      %v937 = vadd.f32 %v770, %v936
      %v938 = vpop.f32.mrf.mxu0
      %939 = vmatprep.mubr.bf16.mxu0 0
      %940 = vmatmul.mubr.bf16.gmra.mxu0 %v859
      %v941 = vpop.f32.mrf.mxu0
      %v942 = vadd.f32 %v775, %v941
      %v943 = vpop.f32.mrf.mxu0
      %v944 = vpop.f32.mrf.mxu0
      %v945 = vadd.f32 %v780, %v944
      %v946 = vpop.f32.mrf.mxu0
      %947 = vmatprep.mubr.bf16.mxu0 0
      %948 = vmatmul.mubr.bf16.gmra.mxu0 %v862
      %v949 = vpop.f32.mrf.mxu0
      %v950 = vadd.f32 %v785, %v949
      %v951 = vpop.f32.mrf.mxu0
      %v952 = vpop.f32.mrf.mxu0
      %v953 = vadd.f32 %v790, %v952
      %v954 = vpop.f32.mrf.mxu0
      %955 = vmatprep.mubr.bf16.mxu0 0
      %956 = vmatmul.mubr.bf16.gmra.mxu0 %v865
      %v957 = vpop.f32.mrf.mxu0
      %v958 = vadd.f32 %v795, %v957
      %v959 = vpop.f32.mrf.mxu0
      %v960 = vpop.f32.mrf.mxu0
      %v961 = vadd.f32 %v800, %v960
      %v962 = vpop.f32.mrf.mxu0
      %963 = vdwg.mxu0
      %v964 = vmax.f32 %v902, 0.0
      %v965 = vmax.f32 %v905, 0.0
      %v966 = vmax.f32 %v910, 0.0
      %v967 = vmax.f32 %v913, 0.0
      %v968 = vmax.f32 %v918, 0.0
      %v969 = vmax.f32 %v921, 0.0
      %v970 = vmax.f32 %v926, 0.0
      %v971 = vmax.f32 %v929, 0.0
      %v972 = vmax.f32 %v934, 0.0
      %v973 = vmax.f32 %v937, 0.0
      %v974 = vmax.f32 %v942, 0.0
      %v975 = vmax.f32 %v945, 0.0
      %v976 = vmax.f32 %v950, 0.0
      %v977 = vmax.f32 %v953, 0.0
      %v978 = vmax.f32 %v958, 0.0
      %v979 = vmax.f32 %v961, 0.0
      %v980 = vld [vmem:[%s5] sm:$0xf]
      %v981 = vld [vmem:[%s5 + $0x4] sm:$0xf]
      %v982 = vld [vmem:[%s5 + $0x8] sm:$0xf]
      %v983 = vld [vmem:[%s5 + $0xc] sm:$0xf]
      %v984 = vld [vmem:[%s5 + $0x10] sm:$0xf]
      %v985 = vld [vmem:[%s5 + $0x14] sm:$0xf]
      %v986 = vld [vmem:[%s5 + $0x18] sm:$0xf]
      %v987 = vld [vmem:[%s5 + $0x1c] sm:$0xf]
      %v988 = vld [vmem:[%s5 + $0x20] sm:$0xf]
      %v989 = vld [vmem:[%s5 + $0x24] sm:$0xf]
      %v990 = vld [vmem:[%s5 + $0x28] sm:$0xf]
      %v991 = vld [vmem:[%s5 + $0x2c] sm:$0xf]
      %v992 = vld [vmem:[%s5 + $0x30] sm:$0xf]
      %v993 = vld [vmem:[%s5 + $0x34] sm:$0xf]
      %v994 = vld [vmem:[%s5 + $0x38] sm:$0xf]
      %v995 = vld [vmem:[%s5 + $0x3c] sm:$0xf]
      %v996 = vld [vmem:[%s5 + $0x40] sm:$0xf]
      %v997 = vld [vmem:[%s5 + $0x44] sm:$0xf]
      %v998 = vld [vmem:[%s5 + $0x48] sm:$0xf]
      %v999 = vld [vmem:[%s5 + $0x4c] sm:$0xf]
      %v1000 = vld [vmem:[%s5 + $0x50] sm:$0xf]
      %v1001 = vld [vmem:[%s5 + $0x54] sm:$0xf]
      %v1002 = vld [vmem:[%s5 + $0x58] sm:$0xf]
      %v1003 = vld [vmem:[%s5 + $0x5c] sm:$0xf]
      %v1004 = vld [vmem:[%s5 + $0x60] sm:$0xf]
      %v1005 = vld [vmem:[%s5 + $0x64] sm:$0xf]
      %v1006 = vld [vmem:[%s5 + $0x68] sm:$0xf]
      %v1007 = vld [vmem:[%s5 + $0x6c] sm:$0xf]
      %v1008 = vld [vmem:[%s5 + $0x70] sm:$0xf]
      %v1009 = vld [vmem:[%s5 + $0x74] sm:$0xf]
      %v1010 = vld [vmem:[%s5 + $0x78] sm:$0xf]
      %v1011 = vld [vmem:[%s5 + $0x7c] sm:$0xf]
      %v1012 = vld [vmem:[%s5 + $0x80] sm:$0xf]
      %v1013 = vld [vmem:[%s5 + $0x84] sm:$0xf]
      %v1014 = vld [vmem:[%s5 + $0x88] sm:$0xf]
      %v1015 = vld [vmem:[%s5 + $0x8c] sm:$0xf]
      %v1016 = vld [vmem:[%s5 + $0x90] sm:$0xf]
      %v1017 = vld [vmem:[%s5 + $0x94] sm:$0xf]
      %v1018 = vld [vmem:[%s5 + $0x98] sm:$0xf]
      %v1019 = vld [vmem:[%s5 + $0x9c] sm:$0xf]
      %v1020 = vld [vmem:[%s5 + $0xa0] sm:$0xf]
      %v1021 = vld [vmem:[%s5 + $0xa4] sm:$0xf]
      %v1022 = vld [vmem:[%s5 + $0xa8] sm:$0xf]
      %v1023 = vld [vmem:[%s5 + $0xac] sm:$0xf]
      %v1024 = vld [vmem:[%s5 + $0xb0] sm:$0xf]
      %v1025 = vld [vmem:[%s5 + $0xb4] sm:$0xf]
      %v1026 = vld [vmem:[%s5 + $0xb8] sm:$0xf]
      %v1027 = vld [vmem:[%s5 + $0xbc] sm:$0xf]
      %v1028 = vld [vmem:[%s5 + $0xc0] sm:$0xf]
      %v1029 = vld [vmem:[%s5 + $0xc4] sm:$0xf]
      %v1030 = vld [vmem:[%s5 + $0xc8] sm:$0xf]
      %v1031 = vld [vmem:[%s5 + $0xcc] sm:$0xf]
      %v1032 = vld [vmem:[%s5 + $0xd0] sm:$0xf]
      %v1033 = vld [vmem:[%s5 + $0xd4] sm:$0xf]
      %v1034 = vld [vmem:[%s5 + $0xd8] sm:$0xf]
      %v1035 = vld [vmem:[%s5 + $0xdc] sm:$0xf]
      %v1036 = vld [vmem:[%s5 + $0xe0] sm:$0xf]
      %v1037 = vld [vmem:[%s5 + $0xe4] sm:$0xf]
      %v1038 = vld [vmem:[%s5 + $0xe8] sm:$0xf]
      %v1039 = vld [vmem:[%s5 + $0xec] sm:$0xf]
      %v1040 = vld [vmem:[%s5 + $0xf0] sm:$0xf]
      %v1041 = vld [vmem:[%s5 + $0xf4] sm:$0xf]
      %v1042 = vld [vmem:[%s5 + $0xf8] sm:$0xf]
      %v1043 = vld [vmem:[%s5 + $0xfc] sm:$0xf]
      %v1044 = vld [vmem:[%s5 + $0x100] sm:$0xf]
      %v1045 = vld [vmem:[%s5 + $0x104] sm:$0xf]
      %v1046 = vld [vmem:[%s5 + $0x108] sm:$0xf]
      %v1047 = vld [vmem:[%s5 + $0x10c] sm:$0xf]
      %v1048 = vld [vmem:[%s5 + $0x110] sm:$0xf]
      %v1049 = vld [vmem:[%s5 + $0x114] sm:$0xf]
      %v1050 = vld [vmem:[%s5 + $0x118] sm:$0xf]
      %v1051 = vld [vmem:[%s5 + $0x11c] sm:$0xf]
      %v1052 = vld [vmem:[%s5 + $0x120] sm:$0xf]
      %v1053 = vld [vmem:[%s5 + $0x124] sm:$0xf]
      %v1054 = vld [vmem:[%s5 + $0x128] sm:$0xf]
      %v1055 = vld [vmem:[%s5 + $0x12c] sm:$0xf]
      %v1056 = vld [vmem:[%s5 + $0x130] sm:$0xf]
      %v1057 = vld [vmem:[%s5 + $0x134] sm:$0xf]
      %v1058 = vld [vmem:[%s5 + $0x138] sm:$0xf]
      %v1059 = vld [vmem:[%s5 + $0x13c] sm:$0xf]
      %v1060 = vld [vmem:[%s5 + $0x140] sm:$0xf]
      %v1061 = vld [vmem:[%s5 + $0x144] sm:$0xf]
      %v1062 = vld [vmem:[%s5 + $0x148] sm:$0xf]
      %v1063 = vld [vmem:[%s5 + $0x14c] sm:$0xf]
      %v1064 = vld [vmem:[%s5 + $0x150] sm:$0xf]
      %v1065 = vld [vmem:[%s5 + $0x154] sm:$0xf]
      %v1066 = vld [vmem:[%s5 + $0x158] sm:$0xf]
      %v1067 = vld [vmem:[%s5 + $0x15c] sm:$0xf]
      %v1068 = vld [vmem:[%s5 + $0x160] sm:$0xf]
      %v1069 = vld [vmem:[%s5 + $0x164] sm:$0xf]
      %v1070 = vld [vmem:[%s5 + $0x168] sm:$0xf]
      %v1071 = vld [vmem:[%s5 + $0x16c] sm:$0xf]
      %v1072 = vld [vmem:[%s5 + $0x170] sm:$0xf]
      %v1073 = vld [vmem:[%s5 + $0x174] sm:$0xf]
      %v1074 = vld [vmem:[%s5 + $0x178] sm:$0xf]
      %v1075 = vld [vmem:[%s5 + $0x17c] sm:$0xf]
      %v1076 = vld [vmem:[%s5 + $0x180] sm:$0xf]
      %v1077 = vld [vmem:[%s5 + $0x184] sm:$0xf]
      %v1078 = vld [vmem:[%s5 + $0x188] sm:$0xf]
      %v1079 = vld [vmem:[%s5 + $0x18c] sm:$0xf]
      %v1080 = vld [vmem:[%s5 + $0x190] sm:$0xf]
      %v1081 = vld [vmem:[%s5 + $0x194] sm:$0xf]
      %v1082 = vld [vmem:[%s5 + $0x198] sm:$0xf]
      %v1083 = vld [vmem:[%s5 + $0x19c] sm:$0xf]
      %v1084 = vld [vmem:[%s5 + $0x1a0] sm:$0xf]
      %v1085 = vld [vmem:[%s5 + $0x1a4] sm:$0xf]
      %v1086 = vld [vmem:[%s5 + $0x1a8] sm:$0xf]
      %v1087 = vld [vmem:[%s5 + $0x1ac] sm:$0xf]
      %v1088 = vld [vmem:[%s5 + $0x1b0] sm:$0xf]
      %v1089 = vld [vmem:[%s5 + $0x1b4] sm:$0xf]
      %v1090 = vld [vmem:[%s5 + $0x1b8] sm:$0xf]
      %v1091 = vld [vmem:[%s5 + $0x1bc] sm:$0xf]
      %v1092 = vld [vmem:[%s5 + $0x1c0] sm:$0xf]
      %v1093 = vld [vmem:[%s5 + $0x1c4] sm:$0xf]
      %v1094 = vld [vmem:[%s5 + $0x1c8] sm:$0xf]
      %v1095 = vld [vmem:[%s5 + $0x1cc] sm:$0xf]
      %v1096 = vld [vmem:[%s5 + $0x1d0] sm:$0xf]
      %v1097 = vld [vmem:[%s5 + $0x1d4] sm:$0xf]
      %v1098 = vld [vmem:[%s5 + $0x1d8] sm:$0xf]
      %v1099 = vld [vmem:[%s5 + $0x1dc] sm:$0xf]
      %v1100 = vld [vmem:[%s5 + $0x1e0] sm:$0xf]
      %v1101 = vld [vmem:[%s5 + $0x1e4] sm:$0xf]
      %v1102 = vld [vmem:[%s5 + $0x1e8] sm:$0xf]
      %v1103 = vld [vmem:[%s5 + $0x1ec] sm:$0xf]
      %v1104 = vld [vmem:[%s5 + $0x1f0] sm:$0xf]
      %v1105 = vld [vmem:[%s5 + $0x1f4] sm:$0xf]
      %v1106 = vld [vmem:[%s5 + $0x1f8] sm:$0xf]
      %v1107 = vld [vmem:[%s5 + $0x1fc] sm:$0xf]
      %v1108 = vpack.c.bf16 %v965, %v964
      %v1109 = vpack.c.bf16 %v967, %v966
      %v1110 = vpack.c.bf16 %v969, %v968
      %v1111 = vpack.c.bf16 %v971, %v970
      %v1112 = vpack.c.bf16 %v973, %v972
      %v1113 = vpack.c.bf16 %v975, %v974
      %v1114 = vpack.c.bf16 %v977, %v976
      %v1115 = vpack.c.bf16 %v979, %v978
      %v1244 = vunpack.c.l.b16 %v980
      %v1245 = vunpack.c.l.b16 %v981
      %v1246 = vunpack.c.l.b16 %v982
      %v1247 = vunpack.c.l.b16 %v983
      %v1248 = vunpack.c.l.b16 %v984
      %v1249 = vunpack.c.l.b16 %v985
      %v1250 = vunpack.c.l.b16 %v986
      %v1251 = vunpack.c.l.b16 %v987
      %v1252 = vunpack.c.l.b16 %v988
      %v1253 = vunpack.c.l.b16 %v989
      %v1254 = vunpack.c.l.b16 %v990
      %v1255 = vunpack.c.l.b16 %v991
      %v1256 = vunpack.c.l.b16 %v992
      %v1257 = vunpack.c.l.b16 %v993
      %v1258 = vunpack.c.l.b16 %v994
      %v1259 = vunpack.c.l.b16 %v995
      %v1260 = vunpack.c.l.b16 %v996
      %v1261 = vunpack.c.l.b16 %v997
      %v1262 = vunpack.c.l.b16 %v998
      %v1263 = vunpack.c.l.b16 %v999
      %v1264 = vunpack.c.l.b16 %v1000
      %v1265 = vunpack.c.l.b16 %v1001
      %v1266 = vunpack.c.l.b16 %v1002
      %v1267 = vunpack.c.l.b16 %v1003
      %v1268 = vunpack.c.l.b16 %v1004
      %v1269 = vunpack.c.l.b16 %v1005
      %v1270 = vunpack.c.l.b16 %v1006
      %v1271 = vunpack.c.l.b16 %v1007
      %v1272 = vunpack.c.l.b16 %v1008
      %v1273 = vunpack.c.l.b16 %v1009
      %v1274 = vunpack.c.l.b16 %v1010
      %v1275 = vunpack.c.l.b16 %v1011
      %v1276 = vunpack.c.l.b16 %v1012
      %v1277 = vunpack.c.l.b16 %v1013
      %v1278 = vunpack.c.l.b16 %v1014
      %v1279 = vunpack.c.l.b16 %v1015
      %v1280 = vunpack.c.l.b16 %v1016
      %v1281 = vunpack.c.l.b16 %v1017
      %v1282 = vunpack.c.l.b16 %v1018
      %v1283 = vunpack.c.l.b16 %v1019
      %v1284 = vunpack.c.l.b16 %v1020
      %v1285 = vunpack.c.l.b16 %v1021
      %v1286 = vunpack.c.l.b16 %v1022
      %v1287 = vunpack.c.l.b16 %v1023
      %v1288 = vunpack.c.l.b16 %v1024
      %v1289 = vunpack.c.l.b16 %v1025
      %v1290 = vunpack.c.l.b16 %v1026
      %v1291 = vunpack.c.l.b16 %v1027
      %v1292 = vunpack.c.l.b16 %v1028
      %v1293 = vunpack.c.l.b16 %v1029
      %v1294 = vunpack.c.l.b16 %v1030
      %v1295 = vunpack.c.l.b16 %v1031
      %v1296 = vunpack.c.l.b16 %v1032
      %v1297 = vunpack.c.l.b16 %v1033
      %v1298 = vunpack.c.l.b16 %v1034
      %v1299 = vunpack.c.l.b16 %v1035
      %v1300 = vunpack.c.l.b16 %v1036
      %v1301 = vunpack.c.l.b16 %v1037
      %v1302 = vunpack.c.l.b16 %v1038
      %v1303 = vunpack.c.l.b16 %v1039
      %v1304 = vunpack.c.l.b16 %v1040
      %v1305 = vunpack.c.l.b16 %v1041
      %v1306 = vunpack.c.l.b16 %v1042
      %v1307 = vunpack.c.l.b16 %v1043
      %v1308 = vunpack.c.l.b16 %v1044
      %v1309 = vunpack.c.l.b16 %v1045
      %v1310 = vunpack.c.l.b16 %v1046
      %v1311 = vunpack.c.l.b16 %v1047
      %v1312 = vunpack.c.l.b16 %v1048
      %v1313 = vunpack.c.l.b16 %v1049
      %v1314 = vunpack.c.l.b16 %v1050
      %v1315 = vunpack.c.l.b16 %v1051
      %v1316 = vunpack.c.l.b16 %v1052
      %v1317 = vunpack.c.l.b16 %v1053
      %v1318 = vunpack.c.l.b16 %v1054
      %v1319 = vunpack.c.l.b16 %v1055
      %v1320 = vunpack.c.l.b16 %v1056
      %v1321 = vunpack.c.l.b16 %v1057
      %v1322 = vunpack.c.l.b16 %v1058
      %v1323 = vunpack.c.l.b16 %v1059
      %v1324 = vunpack.c.l.b16 %v1060
      %v1325 = vunpack.c.l.b16 %v1061
      %v1326 = vunpack.c.l.b16 %v1062
      %v1327 = vunpack.c.l.b16 %v1063
      %v1328 = vunpack.c.l.b16 %v1064
      %v1329 = vunpack.c.l.b16 %v1065
      %v1330 = vunpack.c.l.b16 %v1066
      %v1331 = vunpack.c.l.b16 %v1067
      %v1332 = vunpack.c.l.b16 %v1068
      %v1333 = vunpack.c.l.b16 %v1069
      %v1334 = vunpack.c.l.b16 %v1070
      %v1335 = vunpack.c.l.b16 %v1071
      %v1336 = vunpack.c.l.b16 %v1072
      %v1337 = vunpack.c.l.b16 %v1073
      %v1338 = vunpack.c.l.b16 %v1074
      %v1339 = vunpack.c.l.b16 %v1075
      %v1340 = vunpack.c.l.b16 %v1076
      %v1341 = vunpack.c.l.b16 %v1077
      %v1342 = vunpack.c.l.b16 %v1078
      %v1343 = vunpack.c.l.b16 %v1079
      %v1344 = vunpack.c.l.b16 %v1080
      %v1345 = vunpack.c.l.b16 %v1081
      %v1346 = vunpack.c.l.b16 %v1082
      %v1347 = vunpack.c.l.b16 %v1083
      %v1348 = vunpack.c.l.b16 %v1084
      %v1349 = vunpack.c.l.b16 %v1085
      %v1350 = vunpack.c.l.b16 %v1086
      %v1351 = vunpack.c.l.b16 %v1087
      %v1352 = vunpack.c.l.b16 %v1088
      %v1353 = vunpack.c.l.b16 %v1089
      %v1354 = vunpack.c.l.b16 %v1090
      %v1355 = vunpack.c.l.b16 %v1091
      %v1356 = vunpack.c.l.b16 %v1092
      %v1357 = vunpack.c.l.b16 %v1093
      %v1358 = vunpack.c.l.b16 %v1094
      %v1359 = vunpack.c.l.b16 %v1095
      %v1360 = vunpack.c.l.b16 %v1096
      %v1361 = vunpack.c.l.b16 %v1097
      %v1362 = vunpack.c.l.b16 %v1098
      %v1363 = vunpack.c.l.b16 %v1099
      %v1364 = vunpack.c.l.b16 %v1100
      %v1365 = vunpack.c.l.b16 %v1101
      %v1366 = vunpack.c.l.b16 %v1102
      %v1367 = vunpack.c.l.b16 %v1103
      %v1368 = vunpack.c.l.b16 %v1104
      %v1369 = vunpack.c.l.b16 %v1105
      %v1370 = vunpack.c.l.b16 %v1106
      %v1371 = vunpack.c.l.b16 %v1107
      %v1372 = vpack.c.b16 %v1245, %v1244
      %v1373 = vpack.c.b16 %v1247, %v1246
      %v1374 = vpack.c.b16 %v1249, %v1248
      %v1375 = vpack.c.b16 %v1251, %v1250
      %v1376 = vpack.c.b16 %v1253, %v1252
      %v1377 = vpack.c.b16 %v1255, %v1254
      %v1378 = vpack.c.b16 %v1257, %v1256
      %v1379 = vpack.c.b16 %v1259, %v1258
      %v1380 = vpack.c.b16 %v1261, %v1260
      %v1381 = vpack.c.b16 %v1263, %v1262
      %v1382 = vpack.c.b16 %v1265, %v1264
      %v1383 = vpack.c.b16 %v1267, %v1266
      %v1384 = vpack.c.b16 %v1269, %v1268
      %v1385 = vpack.c.b16 %v1271, %v1270
      %v1386 = vpack.c.b16 %v1273, %v1272
      %v1387 = vpack.c.b16 %v1275, %v1274
      %v1388 = vpack.c.b16 %v1277, %v1276
      %v1389 = vpack.c.b16 %v1279, %v1278
      %v1390 = vpack.c.b16 %v1281, %v1280
      %v1391 = vpack.c.b16 %v1283, %v1282
      %v1392 = vpack.c.b16 %v1285, %v1284
      %v1393 = vpack.c.b16 %v1287, %v1286
      %v1394 = vpack.c.b16 %v1289, %v1288
      %v1395 = vpack.c.b16 %v1291, %v1290
      %v1396 = vpack.c.b16 %v1293, %v1292
      %v1397 = vpack.c.b16 %v1295, %v1294
      %v1398 = vpack.c.b16 %v1297, %v1296
      %v1399 = vpack.c.b16 %v1299, %v1298
      %v1400 = vpack.c.b16 %v1301, %v1300
      %v1401 = vpack.c.b16 %v1303, %v1302
      %v1402 = vpack.c.b16 %v1305, %v1304
      %v1403 = vpack.c.b16 %v1307, %v1306
      %v1404 = vpack.c.b16 %v1309, %v1308
      %v1405 = vpack.c.b16 %v1311, %v1310
      %v1406 = vpack.c.b16 %v1313, %v1312
      %v1407 = vpack.c.b16 %v1315, %v1314
      %v1408 = vpack.c.b16 %v1317, %v1316
      %v1409 = vpack.c.b16 %v1319, %v1318
      %v1410 = vpack.c.b16 %v1321, %v1320
      %v1411 = vpack.c.b16 %v1323, %v1322
      %v1412 = vpack.c.b16 %v1325, %v1324
      %v1413 = vpack.c.b16 %v1327, %v1326
      %v1414 = vpack.c.b16 %v1329, %v1328
      %v1415 = vpack.c.b16 %v1331, %v1330
      %v1416 = vpack.c.b16 %v1333, %v1332
      %v1417 = vpack.c.b16 %v1335, %v1334
      %v1418 = vpack.c.b16 %v1337, %v1336
      %v1419 = vpack.c.b16 %v1339, %v1338
      %v1420 = vpack.c.b16 %v1341, %v1340
      %v1421 = vpack.c.b16 %v1343, %v1342
      %v1422 = vpack.c.b16 %v1345, %v1344
      %v1423 = vpack.c.b16 %v1347, %v1346
      %v1424 = vpack.c.b16 %v1349, %v1348
      %v1425 = vpack.c.b16 %v1351, %v1350
      %v1426 = vpack.c.b16 %v1353, %v1352
      %v1427 = vpack.c.b16 %v1355, %v1354
      %v1428 = vpack.c.b16 %v1357, %v1356
      %v1429 = vpack.c.b16 %v1359, %v1358
      %v1430 = vpack.c.b16 %v1361, %v1360
      %v1431 = vpack.c.b16 %v1363, %v1362
      %v1432 = vpack.c.b16 %v1365, %v1364
      %v1433 = vpack.c.b16 %v1367, %v1366
      %v1434 = vpack.c.b16 %v1369, %v1368
      %v1435 = vpack.c.b16 %v1371, %v1370
      %1500 = vmatprep.subr.bf16.mxu0 0
      %1501 = vmatpush1.bf16.msra.mxu0 %v1115
      %1502 = vmatprep.subr.bf16.mxu0 0
      %1503 = vmatpush1.bf16.msra.mxu0 %v1114
      %1504 = vmatprep.subr.bf16.mxu0 0
      %1505 = vmatpush1.bf16.msra.mxu0 %v1113
      %1506 = vmatprep.subr.bf16.mxu0 0
      %1507 = vmatpush1.bf16.msra.mxu0 %v1112
      %1508 = vmatprep.subr.bf16.mxu0 0
      %1509 = vmatpush1.bf16.msra.mxu0 %v1111
      %1510 = vmatprep.subr.bf16.mxu0 0
      %1511 = vmatpush1.bf16.msra.mxu0 %v1110
      %1512 = vmatprep.subr.bf16.mxu0 0
      %1513 = vmatpush1.bf16.msra.mxu0 %v1109
      %1514 = vmatprep.subr.bf16.mxu0 0
      %1515 = vmatpush1.bf16.msra.mxu0 %v1108
      %1516 = vmatprep.subr.bf16.mxu0 0
      %1517 = vmatpush2.bf16.msra.mxu0 0
      %1518 = vmatprep.subr.bf16.mxu0 0
      %1519 = vmatpush2.bf16.msra.mxu0 0
      %1520 = vmatprep.subr.bf16.mxu0 0
      %1521 = vmatpush2.bf16.msra.mxu0 0
      %1522 = vmatprep.subr.bf16.mxu0 0
      %1523 = vmatpush2.bf16.msra.mxu0 0
      %1524 = vmatprep.subr.bf16.mxu0 0
      %1525 = vmatpush2.bf16.msra.mxu0 0
      %1526 = vmatprep.subr.bf16.mxu0 0
      %1527 = vmatpush2.bf16.msra.mxu0 0
      %1528 = vmatprep.subr.bf16.mxu0 0
      %1529 = vmatpush2.bf16.msra.mxu0 0
      %1530 = vmatprep.subr.bf16.mxu0 0
      %1531 = vmatpush2.bf16.msra.mxu0 0
      %1532 = vmatprep.mubr.bf16.mxu0 0
      %1533 = vmatmul.mubr.bf16.gmra.mxu0 %v1372
      %v1534 = vpop.f32.mrf.mxu0
      %v1535 = vadd.f32 0.0, %v1534
      %v1536 = vpop.f32.mrf.mxu0
      %v1537 = vpop.f32.mrf.mxu0
      %v1538 = vadd.f32 0.0, %v1537
      %v1539 = vpop.f32.mrf.mxu0
      %1540 = vmatprep.mubr.bf16.mxu0 0
      %1541 = vmatmul.mubr.bf16.gmra.mxu0 %v1373
      %v1542 = vpop.f32.mrf.mxu0
      %v1543 = vadd.f32 0.0, %v1542
      %v1544 = vpop.f32.mrf.mxu0
      %v1545 = vpop.f32.mrf.mxu0
      %v1546 = vadd.f32 0.0, %v1545
      %v1547 = vpop.f32.mrf.mxu0
      %1548 = vmatprep.mubr.bf16.mxu0 0
      %1549 = vmatmul.mubr.bf16.gmra.mxu0 %v1374
      %v1550 = vpop.f32.mrf.mxu0
      %v1551 = vadd.f32 0.0, %v1550
      %v1552 = vpop.f32.mrf.mxu0
      %v1553 = vpop.f32.mrf.mxu0
      %v1554 = vadd.f32 0.0, %v1553
      %v1555 = vpop.f32.mrf.mxu0
      %1556 = vmatprep.mubr.bf16.mxu0 0
      %1557 = vmatmul.mubr.bf16.gmra.mxu0 %v1375
      %v1558 = vpop.f32.mrf.mxu0
      %v1559 = vadd.f32 0.0, %v1558
      %v1560 = vpop.f32.mrf.mxu0
      %v1561 = vpop.f32.mrf.mxu0
      %v1562 = vadd.f32 0.0, %v1561
      %v1563 = vpop.f32.mrf.mxu0
      %1564 = vmatprep.mubr.bf16.mxu0 0
      %1565 = vmatmul.mubr.bf16.gmra.mxu0 %v1376
      %v1566 = vpop.f32.mrf.mxu0
      %v1567 = vadd.f32 0.0, %v1566
      %v1568 = vpop.f32.mrf.mxu0
      %v1569 = vpop.f32.mrf.mxu0
      %v1570 = vadd.f32 0.0, %v1569
      %v1571 = vpop.f32.mrf.mxu0
      %1572 = vmatprep.mubr.bf16.mxu0 0
      %1573 = vmatmul.mubr.bf16.gmra.mxu0 %v1377
      %v1574 = vpop.f32.mrf.mxu0
      %v1575 = vadd.f32 0.0, %v1574
      %v1576 = vpop.f32.mrf.mxu0
      %v1577 = vpop.f32.mrf.mxu0
      %v1578 = vadd.f32 0.0, %v1577
      %v1579 = vpop.f32.mrf.mxu0
      %1580 = vmatprep.mubr.bf16.mxu0 0
      %1581 = vmatmul.mubr.bf16.gmra.mxu0 %v1378
      %v1582 = vpop.f32.mrf.mxu0
      %v1583 = vadd.f32 0.0, %v1582
      %v1584 = vpop.f32.mrf.mxu0
      %v1585 = vpop.f32.mrf.mxu0
      %v1586 = vadd.f32 0.0, %v1585
      %v1587 = vpop.f32.mrf.mxu0
      %1588 = vmatprep.mubr.bf16.mxu0 0
      %1589 = vmatmul.mubr.bf16.gmra.mxu0 %v1379
      %v1590 = vpop.f32.mrf.mxu0
      %v1591 = vadd.f32 0.0, %v1590
      %v1592 = vpop.f32.mrf.mxu0
      %v1593 = vpop.f32.mrf.mxu0
      %v1594 = vadd.f32 0.0, %v1593
      %v1595 = vpop.f32.mrf.mxu0
      %1596 = vmatprep.mubr.bf16.mxu0 0
      %1597 = vmatmul.mubr.bf16.gmra.mxu0 %v1380
      %v1598 = vpop.f32.mrf.mxu0
      %v1599 = vadd.f32 0.0, %v1598
      %v1600 = vpop.f32.mrf.mxu0
      %v1601 = vpop.f32.mrf.mxu0
      %v1602 = vadd.f32 0.0, %v1601
      %v1603 = vpop.f32.mrf.mxu0
      %1604 = vmatprep.mubr.bf16.mxu0 0
      %1605 = vmatmul.mubr.bf16.gmra.mxu0 %v1381
      %v1606 = vpop.f32.mrf.mxu0
      %v1607 = vadd.f32 0.0, %v1606
      %v1608 = vpop.f32.mrf.mxu0
      %v1609 = vpop.f32.mrf.mxu0
      %v1610 = vadd.f32 0.0, %v1609
      %v1611 = vpop.f32.mrf.mxu0
      %1612 = vmatprep.mubr.bf16.mxu0 0
      %1613 = vmatmul.mubr.bf16.gmra.mxu0 %v1382
      %v1614 = vpop.f32.mrf.mxu0
      %v1615 = vadd.f32 0.0, %v1614
      %v1616 = vpop.f32.mrf.mxu0
      %v1617 = vpop.f32.mrf.mxu0
      %v1618 = vadd.f32 0.0, %v1617
      %v1619 = vpop.f32.mrf.mxu0
      %1620 = vmatprep.mubr.bf16.mxu0 0
      %1621 = vmatmul.mubr.bf16.gmra.mxu0 %v1383
      %v1622 = vpop.f32.mrf.mxu0
      %v1623 = vadd.f32 0.0, %v1622
      %v1624 = vpop.f32.mrf.mxu0
      %v1625 = vpop.f32.mrf.mxu0
      %v1626 = vadd.f32 0.0, %v1625
      %v1627 = vpop.f32.mrf.mxu0
      %1628 = vmatprep.mubr.bf16.mxu0 0
      %1629 = vmatmul.mubr.bf16.gmra.mxu0 %v1384
      %v1630 = vpop.f32.mrf.mxu0
      %v1631 = vadd.f32 0.0, %v1630
      %v1632 = vpop.f32.mrf.mxu0
      %v1633 = vpop.f32.mrf.mxu0
      %v1634 = vadd.f32 0.0, %v1633
      %v1635 = vpop.f32.mrf.mxu0
      %1636 = vmatprep.mubr.bf16.mxu0 0
      %1637 = vmatmul.mubr.bf16.gmra.mxu0 %v1385
      %v1638 = vpop.f32.mrf.mxu0
      %v1639 = vadd.f32 0.0, %v1638
      %v1640 = vpop.f32.mrf.mxu0
      %v1641 = vpop.f32.mrf.mxu0
      %v1642 = vadd.f32 0.0, %v1641
      %v1643 = vpop.f32.mrf.mxu0
      %1644 = vmatprep.mubr.bf16.mxu0 0
      %1645 = vmatmul.mubr.bf16.gmra.mxu0 %v1386
      %v1646 = vpop.f32.mrf.mxu0
      %v1647 = vadd.f32 0.0, %v1646
      %v1648 = vpop.f32.mrf.mxu0
      %v1649 = vpop.f32.mrf.mxu0
      %v1650 = vadd.f32 0.0, %v1649
      %v1651 = vpop.f32.mrf.mxu0
      %1652 = vmatprep.mubr.bf16.mxu0 0
      %1653 = vmatmul.mubr.bf16.gmra.mxu0 %v1387
      %v1654 = vpop.f32.mrf.mxu0
      %v1655 = vadd.f32 0.0, %v1654
      %v1656 = vpop.f32.mrf.mxu0
      %v1657 = vpop.f32.mrf.mxu0
      %v1658 = vadd.f32 0.0, %v1657
      %v1659 = vpop.f32.mrf.mxu0
      %1660 = vmatprep.mubr.bf16.mxu0 0
      %1661 = vmatmul.mubr.bf16.gmra.mxu0 %v1388
      %v1662 = vpop.f32.mrf.mxu0
      %v1663 = vadd.f32 0.0, %v1662
      %v1664 = vpop.f32.mrf.mxu0
      %v1665 = vpop.f32.mrf.mxu0
      %v1666 = vadd.f32 0.0, %v1665
      %v1667 = vpop.f32.mrf.mxu0
      %1668 = vmatprep.mubr.bf16.mxu0 0
      %1669 = vmatmul.mubr.bf16.gmra.mxu0 %v1389
      %v1670 = vpop.f32.mrf.mxu0
      %v1671 = vadd.f32 0.0, %v1670
      %v1672 = vpop.f32.mrf.mxu0
      %v1673 = vpop.f32.mrf.mxu0
      %v1674 = vadd.f32 0.0, %v1673
      %v1675 = vpop.f32.mrf.mxu0
      %1676 = vmatprep.mubr.bf16.mxu0 0
      %1677 = vmatmul.mubr.bf16.gmra.mxu0 %v1390
      %v1678 = vpop.f32.mrf.mxu0
      %v1679 = vadd.f32 0.0, %v1678
      %v1680 = vpop.f32.mrf.mxu0
      %v1681 = vpop.f32.mrf.mxu0
      %v1682 = vadd.f32 0.0, %v1681
      %v1683 = vpop.f32.mrf.mxu0
      %1684 = vmatprep.mubr.bf16.mxu0 0
      %1685 = vmatmul.mubr.bf16.gmra.mxu0 %v1391
      %v1686 = vpop.f32.mrf.mxu0
      %v1687 = vadd.f32 0.0, %v1686
      %v1688 = vpop.f32.mrf.mxu0
      %v1689 = vpop.f32.mrf.mxu0
      %v1690 = vadd.f32 0.0, %v1689
      %v1691 = vpop.f32.mrf.mxu0
      %1692 = vmatprep.mubr.bf16.mxu0 0
      %1693 = vmatmul.mubr.bf16.gmra.mxu0 %v1392
      %v1694 = vpop.f32.mrf.mxu0
      %v1695 = vadd.f32 0.0, %v1694
      %v1696 = vpop.f32.mrf.mxu0
      %v1697 = vpop.f32.mrf.mxu0
      %v1698 = vadd.f32 0.0, %v1697
      %v1699 = vpop.f32.mrf.mxu0
      %1700 = vmatprep.mubr.bf16.mxu0 0
      %1701 = vmatmul.mubr.bf16.gmra.mxu0 %v1393
      %v1702 = vpop.f32.mrf.mxu0
      %v1703 = vadd.f32 0.0, %v1702
      %v1704 = vpop.f32.mrf.mxu0
      %v1705 = vpop.f32.mrf.mxu0
      %v1706 = vadd.f32 0.0, %v1705
      %v1707 = vpop.f32.mrf.mxu0
      %1708 = vmatprep.mubr.bf16.mxu0 0
      %1709 = vmatmul.mubr.bf16.gmra.mxu0 %v1394
      %v1710 = vpop.f32.mrf.mxu0
      %v1711 = vadd.f32 0.0, %v1710
      %v1712 = vpop.f32.mrf.mxu0
      %v1713 = vpop.f32.mrf.mxu0
      %v1714 = vadd.f32 0.0, %v1713
      %v1715 = vpop.f32.mrf.mxu0
      %1716 = vmatprep.mubr.bf16.mxu0 0
      %1717 = vmatmul.mubr.bf16.gmra.mxu0 %v1395
      %v1718 = vpop.f32.mrf.mxu0
      %v1719 = vadd.f32 0.0, %v1718
      %v1720 = vpop.f32.mrf.mxu0
      %v1721 = vpop.f32.mrf.mxu0
      %v1722 = vadd.f32 0.0, %v1721
      %v1723 = vpop.f32.mrf.mxu0
      %1724 = vmatprep.mubr.bf16.mxu0 0
      %1725 = vmatmul.mubr.bf16.gmra.mxu0 %v1396
      %v1726 = vpop.f32.mrf.mxu0
      %v1727 = vadd.f32 0.0, %v1726
      %v1728 = vpop.f32.mrf.mxu0
      %v1729 = vpop.f32.mrf.mxu0
      %v1730 = vadd.f32 0.0, %v1729
      %v1731 = vpop.f32.mrf.mxu0
      %1732 = vmatprep.mubr.bf16.mxu0 0
      %1733 = vmatmul.mubr.bf16.gmra.mxu0 %v1397
      %v1734 = vpop.f32.mrf.mxu0
      %v1735 = vadd.f32 0.0, %v1734
      %v1736 = vpop.f32.mrf.mxu0
      %v1737 = vpop.f32.mrf.mxu0
      %v1738 = vadd.f32 0.0, %v1737
      %v1739 = vpop.f32.mrf.mxu0
      %1740 = vmatprep.mubr.bf16.mxu0 0
      %1741 = vmatmul.mubr.bf16.gmra.mxu0 %v1398
      %v1742 = vpop.f32.mrf.mxu0
      %v1743 = vadd.f32 0.0, %v1742
      %v1744 = vpop.f32.mrf.mxu0
      %v1745 = vpop.f32.mrf.mxu0
      %v1746 = vadd.f32 0.0, %v1745
      %v1747 = vpop.f32.mrf.mxu0
      %1748 = vmatprep.mubr.bf16.mxu0 0
      %1749 = vmatmul.mubr.bf16.gmra.mxu0 %v1399
      %v1750 = vpop.f32.mrf.mxu0
      %v1751 = vadd.f32 0.0, %v1750
      %v1752 = vpop.f32.mrf.mxu0
      %v1753 = vpop.f32.mrf.mxu0
      %v1754 = vadd.f32 0.0, %v1753
      %v1755 = vpop.f32.mrf.mxu0
      %1756 = vmatprep.mubr.bf16.mxu0 0
      %1757 = vmatmul.mubr.bf16.gmra.mxu0 %v1400
      %v1758 = vpop.f32.mrf.mxu0
      %v1759 = vadd.f32 0.0, %v1758
      %v1760 = vpop.f32.mrf.mxu0
      %v1761 = vpop.f32.mrf.mxu0
      %v1762 = vadd.f32 0.0, %v1761
      %v1763 = vpop.f32.mrf.mxu0
      %1764 = vmatprep.mubr.bf16.mxu0 0
      %1765 = vmatmul.mubr.bf16.gmra.mxu0 %v1401
      %v1766 = vpop.f32.mrf.mxu0
      %v1767 = vadd.f32 0.0, %v1766
      %v1768 = vpop.f32.mrf.mxu0
      %v1769 = vpop.f32.mrf.mxu0
      %v1770 = vadd.f32 0.0, %v1769
      %v1771 = vpop.f32.mrf.mxu0
      %1772 = vmatprep.mubr.bf16.mxu0 0
      %1773 = vmatmul.mubr.bf16.gmra.mxu0 %v1402
      %v1774 = vpop.f32.mrf.mxu0
      %v1775 = vadd.f32 0.0, %v1774
      %v1776 = vpop.f32.mrf.mxu0
      %v1777 = vpop.f32.mrf.mxu0
      %v1778 = vadd.f32 0.0, %v1777
      %v1779 = vpop.f32.mrf.mxu0
      %1780 = vmatprep.mubr.bf16.mxu0 0
      %1781 = vmatmul.mubr.bf16.gmra.mxu0 %v1403
      %v1782 = vpop.f32.mrf.mxu0
      %v1783 = vadd.f32 0.0, %v1782
      %v1784 = vpop.f32.mrf.mxu0
      %v1785 = vpop.f32.mrf.mxu0
      %v1786 = vadd.f32 0.0, %v1785
      %v1787 = vpop.f32.mrf.mxu0
      %1788 = vmatprep.mubr.bf16.mxu0 0
      %1789 = vmatmul.mubr.bf16.gmra.mxu0 %v1404
      %v1790 = vpop.f32.mrf.mxu0
      %v1791 = vadd.f32 0.0, %v1790
      %v1792 = vpop.f32.mrf.mxu0
      %v1793 = vpop.f32.mrf.mxu0
      %v1794 = vadd.f32 0.0, %v1793
      %v1795 = vpop.f32.mrf.mxu0
      %1796 = vmatprep.mubr.bf16.mxu0 0
      %1797 = vmatmul.mubr.bf16.gmra.mxu0 %v1405
      %v1798 = vpop.f32.mrf.mxu0
      %v1799 = vadd.f32 0.0, %v1798
      %v1800 = vpop.f32.mrf.mxu0
      %v1801 = vpop.f32.mrf.mxu0
      %v1802 = vadd.f32 0.0, %v1801
      %v1803 = vpop.f32.mrf.mxu0
      %1804 = vmatprep.mubr.bf16.mxu0 0
      %1805 = vmatmul.mubr.bf16.gmra.mxu0 %v1406
      %v1806 = vpop.f32.mrf.mxu0
      %v1807 = vadd.f32 0.0, %v1806
      %v1808 = vpop.f32.mrf.mxu0
      %v1809 = vpop.f32.mrf.mxu0
      %v1810 = vadd.f32 0.0, %v1809
      %v1811 = vpop.f32.mrf.mxu0
      %1812 = vmatprep.mubr.bf16.mxu0 0
      %1813 = vmatmul.mubr.bf16.gmra.mxu0 %v1407
      %v1814 = vpop.f32.mrf.mxu0
      %v1815 = vadd.f32 0.0, %v1814
      %v1816 = vpop.f32.mrf.mxu0
      %v1817 = vpop.f32.mrf.mxu0
      %v1818 = vadd.f32 0.0, %v1817
      %v1819 = vpop.f32.mrf.mxu0
      %1820 = vmatprep.mubr.bf16.mxu0 0
      %1821 = vmatmul.mubr.bf16.gmra.mxu0 %v1408
      %v1822 = vpop.f32.mrf.mxu0
      %v1823 = vadd.f32 0.0, %v1822
      %v1824 = vpop.f32.mrf.mxu0
      %v1825 = vpop.f32.mrf.mxu0
      %v1826 = vadd.f32 0.0, %v1825
      %v1827 = vpop.f32.mrf.mxu0
      %1828 = vmatprep.mubr.bf16.mxu0 0
      %1829 = vmatmul.mubr.bf16.gmra.mxu0 %v1409
      %v1830 = vpop.f32.mrf.mxu0
      %v1831 = vadd.f32 0.0, %v1830
      %v1832 = vpop.f32.mrf.mxu0
      %v1833 = vpop.f32.mrf.mxu0
      %v1834 = vadd.f32 0.0, %v1833
      %v1835 = vpop.f32.mrf.mxu0
      %1836 = vmatprep.mubr.bf16.mxu0 0
      %1837 = vmatmul.mubr.bf16.gmra.mxu0 %v1410
      %v1838 = vpop.f32.mrf.mxu0
      %v1839 = vadd.f32 0.0, %v1838
      %v1840 = vpop.f32.mrf.mxu0
      %v1841 = vpop.f32.mrf.mxu0
      %v1842 = vadd.f32 0.0, %v1841
      %v1843 = vpop.f32.mrf.mxu0
      %1844 = vmatprep.mubr.bf16.mxu0 0
      %1845 = vmatmul.mubr.bf16.gmra.mxu0 %v1411
      %v1846 = vpop.f32.mrf.mxu0
      %v1847 = vadd.f32 0.0, %v1846
      %v1848 = vpop.f32.mrf.mxu0
      %v1849 = vpop.f32.mrf.mxu0
      %v1850 = vadd.f32 0.0, %v1849
      %v1851 = vpop.f32.mrf.mxu0
      %1852 = vmatprep.mubr.bf16.mxu0 0
      %1853 = vmatmul.mubr.bf16.gmra.mxu0 %v1412
      %v1854 = vpop.f32.mrf.mxu0
      %v1855 = vadd.f32 0.0, %v1854
      %v1856 = vpop.f32.mrf.mxu0
      %v1857 = vpop.f32.mrf.mxu0
      %v1858 = vadd.f32 0.0, %v1857
      %v1859 = vpop.f32.mrf.mxu0
      %1860 = vmatprep.mubr.bf16.mxu0 0
      %1861 = vmatmul.mubr.bf16.gmra.mxu0 %v1413
      %v1862 = vpop.f32.mrf.mxu0
      %v1863 = vadd.f32 0.0, %v1862
      %v1864 = vpop.f32.mrf.mxu0
      %v1865 = vpop.f32.mrf.mxu0
      %v1866 = vadd.f32 0.0, %v1865
      %v1867 = vpop.f32.mrf.mxu0
      %1868 = vmatprep.mubr.bf16.mxu0 0
      %1869 = vmatmul.mubr.bf16.gmra.mxu0 %v1414
      %v1870 = vpop.f32.mrf.mxu0
      %v1871 = vadd.f32 0.0, %v1870
      %v1872 = vpop.f32.mrf.mxu0
      %v1873 = vpop.f32.mrf.mxu0
      %v1874 = vadd.f32 0.0, %v1873
      %v1875 = vpop.f32.mrf.mxu0
      %1876 = vmatprep.mubr.bf16.mxu0 0
      %1877 = vmatmul.mubr.bf16.gmra.mxu0 %v1415
      %v1878 = vpop.f32.mrf.mxu0
      %v1879 = vadd.f32 0.0, %v1878
      %v1880 = vpop.f32.mrf.mxu0
      %v1881 = vpop.f32.mrf.mxu0
      %v1882 = vadd.f32 0.0, %v1881
      %v1883 = vpop.f32.mrf.mxu0
      %1884 = vmatprep.mubr.bf16.mxu0 0
      %1885 = vmatmul.mubr.bf16.gmra.mxu0 %v1416
      %v1886 = vpop.f32.mrf.mxu0
      %v1887 = vadd.f32 0.0, %v1886
      %v1888 = vpop.f32.mrf.mxu0
      %v1889 = vpop.f32.mrf.mxu0
      %v1890 = vadd.f32 0.0, %v1889
      %v1891 = vpop.f32.mrf.mxu0
      %1892 = vmatprep.mubr.bf16.mxu0 0
      %1893 = vmatmul.mubr.bf16.gmra.mxu0 %v1417
      %v1894 = vpop.f32.mrf.mxu0
      %v1895 = vadd.f32 0.0, %v1894
      %v1896 = vpop.f32.mrf.mxu0
      %v1897 = vpop.f32.mrf.mxu0
      %v1898 = vadd.f32 0.0, %v1897
      %v1899 = vpop.f32.mrf.mxu0
      %1900 = vmatprep.mubr.bf16.mxu0 0
      %1901 = vmatmul.mubr.bf16.gmra.mxu0 %v1418
      %v1902 = vpop.f32.mrf.mxu0
      %v1903 = vadd.f32 0.0, %v1902
      %v1904 = vpop.f32.mrf.mxu0
      %v1905 = vpop.f32.mrf.mxu0
      %v1906 = vadd.f32 0.0, %v1905
      %v1907 = vpop.f32.mrf.mxu0
      %1908 = vmatprep.mubr.bf16.mxu0 0
      %1909 = vmatmul.mubr.bf16.gmra.mxu0 %v1419
      %v1910 = vpop.f32.mrf.mxu0
      %v1911 = vadd.f32 0.0, %v1910
      %v1912 = vpop.f32.mrf.mxu0
      %v1913 = vpop.f32.mrf.mxu0
      %v1914 = vadd.f32 0.0, %v1913
      %v1915 = vpop.f32.mrf.mxu0
      %1916 = vmatprep.mubr.bf16.mxu0 0
      %1917 = vmatmul.mubr.bf16.gmra.mxu0 %v1420
      %v1918 = vpop.f32.mrf.mxu0
      %v1919 = vadd.f32 0.0, %v1918
      %v1920 = vpop.f32.mrf.mxu0
      %v1921 = vpop.f32.mrf.mxu0
      %v1922 = vadd.f32 0.0, %v1921
      %v1923 = vpop.f32.mrf.mxu0
      %1924 = vmatprep.mubr.bf16.mxu0 0
      %1925 = vmatmul.mubr.bf16.gmra.mxu0 %v1421
      %v1926 = vpop.f32.mrf.mxu0
      %v1927 = vadd.f32 0.0, %v1926
      %v1928 = vpop.f32.mrf.mxu0
      %v1929 = vpop.f32.mrf.mxu0
      %v1930 = vadd.f32 0.0, %v1929
      %v1931 = vpop.f32.mrf.mxu0
      %1932 = vmatprep.mubr.bf16.mxu0 0
      %1933 = vmatmul.mubr.bf16.gmra.mxu0 %v1422
      %v1934 = vpop.f32.mrf.mxu0
      %v1935 = vadd.f32 0.0, %v1934
      %v1936 = vpop.f32.mrf.mxu0
      %v1937 = vpop.f32.mrf.mxu0
      %v1938 = vadd.f32 0.0, %v1937
      %v1939 = vpop.f32.mrf.mxu0
      %1940 = vmatprep.mubr.bf16.mxu0 0
      %1941 = vmatmul.mubr.bf16.gmra.mxu0 %v1423
      %v1942 = vpop.f32.mrf.mxu0
      %v1943 = vadd.f32 0.0, %v1942
      %v1944 = vpop.f32.mrf.mxu0
      %v1945 = vpop.f32.mrf.mxu0
      %v1946 = vadd.f32 0.0, %v1945
      %v1947 = vpop.f32.mrf.mxu0
      %1948 = vmatprep.mubr.bf16.mxu0 0
      %1949 = vmatmul.mubr.bf16.gmra.mxu0 %v1424
      %v1950 = vpop.f32.mrf.mxu0
      %v1951 = vadd.f32 0.0, %v1950
      %v1952 = vpop.f32.mrf.mxu0
      %v1953 = vpop.f32.mrf.mxu0
      %v1954 = vadd.f32 0.0, %v1953
      %v1955 = vpop.f32.mrf.mxu0
      %1956 = vmatprep.mubr.bf16.mxu0 0
      %1957 = vmatmul.mubr.bf16.gmra.mxu0 %v1425
      %v1958 = vpop.f32.mrf.mxu0
      %v1959 = vadd.f32 0.0, %v1958
      %v1960 = vpop.f32.mrf.mxu0
      %v1961 = vpop.f32.mrf.mxu0
      %v1962 = vadd.f32 0.0, %v1961
      %v1963 = vpop.f32.mrf.mxu0
      %1964 = vmatprep.mubr.bf16.mxu0 0
      %1965 = vmatmul.mubr.bf16.gmra.mxu0 %v1426
      %v1966 = vpop.f32.mrf.mxu0
      %v1967 = vadd.f32 0.0, %v1966
      %v1968 = vpop.f32.mrf.mxu0
      %v1969 = vpop.f32.mrf.mxu0
      %v1970 = vadd.f32 0.0, %v1969
      %v1971 = vpop.f32.mrf.mxu0
      %1972 = vmatprep.mubr.bf16.mxu0 0
      %1973 = vmatmul.mubr.bf16.gmra.mxu0 %v1427
      %v1974 = vpop.f32.mrf.mxu0
      %v1975 = vadd.f32 0.0, %v1974
      %v1976 = vpop.f32.mrf.mxu0
      %v1977 = vpop.f32.mrf.mxu0
      %v1978 = vadd.f32 0.0, %v1977
      %v1979 = vpop.f32.mrf.mxu0
      %1980 = vmatprep.mubr.bf16.mxu0 0
      %1981 = vmatmul.mubr.bf16.gmra.mxu0 %v1428
      %v1982 = vpop.f32.mrf.mxu0
      %v1983 = vadd.f32 0.0, %v1982
      %v1984 = vpop.f32.mrf.mxu0
      %v1985 = vpop.f32.mrf.mxu0
      %v1986 = vadd.f32 0.0, %v1985
      %v1987 = vpop.f32.mrf.mxu0
      %1988 = vmatprep.mubr.bf16.mxu0 0
      %1989 = vmatmul.mubr.bf16.gmra.mxu0 %v1429
      %v1990 = vpop.f32.mrf.mxu0
      %v1991 = vadd.f32 0.0, %v1990
      %v1992 = vpop.f32.mrf.mxu0
      %v1993 = vpop.f32.mrf.mxu0
      %v1994 = vadd.f32 0.0, %v1993
      %v1995 = vpop.f32.mrf.mxu0
      %1996 = vmatprep.mubr.bf16.mxu0 0
      %1997 = vmatmul.mubr.bf16.gmra.mxu0 %v1430
      %v1998 = vpop.f32.mrf.mxu0
      %v1999 = vadd.f32 0.0, %v1998
      %v2000 = vpop.f32.mrf.mxu0
      %v2001 = vpop.f32.mrf.mxu0
      %v2002 = vadd.f32 0.0, %v2001
      %v2003 = vpop.f32.mrf.mxu0
      %2004 = vmatprep.mubr.bf16.mxu0 0
      %2005 = vmatmul.mubr.bf16.gmra.mxu0 %v1431
      %v2006 = vpop.f32.mrf.mxu0
      %v2007 = vadd.f32 0.0, %v2006
      %v2008 = vpop.f32.mrf.mxu0
      %v2009 = vpop.f32.mrf.mxu0
      %v2010 = vadd.f32 0.0, %v2009
      %v2011 = vpop.f32.mrf.mxu0
      %2012 = vmatprep.mubr.bf16.mxu0 0
      %2013 = vmatmul.mubr.bf16.gmra.mxu0 %v1432
      %v2014 = vpop.f32.mrf.mxu0
      %v2015 = vadd.f32 0.0, %v2014
      %v2016 = vpop.f32.mrf.mxu0
      %v2017 = vpop.f32.mrf.mxu0
      %v2018 = vadd.f32 0.0, %v2017
      %v2019 = vpop.f32.mrf.mxu0
      %2020 = vmatprep.mubr.bf16.mxu0 0
      %2021 = vmatmul.mubr.bf16.gmra.mxu0 %v1433
      %v2022 = vpop.f32.mrf.mxu0
      %v2023 = vadd.f32 0.0, %v2022
      %v2024 = vpop.f32.mrf.mxu0
      %v2025 = vpop.f32.mrf.mxu0
      %v2026 = vadd.f32 0.0, %v2025
      %v2027 = vpop.f32.mrf.mxu0
      %2028 = vmatprep.mubr.bf16.mxu0 0
      %2029 = vmatmul.mubr.bf16.gmra.mxu0 %v1434
      %v2030 = vpop.f32.mrf.mxu0
      %v2031 = vadd.f32 0.0, %v2030
      %v2032 = vpop.f32.mrf.mxu0
      %v2033 = vpop.f32.mrf.mxu0
      %v2034 = vadd.f32 0.0, %v2033
      %v2035 = vpop.f32.mrf.mxu0
      %2036 = vmatprep.mubr.bf16.mxu0 0
      %2037 = vmatmul.mubr.bf16.gmra.mxu0 %v1435
      %v2038 = vpop.f32.mrf.mxu0
      %v2039 = vadd.f32 0.0, %v2038
      %v2040 = vpop.f32.mrf.mxu0
      %v2041 = vpop.f32.mrf.mxu0
      %v2042 = vadd.f32 0.0, %v2041
      %v2043 = vpop.f32.mrf.mxu0
      %2044 = vdwg.mxu0
      %v2045 = vld [vmem:[#allocation2] sm:$0xff]
      %v2046 = vld [vmem:[#allocation2 + $0x8] sm:$0xff]
      %v2047 = vld [vmem:[#allocation2 + $0x10] sm:$0xff]
      %v2048 = vld [vmem:[#allocation2 + $0x18] sm:$0xff]
      %v2049 = vld [vmem:[#allocation2 + $0x20] sm:$0xff]
      %v2050 = vld [vmem:[#allocation2 + $0x28] sm:$0xff]
      %v2051 = vld [vmem:[#allocation2 + $0x30] sm:$0xff]
      %v2052 = vld [vmem:[#allocation2 + $0x38] sm:$0xff]
      %v2053 = vld [vmem:[#allocation2 + $0x40] sm:$0xff]
      %v2054 = vld [vmem:[#allocation2 + $0x48] sm:$0xff]
      %v2055 = vld [vmem:[#allocation2 + $0x50] sm:$0xff]
      %v2056 = vld [vmem:[#allocation2 + $0x58] sm:$0xff]
      %v2057 = vld [vmem:[#allocation2 + $0x60] sm:$0xff]
      %v2058 = vld [vmem:[#allocation2 + $0x68] sm:$0xff]
      %v2059 = vld [vmem:[#allocation2 + $0x70] sm:$0xff]
      %v2060 = vld [vmem:[#allocation2 + $0x78] sm:$0xff]
      %v2061 = vld [vmem:[#allocation2 + $0x80] sm:$0xff]
      %v2062 = vld [vmem:[#allocation2 + $0x88] sm:$0xff]
      %v2063 = vld [vmem:[#allocation2 + $0x90] sm:$0xff]
      %v2064 = vld [vmem:[#allocation2 + $0x98] sm:$0xff]
      %v2065 = vld [vmem:[#allocation2 + $0xa0] sm:$0xff]
      %v2066 = vld [vmem:[#allocation2 + $0xa8] sm:$0xff]
      %v2067 = vld [vmem:[#allocation2 + $0xb0] sm:$0xff]
      %v2068 = vld [vmem:[#allocation2 + $0xb8] sm:$0xff]
      %v2069 = vld [vmem:[#allocation2 + $0xc0] sm:$0xff]
      %v2070 = vld [vmem:[#allocation2 + $0xc8] sm:$0xff]
      %v2071 = vld [vmem:[#allocation2 + $0xd0] sm:$0xff]
      %v2072 = vld [vmem:[#allocation2 + $0xd8] sm:$0xff]
      %v2073 = vld [vmem:[#allocation2 + $0xe0] sm:$0xff]
      %v2074 = vld [vmem:[#allocation2 + $0xe8] sm:$0xff]
      %v2075 = vld [vmem:[#allocation2 + $0xf0] sm:$0xff]
      %v2076 = vld [vmem:[#allocation2 + $0xf8] sm:$0xff]
      %v2077 = vld [vmem:[#allocation2 + $0x100] sm:$0xff]
      %v2078 = vld [vmem:[#allocation2 + $0x108] sm:$0xff]
      %v2079 = vld [vmem:[#allocation2 + $0x110] sm:$0xff]
      %v2080 = vld [vmem:[#allocation2 + $0x118] sm:$0xff]
      %v2081 = vld [vmem:[#allocation2 + $0x120] sm:$0xff]
      %v2082 = vld [vmem:[#allocation2 + $0x128] sm:$0xff]
      %v2083 = vld [vmem:[#allocation2 + $0x130] sm:$0xff]
      %v2084 = vld [vmem:[#allocation2 + $0x138] sm:$0xff]
      %v2085 = vld [vmem:[#allocation2 + $0x140] sm:$0xff]
      %v2086 = vld [vmem:[#allocation2 + $0x148] sm:$0xff]
      %v2087 = vld [vmem:[#allocation2 + $0x150] sm:$0xff]
      %v2088 = vld [vmem:[#allocation2 + $0x158] sm:$0xff]
      %v2089 = vld [vmem:[#allocation2 + $0x160] sm:$0xff]
      %v2090 = vld [vmem:[#allocation2 + $0x168] sm:$0xff]
      %v2091 = vld [vmem:[#allocation2 + $0x170] sm:$0xff]
      %v2092 = vld [vmem:[#allocation2 + $0x178] sm:$0xff]
      %v2093 = vld [vmem:[#allocation2 + $0x180] sm:$0xff]
      %v2094 = vld [vmem:[#allocation2 + $0x188] sm:$0xff]
      %v2095 = vld [vmem:[#allocation2 + $0x190] sm:$0xff]
      %v2096 = vld [vmem:[#allocation2 + $0x198] sm:$0xff]
      %v2097 = vld [vmem:[#allocation2 + $0x1a0] sm:$0xff]
      %v2098 = vld [vmem:[#allocation2 + $0x1a8] sm:$0xff]
      %v2099 = vld [vmem:[#allocation2 + $0x1b0] sm:$0xff]
      %v2100 = vld [vmem:[#allocation2 + $0x1b8] sm:$0xff]
      %v2101 = vld [vmem:[#allocation2 + $0x1c0] sm:$0xff]
      %v2102 = vld [vmem:[#allocation2 + $0x1c8] sm:$0xff]
      %v2103 = vld [vmem:[#allocation2 + $0x1d0] sm:$0xff]
      %v2104 = vld [vmem:[#allocation2 + $0x1d8] sm:$0xff]
      %v2105 = vld [vmem:[#allocation2 + $0x1e0] sm:$0xff]
      %v2106 = vld [vmem:[#allocation2 + $0x1e8] sm:$0xff]
      %v2107 = vld [vmem:[#allocation2 + $0x1f0] sm:$0xff]
      %v2108 = vld [vmem:[#allocation2 + $0x1f8] sm:$0xff]
      %v2109 = vld [vmem:[#allocation2 + $0x200] sm:$0xff]
      %v2110 = vld [vmem:[#allocation2 + $0x208] sm:$0xff]
      %v2111 = vld [vmem:[#allocation2 + $0x210] sm:$0xff]
      %v2112 = vld [vmem:[#allocation2 + $0x218] sm:$0xff]
      %v2113 = vld [vmem:[#allocation2 + $0x220] sm:$0xff]
      %v2114 = vld [vmem:[#allocation2 + $0x228] sm:$0xff]
      %v2115 = vld [vmem:[#allocation2 + $0x230] sm:$0xff]
      %v2116 = vld [vmem:[#allocation2 + $0x238] sm:$0xff]
      %v2117 = vld [vmem:[#allocation2 + $0x240] sm:$0xff]
      %v2118 = vld [vmem:[#allocation2 + $0x248] sm:$0xff]
      %v2119 = vld [vmem:[#allocation2 + $0x250] sm:$0xff]
      %v2120 = vld [vmem:[#allocation2 + $0x258] sm:$0xff]
      %v2121 = vld [vmem:[#allocation2 + $0x260] sm:$0xff]
      %v2122 = vld [vmem:[#allocation2 + $0x268] sm:$0xff]
      %v2123 = vld [vmem:[#allocation2 + $0x270] sm:$0xff]
      %v2124 = vld [vmem:[#allocation2 + $0x278] sm:$0xff]
      %v2125 = vld [vmem:[#allocation2 + $0x280] sm:$0xff]
      %v2126 = vld [vmem:[#allocation2 + $0x288] sm:$0xff]
      %v2127 = vld [vmem:[#allocation2 + $0x290] sm:$0xff]
      %v2128 = vld [vmem:[#allocation2 + $0x298] sm:$0xff]
      %v2129 = vld [vmem:[#allocation2 + $0x2a0] sm:$0xff]
      %v2130 = vld [vmem:[#allocation2 + $0x2a8] sm:$0xff]
      %v2131 = vld [vmem:[#allocation2 + $0x2b0] sm:$0xff]
      %v2132 = vld [vmem:[#allocation2 + $0x2b8] sm:$0xff]
      %v2133 = vld [vmem:[#allocation2 + $0x2c0] sm:$0xff]
      %v2134 = vld [vmem:[#allocation2 + $0x2c8] sm:$0xff]
      %v2135 = vld [vmem:[#allocation2 + $0x2d0] sm:$0xff]
      %v2136 = vld [vmem:[#allocation2 + $0x2d8] sm:$0xff]
      %v2137 = vld [vmem:[#allocation2 + $0x2e0] sm:$0xff]
      %v2138 = vld [vmem:[#allocation2 + $0x2e8] sm:$0xff]
      %v2139 = vld [vmem:[#allocation2 + $0x2f0] sm:$0xff]
      %v2140 = vld [vmem:[#allocation2 + $0x2f8] sm:$0xff]
      %v2141 = vld [vmem:[#allocation2 + $0x300] sm:$0xff]
      %v2142 = vld [vmem:[#allocation2 + $0x308] sm:$0xff]
      %v2143 = vld [vmem:[#allocation2 + $0x310] sm:$0xff]
      %v2144 = vld [vmem:[#allocation2 + $0x318] sm:$0xff]
      %v2145 = vld [vmem:[#allocation2 + $0x320] sm:$0xff]
      %v2146 = vld [vmem:[#allocation2 + $0x328] sm:$0xff]
      %v2147 = vld [vmem:[#allocation2 + $0x330] sm:$0xff]
      %v2148 = vld [vmem:[#allocation2 + $0x338] sm:$0xff]
      %v2149 = vld [vmem:[#allocation2 + $0x340] sm:$0xff]
      %v2150 = vld [vmem:[#allocation2 + $0x348] sm:$0xff]
      %v2151 = vld [vmem:[#allocation2 + $0x350] sm:$0xff]
      %v2152 = vld [vmem:[#allocation2 + $0x358] sm:$0xff]
      %v2153 = vld [vmem:[#allocation2 + $0x360] sm:$0xff]
      %v2154 = vld [vmem:[#allocation2 + $0x368] sm:$0xff]
      %v2155 = vld [vmem:[#allocation2 + $0x370] sm:$0xff]
      %v2156 = vld [vmem:[#allocation2 + $0x378] sm:$0xff]
      %v2157 = vld [vmem:[#allocation2 + $0x380] sm:$0xff]
      %v2158 = vld [vmem:[#allocation2 + $0x388] sm:$0xff]
      %v2159 = vld [vmem:[#allocation2 + $0x390] sm:$0xff]
      %v2160 = vld [vmem:[#allocation2 + $0x398] sm:$0xff]
      %v2161 = vld [vmem:[#allocation2 + $0x3a0] sm:$0xff]
      %v2162 = vld [vmem:[#allocation2 + $0x3a8] sm:$0xff]
      %v2163 = vld [vmem:[#allocation2 + $0x3b0] sm:$0xff]
      %v2164 = vld [vmem:[#allocation2 + $0x3b8] sm:$0xff]
      %v2165 = vld [vmem:[#allocation2 + $0x3c0] sm:$0xff]
      %v2166 = vld [vmem:[#allocation2 + $0x3c8] sm:$0xff]
      %v2167 = vld [vmem:[#allocation2 + $0x3d0] sm:$0xff]
      %v2168 = vld [vmem:[#allocation2 + $0x3d8] sm:$0xff]
      %v2169 = vld [vmem:[#allocation2 + $0x3e0] sm:$0xff]
      %v2170 = vld [vmem:[#allocation2 + $0x3e8] sm:$0xff]
      %v2171 = vld [vmem:[#allocation2 + $0x3f0] sm:$0xff]
      %v2172 = vld [vmem:[#allocation2 + $0x3f8] sm:$0xff]
      %v2173 = vmax.f32 %v2045, %v1535
      %v2174 = vmax.f32 %v2046, %v1538
      %v2175 = vmax.f32 %v2047, %v1543
      %v2176 = vmax.f32 %v2048, %v1546
      %v2177 = vmax.f32 %v2049, %v1551
      %v2178 = vmax.f32 %v2050, %v1554
      %v2179 = vmax.f32 %v2051, %v1559
      %v2180 = vmax.f32 %v2052, %v1562
      %v2181 = vmax.f32 %v2053, %v1567
      %v2182 = vmax.f32 %v2054, %v1570
      %v2183 = vmax.f32 %v2055, %v1575
      %v2184 = vmax.f32 %v2056, %v1578
      %v2185 = vmax.f32 %v2057, %v1583
      %v2186 = vmax.f32 %v2058, %v1586
      %v2187 = vmax.f32 %v2059, %v1591
      %v2188 = vmax.f32 %v2060, %v1594
      %v2189 = vmax.f32 %v2061, %v1599
      %v2190 = vmax.f32 %v2062, %v1602
      %v2191 = vmax.f32 %v2063, %v1607
      %v2192 = vmax.f32 %v2064, %v1610
      %v2193 = vmax.f32 %v2065, %v1615
      %v2194 = vmax.f32 %v2066, %v1618
      %v2195 = vmax.f32 %v2067, %v1623
      %v2196 = vmax.f32 %v2068, %v1626
      %v2197 = vmax.f32 %v2069, %v1631
      %v2198 = vmax.f32 %v2070, %v1634
      %v2199 = vmax.f32 %v2071, %v1639
      %v2200 = vmax.f32 %v2072, %v1642
      %v2201 = vmax.f32 %v2073, %v1647
      %v2202 = vmax.f32 %v2074, %v1650
      %v2203 = vmax.f32 %v2075, %v1655
      %v2204 = vmax.f32 %v2076, %v1658
      %v2205 = vmax.f32 %v2077, %v1663
      %v2206 = vmax.f32 %v2078, %v1666
      %v2207 = vmax.f32 %v2079, %v1671
      %v2208 = vmax.f32 %v2080, %v1674
      %v2209 = vmax.f32 %v2081, %v1679
      %v2210 = vmax.f32 %v2082, %v1682
      %v2211 = vmax.f32 %v2083, %v1687
      %v2212 = vmax.f32 %v2084, %v1690
      %v2213 = vmax.f32 %v2085, %v1695
      %v2214 = vmax.f32 %v2086, %v1698
      %v2215 = vmax.f32 %v2087, %v1703
      %v2216 = vmax.f32 %v2088, %v1706
      %v2217 = vmax.f32 %v2089, %v1711
      %v2218 = vmax.f32 %v2090, %v1714
      %v2219 = vmax.f32 %v2091, %v1719
      %v2220 = vmax.f32 %v2092, %v1722
      %v2221 = vmax.f32 %v2093, %v1727
      %v2222 = vmax.f32 %v2094, %v1730
      %v2223 = vmax.f32 %v2095, %v1735
      %v2224 = vmax.f32 %v2096, %v1738
      %v2225 = vmax.f32 %v2097, %v1743
      %v2226 = vmax.f32 %v2098, %v1746
      %v2227 = vmax.f32 %v2099, %v1751
      %v2228 = vmax.f32 %v2100, %v1754
      %v2229 = vmax.f32 %v2101, %v1759
      %v2230 = vmax.f32 %v2102, %v1762
      %v2231 = vmax.f32 %v2103, %v1767
      %v2232 = vmax.f32 %v2104, %v1770
      %v2233 = vmax.f32 %v2105, %v1775
      %v2234 = vmax.f32 %v2106, %v1778
      %v2235 = vmax.f32 %v2107, %v1783
      %v2236 = vmax.f32 %v2108, %v1786
      %v2237 = vmax.f32 %v2109, %v1791
      %v2238 = vmax.f32 %v2110, %v1794
      %v2239 = vmax.f32 %v2111, %v1799
      %v2240 = vmax.f32 %v2112, %v1802
      %v2241 = vmax.f32 %v2113, %v1807
      %v2242 = vmax.f32 %v2114, %v1810
      %v2243 = vmax.f32 %v2115, %v1815
      %v2244 = vmax.f32 %v2116, %v1818
      %v2245 = vmax.f32 %v2117, %v1823
      %v2246 = vmax.f32 %v2118, %v1826
      %v2247 = vmax.f32 %v2119, %v1831
      %v2248 = vmax.f32 %v2120, %v1834
      %v2249 = vmax.f32 %v2121, %v1839
      %v2250 = vmax.f32 %v2122, %v1842
      %v2251 = vmax.f32 %v2123, %v1847
      %v2252 = vmax.f32 %v2124, %v1850
      %v2253 = vmax.f32 %v2125, %v1855
      %v2254 = vmax.f32 %v2126, %v1858
      %v2255 = vmax.f32 %v2127, %v1863
      %v2256 = vmax.f32 %v2128, %v1866
      %v2257 = vmax.f32 %v2129, %v1871
      %v2258 = vmax.f32 %v2130, %v1874
      %v2259 = vmax.f32 %v2131, %v1879
      %v2260 = vmax.f32 %v2132, %v1882
      %v2261 = vmax.f32 %v2133, %v1887
      %v2262 = vmax.f32 %v2134, %v1890
      %v2263 = vmax.f32 %v2135, %v1895
      %v2264 = vmax.f32 %v2136, %v1898
      %v2265 = vmax.f32 %v2137, %v1903
      %v2266 = vmax.f32 %v2138, %v1906
      %v2267 = vmax.f32 %v2139, %v1911
      %v2268 = vmax.f32 %v2140, %v1914
      %v2269 = vmax.f32 %v2141, %v1919
      %v2270 = vmax.f32 %v2142, %v1922
      %v2271 = vmax.f32 %v2143, %v1927
      %v2272 = vmax.f32 %v2144, %v1930
      %v2273 = vmax.f32 %v2145, %v1935
      %v2274 = vmax.f32 %v2146, %v1938
      %v2275 = vmax.f32 %v2147, %v1943
      %v2276 = vmax.f32 %v2148, %v1946
      %v2277 = vmax.f32 %v2149, %v1951
      %v2278 = vmax.f32 %v2150, %v1954
      %v2279 = vmax.f32 %v2151, %v1959
      %v2280 = vmax.f32 %v2152, %v1962
      %v2281 = vmax.f32 %v2153, %v1967
      %v2282 = vmax.f32 %v2154, %v1970
      %v2283 = vmax.f32 %v2155, %v1975
      %v2284 = vmax.f32 %v2156, %v1978
      %v2285 = vmax.f32 %v2157, %v1983
      %v2286 = vmax.f32 %v2158, %v1986
      %v2287 = vmax.f32 %v2159, %v1991
      %v2288 = vmax.f32 %v2160, %v1994
      %v2289 = vmax.f32 %v2161, %v1999
      %v2290 = vmax.f32 %v2162, %v2002
      %v2291 = vmax.f32 %v2163, %v2007
      %v2292 = vmax.f32 %v2164, %v2010
      %v2293 = vmax.f32 %v2165, %v2015
      %v2294 = vmax.f32 %v2166, %v2018
      %v2295 = vmax.f32 %v2167, %v2023
      %v2296 = vmax.f32 %v2168, %v2026
      %v2297 = vmax.f32 %v2169, %v2031
      %v2298 = vmax.f32 %v2170, %v2034
      %v2299 = vmax.f32 %v2171, %v2039
      %v2300 = vmax.f32 %v2172, %v2042
      %vm2301 = vcmask 130048
      %2302 = vst.msk [vmem:[#allocation2] sm:$0xff] %vm2301, %v2173
      %2303 = vst.msk [vmem:[#allocation2 + $0x8] sm:$0xff] %vm2301, %v2174
      %2304 = vst.msk [vmem:[#allocation2 + $0x10] sm:$0xff] %vm2301, %v2175
      %2305 = vst.msk [vmem:[#allocation2 + $0x18] sm:$0xff] %vm2301, %v2176
      %2306 = vst.msk [vmem:[#allocation2 + $0x20] sm:$0xff] %vm2301, %v2177
      %2307 = vst.msk [vmem:[#allocation2 + $0x28] sm:$0xff] %vm2301, %v2178
      %2308 = vst.msk [vmem:[#allocation2 + $0x30] sm:$0xff] %vm2301, %v2179
      %2309 = vst.msk [vmem:[#allocation2 + $0x38] sm:$0xff] %vm2301, %v2180
      %2310 = vst.msk [vmem:[#allocation2 + $0x40] sm:$0xff] %vm2301, %v2181
      %2311 = vst.msk [vmem:[#allocation2 + $0x48] sm:$0xff] %vm2301, %v2182
      %2312 = vst.msk [vmem:[#allocation2 + $0x50] sm:$0xff] %vm2301, %v2183
      %2313 = vst.msk [vmem:[#allocation2 + $0x58] sm:$0xff] %vm2301, %v2184
      %2314 = vst.msk [vmem:[#allocation2 + $0x60] sm:$0xff] %vm2301, %v2185
      %2315 = vst.msk [vmem:[#allocation2 + $0x68] sm:$0xff] %vm2301, %v2186
      %2316 = vst.msk [vmem:[#allocation2 + $0x70] sm:$0xff] %vm2301, %v2187
      %2317 = vst.msk [vmem:[#allocation2 + $0x78] sm:$0xff] %vm2301, %v2188
      %2318 = vst.msk [vmem:[#allocation2 + $0x80] sm:$0xff] %vm2301, %v2189
      %2319 = vst.msk [vmem:[#allocation2 + $0x88] sm:$0xff] %vm2301, %v2190
      %2320 = vst.msk [vmem:[#allocation2 + $0x90] sm:$0xff] %vm2301, %v2191
      %2321 = vst.msk [vmem:[#allocation2 + $0x98] sm:$0xff] %vm2301, %v2192
      %2322 = vst.msk [vmem:[#allocation2 + $0xa0] sm:$0xff] %vm2301, %v2193
      %2323 = vst.msk [vmem:[#allocation2 + $0xa8] sm:$0xff] %vm2301, %v2194
      %2324 = vst.msk [vmem:[#allocation2 + $0xb0] sm:$0xff] %vm2301, %v2195
      %2325 = vst.msk [vmem:[#allocation2 + $0xb8] sm:$0xff] %vm2301, %v2196
      %2326 = vst.msk [vmem:[#allocation2 + $0xc0] sm:$0xff] %vm2301, %v2197
      %2327 = vst.msk [vmem:[#allocation2 + $0xc8] sm:$0xff] %vm2301, %v2198
      %2328 = vst.msk [vmem:[#allocation2 + $0xd0] sm:$0xff] %vm2301, %v2199
      %2329 = vst.msk [vmem:[#allocation2 + $0xd8] sm:$0xff] %vm2301, %v2200
      %2330 = vst.msk [vmem:[#allocation2 + $0xe0] sm:$0xff] %vm2301, %v2201
      %2331 = vst.msk [vmem:[#allocation2 + $0xe8] sm:$0xff] %vm2301, %v2202
      %2332 = vst.msk [vmem:[#allocation2 + $0xf0] sm:$0xff] %vm2301, %v2203
      %2333 = vst.msk [vmem:[#allocation2 + $0xf8] sm:$0xff] %vm2301, %v2204
      %2334 = vst.msk [vmem:[#allocation2 + $0x100] sm:$0xff] %vm2301, %v2205
      %2335 = vst.msk [vmem:[#allocation2 + $0x108] sm:$0xff] %vm2301, %v2206
      %2336 = vst.msk [vmem:[#allocation2 + $0x110] sm:$0xff] %vm2301, %v2207
      %2337 = vst.msk [vmem:[#allocation2 + $0x118] sm:$0xff] %vm2301, %v2208
      %2338 = vst.msk [vmem:[#allocation2 + $0x120] sm:$0xff] %vm2301, %v2209
      %2339 = vst.msk [vmem:[#allocation2 + $0x128] sm:$0xff] %vm2301, %v2210
      %2340 = vst.msk [vmem:[#allocation2 + $0x130] sm:$0xff] %vm2301, %v2211
      %2341 = vst.msk [vmem:[#allocation2 + $0x138] sm:$0xff] %vm2301, %v2212
      %2342 = vst.msk [vmem:[#allocation2 + $0x140] sm:$0xff] %vm2301, %v2213
      %2343 = vst.msk [vmem:[#allocation2 + $0x148] sm:$0xff] %vm2301, %v2214
      %2344 = vst.msk [vmem:[#allocation2 + $0x150] sm:$0xff] %vm2301, %v2215
      %2345 = vst.msk [vmem:[#allocation2 + $0x158] sm:$0xff] %vm2301, %v2216
      %2346 = vst.msk [vmem:[#allocation2 + $0x160] sm:$0xff] %vm2301, %v2217
      %2347 = vst.msk [vmem:[#allocation2 + $0x168] sm:$0xff] %vm2301, %v2218
      %2348 = vst.msk [vmem:[#allocation2 + $0x170] sm:$0xff] %vm2301, %v2219
      %2349 = vst.msk [vmem:[#allocation2 + $0x178] sm:$0xff] %vm2301, %v2220
      %2350 = vst.msk [vmem:[#allocation2 + $0x180] sm:$0xff] %vm2301, %v2221
      %2351 = vst.msk [vmem:[#allocation2 + $0x188] sm:$0xff] %vm2301, %v2222
      %2352 = vst.msk [vmem:[#allocation2 + $0x190] sm:$0xff] %vm2301, %v2223
      %2353 = vst.msk [vmem:[#allocation2 + $0x198] sm:$0xff] %vm2301, %v2224
      %2354 = vst.msk [vmem:[#allocation2 + $0x1a0] sm:$0xff] %vm2301, %v2225
      %2355 = vst.msk [vmem:[#allocation2 + $0x1a8] sm:$0xff] %vm2301, %v2226
      %2356 = vst.msk [vmem:[#allocation2 + $0x1b0] sm:$0xff] %vm2301, %v2227
      %2357 = vst.msk [vmem:[#allocation2 + $0x1b8] sm:$0xff] %vm2301, %v2228
      %2358 = vst.msk [vmem:[#allocation2 + $0x1c0] sm:$0xff] %vm2301, %v2229
      %2359 = vst.msk [vmem:[#allocation2 + $0x1c8] sm:$0xff] %vm2301, %v2230
      %2360 = vst.msk [vmem:[#allocation2 + $0x1d0] sm:$0xff] %vm2301, %v2231
      %2361 = vst.msk [vmem:[#allocation2 + $0x1d8] sm:$0xff] %vm2301, %v2232
      %2362 = vst.msk [vmem:[#allocation2 + $0x1e0] sm:$0xff] %vm2301, %v2233
      %2363 = vst.msk [vmem:[#allocation2 + $0x1e8] sm:$0xff] %vm2301, %v2234
      %2364 = vst.msk [vmem:[#allocation2 + $0x1f0] sm:$0xff] %vm2301, %v2235
      %2365 = vst.msk [vmem:[#allocation2 + $0x1f8] sm:$0xff] %vm2301, %v2236
      %2366 = vst.msk [vmem:[#allocation2 + $0x200] sm:$0xff] %vm2301, %v2237
      %2367 = vst.msk [vmem:[#allocation2 + $0x208] sm:$0xff] %vm2301, %v2238
      %2368 = vst.msk [vmem:[#allocation2 + $0x210] sm:$0xff] %vm2301, %v2239
      %2369 = vst.msk [vmem:[#allocation2 + $0x218] sm:$0xff] %vm2301, %v2240
      %2370 = vst.msk [vmem:[#allocation2 + $0x220] sm:$0xff] %vm2301, %v2241
      %2371 = vst.msk [vmem:[#allocation2 + $0x228] sm:$0xff] %vm2301, %v2242
      %2372 = vst.msk [vmem:[#allocation2 + $0x230] sm:$0xff] %vm2301, %v2243
      %2373 = vst.msk [vmem:[#allocation2 + $0x238] sm:$0xff] %vm2301, %v2244
      %2374 = vst.msk [vmem:[#allocation2 + $0x240] sm:$0xff] %vm2301, %v2245
      %2375 = vst.msk [vmem:[#allocation2 + $0x248] sm:$0xff] %vm2301, %v2246
      %2376 = vst.msk [vmem:[#allocation2 + $0x250] sm:$0xff] %vm2301, %v2247
      %2377 = vst.msk [vmem:[#allocation2 + $0x258] sm:$0xff] %vm2301, %v2248
      %2378 = vst.msk [vmem:[#allocation2 + $0x260] sm:$0xff] %vm2301, %v2249
      %2379 = vst.msk [vmem:[#allocation2 + $0x268] sm:$0xff] %vm2301, %v2250
      %2380 = vst.msk [vmem:[#allocation2 + $0x270] sm:$0xff] %vm2301, %v2251
      %2381 = vst.msk [vmem:[#allocation2 + $0x278] sm:$0xff] %vm2301, %v2252
      %2382 = vst.msk [vmem:[#allocation2 + $0x280] sm:$0xff] %vm2301, %v2253
      %2383 = vst.msk [vmem:[#allocation2 + $0x288] sm:$0xff] %vm2301, %v2254
      %2384 = vst.msk [vmem:[#allocation2 + $0x290] sm:$0xff] %vm2301, %v2255
      %2385 = vst.msk [vmem:[#allocation2 + $0x298] sm:$0xff] %vm2301, %v2256
      %2386 = vst.msk [vmem:[#allocation2 + $0x2a0] sm:$0xff] %vm2301, %v2257
      %2387 = vst.msk [vmem:[#allocation2 + $0x2a8] sm:$0xff] %vm2301, %v2258
      %2388 = vst.msk [vmem:[#allocation2 + $0x2b0] sm:$0xff] %vm2301, %v2259
      %2389 = vst.msk [vmem:[#allocation2 + $0x2b8] sm:$0xff] %vm2301, %v2260
      %2390 = vst.msk [vmem:[#allocation2 + $0x2c0] sm:$0xff] %vm2301, %v2261
      %2391 = vst.msk [vmem:[#allocation2 + $0x2c8] sm:$0xff] %vm2301, %v2262
      %2392 = vst.msk [vmem:[#allocation2 + $0x2d0] sm:$0xff] %vm2301, %v2263
      %2393 = vst.msk [vmem:[#allocation2 + $0x2d8] sm:$0xff] %vm2301, %v2264
      %2394 = vst.msk [vmem:[#allocation2 + $0x2e0] sm:$0xff] %vm2301, %v2265
      %2395 = vst.msk [vmem:[#allocation2 + $0x2e8] sm:$0xff] %vm2301, %v2266
      %2396 = vst.msk [vmem:[#allocation2 + $0x2f0] sm:$0xff] %vm2301, %v2267
      %2397 = vst.msk [vmem:[#allocation2 + $0x2f8] sm:$0xff] %vm2301, %v2268
      %2398 = vst.msk [vmem:[#allocation2 + $0x300] sm:$0xff] %vm2301, %v2269
      %2399 = vst.msk [vmem:[#allocation2 + $0x308] sm:$0xff] %vm2301, %v2270
      %2400 = vst.msk [vmem:[#allocation2 + $0x310] sm:$0xff] %vm2301, %v2271
      %2401 = vst.msk [vmem:[#allocation2 + $0x318] sm:$0xff] %vm2301, %v2272
      %2402 = vst.msk [vmem:[#allocation2 + $0x320] sm:$0xff] %vm2301, %v2273
      %2403 = vst.msk [vmem:[#allocation2 + $0x328] sm:$0xff] %vm2301, %v2274
      %2404 = vst.msk [vmem:[#allocation2 + $0x330] sm:$0xff] %vm2301, %v2275
      %2405 = vst.msk [vmem:[#allocation2 + $0x338] sm:$0xff] %vm2301, %v2276
      %2406 = vst.msk [vmem:[#allocation2 + $0x340] sm:$0xff] %vm2301, %v2277
      %2407 = vst.msk [vmem:[#allocation2 + $0x348] sm:$0xff] %vm2301, %v2278
      %2408 = vst.msk [vmem:[#allocation2 + $0x350] sm:$0xff] %vm2301, %v2279
      %2409 = vst.msk [vmem:[#allocation2 + $0x358] sm:$0xff] %vm2301, %v2280
      %2410 = vst.msk [vmem:[#allocation2 + $0x360] sm:$0xff] %vm2301, %v2281
      %2411 = vst.msk [vmem:[#allocation2 + $0x368] sm:$0xff] %vm2301, %v2282
      %2412 = vst.msk [vmem:[#allocation2 + $0x370] sm:$0xff] %vm2301, %v2283
      %2413 = vst.msk [vmem:[#allocation2 + $0x378] sm:$0xff] %vm2301, %v2284
      %2414 = vst.msk [vmem:[#allocation2 + $0x380] sm:$0xff] %vm2301, %v2285
      %2415 = vst.msk [vmem:[#allocation2 + $0x388] sm:$0xff] %vm2301, %v2286
      %2416 = vst.msk [vmem:[#allocation2 + $0x390] sm:$0xff] %vm2301, %v2287
      %2417 = vst.msk [vmem:[#allocation2 + $0x398] sm:$0xff] %vm2301, %v2288
      %2418 = vst.msk [vmem:[#allocation2 + $0x3a0] sm:$0xff] %vm2301, %v2289
      %2419 = vst.msk [vmem:[#allocation2 + $0x3a8] sm:$0xff] %vm2301, %v2290
      %2420 = vst.msk [vmem:[#allocation2 + $0x3b0] sm:$0xff] %vm2301, %v2291
      %2421 = vst.msk [vmem:[#allocation2 + $0x3b8] sm:$0xff] %vm2301, %v2292
      %2422 = vst.msk [vmem:[#allocation2 + $0x3c0] sm:$0xff] %vm2301, %v2293
      %2423 = vst.msk [vmem:[#allocation2 + $0x3c8] sm:$0xff] %vm2301, %v2294
      %2424 = vst.msk [vmem:[#allocation2 + $0x3d0] sm:$0xff] %vm2301, %v2295
      %2425 = vst.msk [vmem:[#allocation2 + $0x3d8] sm:$0xff] %vm2301, %v2296
      %2426 = vst.msk [vmem:[#allocation2 + $0x3e0] sm:$0xff] %vm2301, %v2297
      %2427 = vst.msk [vmem:[#allocation2 + $0x3e8] sm:$0xff] %vm2301, %v2298
      %2428 = vst.msk [vmem:[#allocation2 + $0x3f0] sm:$0xff] %vm2301, %v2299
      %2429 = vst.msk [vmem:[#allocation2 + $0x3f8] sm:$0xff] %vm2301, %v2300
      // Predicated region
      $region53: #{tpu_custom_call.1} parent=47 // pred_check
        %p2430 = pneg %p324
      $region54: #{tpu_custom_call.1} parent=47 // pred_check_branch
        %2432 = sbr.rel (%p2430) target = $region56
      $region55: #{tpu_custom_call.1} parent=47 // pred_region
        %v2433 = vld [vmem:[#allocation2] sm:$0xff]
        %v2434 = vld [vmem:[#allocation2 + $0x8] sm:$0xff]
        %v2435 = vld [vmem:[#allocation2 + $0x10] sm:$0xff]
        %v2436 = vld [vmem:[#allocation2 + $0x18] sm:$0xff]
        %v2437 = vld [vmem:[#allocation2 + $0x20] sm:$0xff]
        %v2438 = vld [vmem:[#allocation2 + $0x28] sm:$0xff]
        %v2439 = vld [vmem:[#allocation2 + $0x30] sm:$0xff]
        %v2440 = vld [vmem:[#allocation2 + $0x38] sm:$0xff]
        %v2441 = vld [vmem:[#allocation2 + $0x40] sm:$0xff]
        %v2442 = vld [vmem:[#allocation2 + $0x48] sm:$0xff]
        %v2443 = vld [vmem:[#allocation2 + $0x50] sm:$0xff]
        %v2444 = vld [vmem:[#allocation2 + $0x58] sm:$0xff]
        %v2445 = vld [vmem:[#allocation2 + $0x60] sm:$0xff]
        %v2446 = vld [vmem:[#allocation2 + $0x68] sm:$0xff]
        %v2447 = vld [vmem:[#allocation2 + $0x70] sm:$0xff]
        %v2448 = vld [vmem:[#allocation2 + $0x78] sm:$0xff]
        %v2449 = vld [vmem:[#allocation2 + $0x80] sm:$0xff]
        %v2450 = vld [vmem:[#allocation2 + $0x88] sm:$0xff]
        %v2451 = vld [vmem:[#allocation2 + $0x90] sm:$0xff]
        %v2452 = vld [vmem:[#allocation2 + $0x98] sm:$0xff]
        %v2453 = vld [vmem:[#allocation2 + $0xa0] sm:$0xff]
        %v2454 = vld [vmem:[#allocation2 + $0xa8] sm:$0xff]
        %v2455 = vld [vmem:[#allocation2 + $0xb0] sm:$0xff]
        %v2456 = vld [vmem:[#allocation2 + $0xb8] sm:$0xff]
        %v2457 = vld [vmem:[#allocation2 + $0xc0] sm:$0xff]
        %v2458 = vld [vmem:[#allocation2 + $0xc8] sm:$0xff]
        %v2459 = vld [vmem:[#allocation2 + $0xd0] sm:$0xff]
        %v2460 = vld [vmem:[#allocation2 + $0xd8] sm:$0xff]
        %v2461 = vld [vmem:[#allocation2 + $0xe0] sm:$0xff]
        %v2462 = vld [vmem:[#allocation2 + $0xe8] sm:$0xff]
        %v2463 = vld [vmem:[#allocation2 + $0xf0] sm:$0xff]
        %v2464 = vld [vmem:[#allocation2 + $0xf8] sm:$0xff]
        %v2465 = vld [vmem:[#allocation2 + $0x100] sm:$0xff]
        %v2466 = vld [vmem:[#allocation2 + $0x108] sm:$0xff]
        %v2467 = vld [vmem:[#allocation2 + $0x110] sm:$0xff]
        %v2468 = vld [vmem:[#allocation2 + $0x118] sm:$0xff]
        %v2469 = vld [vmem:[#allocation2 + $0x120] sm:$0xff]
        %v2470 = vld [vmem:[#allocation2 + $0x128] sm:$0xff]
        %v2471 = vld [vmem:[#allocation2 + $0x130] sm:$0xff]
        %v2472 = vld [vmem:[#allocation2 + $0x138] sm:$0xff]
        %v2473 = vld [vmem:[#allocation2 + $0x140] sm:$0xff]
        %v2474 = vld [vmem:[#allocation2 + $0x148] sm:$0xff]
        %v2475 = vld [vmem:[#allocation2 + $0x150] sm:$0xff]
        %v2476 = vld [vmem:[#allocation2 + $0x158] sm:$0xff]
        %v2477 = vld [vmem:[#allocation2 + $0x160] sm:$0xff]
        %v2478 = vld [vmem:[#allocation2 + $0x168] sm:$0xff]
        %v2479 = vld [vmem:[#allocation2 + $0x170] sm:$0xff]
        %v2480 = vld [vmem:[#allocation2 + $0x178] sm:$0xff]
        %v2481 = vld [vmem:[#allocation2 + $0x180] sm:$0xff]
        %v2482 = vld [vmem:[#allocation2 + $0x188] sm:$0xff]
        %v2483 = vld [vmem:[#allocation2 + $0x190] sm:$0xff]
        %v2484 = vld [vmem:[#allocation2 + $0x198] sm:$0xff]
        %v2485 = vld [vmem:[#allocation2 + $0x1a0] sm:$0xff]
        %v2486 = vld [vmem:[#allocation2 + $0x1a8] sm:$0xff]
        %v2487 = vld [vmem:[#allocation2 + $0x1b0] sm:$0xff]
        %v2488 = vld [vmem:[#allocation2 + $0x1b8] sm:$0xff]
        %v2489 = vld [vmem:[#allocation2 + $0x1c0] sm:$0xff]
        %v2490 = vld [vmem:[#allocation2 + $0x1c8] sm:$0xff]
        %v2491 = vld [vmem:[#allocation2 + $0x1d0] sm:$0xff]
        %v2492 = vld [vmem:[#allocation2 + $0x1d8] sm:$0xff]
        %v2493 = vld [vmem:[#allocation2 + $0x1e0] sm:$0xff]
        %v2494 = vld [vmem:[#allocation2 + $0x1e8] sm:$0xff]
        %v2495 = vld [vmem:[#allocation2 + $0x1f0] sm:$0xff]
        %v2496 = vld [vmem:[#allocation2 + $0x1f8] sm:$0xff]
        %v2497 = vld [vmem:[#allocation2 + $0x200] sm:$0xff]
        %v2498 = vld [vmem:[#allocation2 + $0x208] sm:$0xff]
        %v2499 = vld [vmem:[#allocation2 + $0x210] sm:$0xff]
        %v2500 = vld [vmem:[#allocation2 + $0x218] sm:$0xff]
        %v2501 = vld [vmem:[#allocation2 + $0x220] sm:$0xff]
        %v2502 = vld [vmem:[#allocation2 + $0x228] sm:$0xff]
        %v2503 = vld [vmem:[#allocation2 + $0x230] sm:$0xff]
        %v2504 = vld [vmem:[#allocation2 + $0x238] sm:$0xff]
        %v2505 = vld [vmem:[#allocation2 + $0x240] sm:$0xff]
        %v2506 = vld [vmem:[#allocation2 + $0x248] sm:$0xff]
        %v2507 = vld [vmem:[#allocation2 + $0x250] sm:$0xff]
        %v2508 = vld [vmem:[#allocation2 + $0x258] sm:$0xff]
        %v2509 = vld [vmem:[#allocation2 + $0x260] sm:$0xff]
        %v2510 = vld [vmem:[#allocation2 + $0x268] sm:$0xff]
        %v2511 = vld [vmem:[#allocation2 + $0x270] sm:$0xff]
        %v2512 = vld [vmem:[#allocation2 + $0x278] sm:$0xff]
        %v2513 = vld [vmem:[#allocation2 + $0x280] sm:$0xff]
        %v2514 = vld [vmem:[#allocation2 + $0x288] sm:$0xff]
        %v2515 = vld [vmem:[#allocation2 + $0x290] sm:$0xff]
        %v2516 = vld [vmem:[#allocation2 + $0x298] sm:$0xff]
        %v2517 = vld [vmem:[#allocation2 + $0x2a0] sm:$0xff]
        %v2518 = vld [vmem:[#allocation2 + $0x2a8] sm:$0xff]
        %v2519 = vld [vmem:[#allocation2 + $0x2b0] sm:$0xff]
        %v2520 = vld [vmem:[#allocation2 + $0x2b8] sm:$0xff]
        %v2521 = vld [vmem:[#allocation2 + $0x2c0] sm:$0xff]
        %v2522 = vld [vmem:[#allocation2 + $0x2c8] sm:$0xff]
        %v2523 = vld [vmem:[#allocation2 + $0x2d0] sm:$0xff]
        %v2524 = vld [vmem:[#allocation2 + $0x2d8] sm:$0xff]
        %v2525 = vld [vmem:[#allocation2 + $0x2e0] sm:$0xff]
        %v2526 = vld [vmem:[#allocation2 + $0x2e8] sm:$0xff]
        %v2527 = vld [vmem:[#allocation2 + $0x2f0] sm:$0xff]
        %v2528 = vld [vmem:[#allocation2 + $0x2f8] sm:$0xff]
        %v2529 = vld [vmem:[#allocation2 + $0x300] sm:$0xff]
        %v2530 = vld [vmem:[#allocation2 + $0x308] sm:$0xff]
        %v2531 = vld [vmem:[#allocation2 + $0x310] sm:$0xff]
        %v2532 = vld [vmem:[#allocation2 + $0x318] sm:$0xff]
        %v2533 = vld [vmem:[#allocation2 + $0x320] sm:$0xff]
        %v2534 = vld [vmem:[#allocation2 + $0x328] sm:$0xff]
        %v2535 = vld [vmem:[#allocation2 + $0x330] sm:$0xff]
        %v2536 = vld [vmem:[#allocation2 + $0x338] sm:$0xff]
        %v2537 = vld [vmem:[#allocation2 + $0x340] sm:$0xff]
        %v2538 = vld [vmem:[#allocation2 + $0x348] sm:$0xff]
        %v2539 = vld [vmem:[#allocation2 + $0x350] sm:$0xff]
        %v2540 = vld [vmem:[#allocation2 + $0x358] sm:$0xff]
        %v2541 = vld [vmem:[#allocation2 + $0x360] sm:$0xff]
        %v2542 = vld [vmem:[#allocation2 + $0x368] sm:$0xff]
        %v2543 = vld [vmem:[#allocation2 + $0x370] sm:$0xff]
        %v2544 = vld [vmem:[#allocation2 + $0x378] sm:$0xff]
        %v2545 = vld [vmem:[#allocation2 + $0x380] sm:$0xff]
        %v2546 = vld [vmem:[#allocation2 + $0x388] sm:$0xff]
        %v2547 = vld [vmem:[#allocation2 + $0x390] sm:$0xff]
        %v2548 = vld [vmem:[#allocation2 + $0x398] sm:$0xff]
        %v2549 = vld [vmem:[#allocation2 + $0x3a0] sm:$0xff]
        %v2550 = vld [vmem:[#allocation2 + $0x3a8] sm:$0xff]
        %v2551 = vld [vmem:[#allocation2 + $0x3b0] sm:$0xff]
        %v2552 = vld [vmem:[#allocation2 + $0x3b8] sm:$0xff]
        %v2553 = vld [vmem:[#allocation2 + $0x3c0] sm:$0xff]
        %v2554 = vld [vmem:[#allocation2 + $0x3c8] sm:$0xff]
        %v2555 = vld [vmem:[#allocation2 + $0x3d0] sm:$0xff]
        %v2556 = vld [vmem:[#allocation2 + $0x3d8] sm:$0xff]
        %v2557 = vld [vmem:[#allocation2 + $0x3e0] sm:$0xff]
        %v2558 = vld [vmem:[#allocation2 + $0x3e8] sm:$0xff]
        %v2559 = vld [vmem:[#allocation2 + $0x3f0] sm:$0xff]
        %v2560 = vld [vmem:[#allocation2 + $0x3f8] sm:$0xff]
        %v2561 = vsel %vm2301, %v2433, -inf
        %2562 = vmax.xlane.f32.xlu0 %v2561
        %v2563 = vpop.xlane.xlu0 %2562
        %v2564 = vsel %vm2301, %v2434, -inf
        %2565 = vmax.xlane.f32.xlu0 %v2564
        %v2566 = vpop.xlane.xlu0 %2565
        %v2567 = vsel %vm2301, %v2435, -inf
        %2568 = vmax.xlane.f32.xlu0 %v2567
        %v2569 = vpop.xlane.xlu0 %2568
        %v2570 = vsel %vm2301, %v2436, -inf
        %2571 = vmax.xlane.f32.xlu0 %v2570
        %v2572 = vpop.xlane.xlu0 %2571
        %v2573 = vsel %vm2301, %v2437, -inf
        %2574 = vmax.xlane.f32.xlu0 %v2573
        %v2575 = vpop.xlane.xlu0 %2574
        %v2576 = vsel %vm2301, %v2438, -inf
        %2577 = vmax.xlane.f32.xlu0 %v2576
        %v2578 = vpop.xlane.xlu0 %2577
        %v2579 = vsel %vm2301, %v2439, -inf
        %2580 = vmax.xlane.f32.xlu0 %v2579
        %v2581 = vpop.xlane.xlu0 %2580
        %v2582 = vsel %vm2301, %v2440, -inf
        %2583 = vmax.xlane.f32.xlu0 %v2582
        %v2584 = vpop.xlane.xlu0 %2583
        %v2585 = vsel %vm2301, %v2441, -inf
        %2586 = vmax.xlane.f32.xlu0 %v2585
        %v2587 = vpop.xlane.xlu0 %2586
        %v2588 = vsel %vm2301, %v2442, -inf
        %2589 = vmax.xlane.f32.xlu0 %v2588
        %v2590 = vpop.xlane.xlu0 %2589
        %v2591 = vsel %vm2301, %v2443, -inf
        %2592 = vmax.xlane.f32.xlu0 %v2591
        %v2593 = vpop.xlane.xlu0 %2592
        %v2594 = vsel %vm2301, %v2444, -inf
        %2595 = vmax.xlane.f32.xlu0 %v2594
        %v2596 = vpop.xlane.xlu0 %2595
        %v2597 = vsel %vm2301, %v2445, -inf
        %2598 = vmax.xlane.f32.xlu0 %v2597
        %v2599 = vpop.xlane.xlu0 %2598
        %v2600 = vsel %vm2301, %v2446, -inf
        %2601 = vmax.xlane.f32.xlu0 %v2600
        %v2602 = vpop.xlane.xlu0 %2601
        %v2603 = vsel %vm2301, %v2447, -inf
        %2604 = vmax.xlane.f32.xlu0 %v2603
        %v2605 = vpop.xlane.xlu0 %2604
        %v2606 = vsel %vm2301, %v2448, -inf
        %2607 = vmax.xlane.f32.xlu0 %v2606
        %v2608 = vpop.xlane.xlu0 %2607
        %v2609 = vsel %vm2301, %v2449, -inf
        %2610 = vmax.xlane.f32.xlu0 %v2609
        %v2611 = vpop.xlane.xlu0 %2610
        %v2612 = vsel %vm2301, %v2450, -inf
        %2613 = vmax.xlane.f32.xlu0 %v2612
        %v2614 = vpop.xlane.xlu0 %2613
        %v2615 = vsel %vm2301, %v2451, -inf
        %2616 = vmax.xlane.f32.xlu0 %v2615
        %v2617 = vpop.xlane.xlu0 %2616
        %v2618 = vsel %vm2301, %v2452, -inf
        %2619 = vmax.xlane.f32.xlu0 %v2618
        %v2620 = vpop.xlane.xlu0 %2619
        %v2621 = vsel %vm2301, %v2453, -inf
        %2622 = vmax.xlane.f32.xlu0 %v2621
        %v2623 = vpop.xlane.xlu0 %2622
        %v2624 = vsel %vm2301, %v2454, -inf
        %2625 = vmax.xlane.f32.xlu0 %v2624
        %v2626 = vpop.xlane.xlu0 %2625
        %v2627 = vsel %vm2301, %v2455, -inf
        %2628 = vmax.xlane.f32.xlu0 %v2627
        %v2629 = vpop.xlane.xlu0 %2628
        %v2630 = vsel %vm2301, %v2456, -inf
        %2631 = vmax.xlane.f32.xlu0 %v2630
        %v2632 = vpop.xlane.xlu0 %2631
        %v2633 = vsel %vm2301, %v2457, -inf
        %2634 = vmax.xlane.f32.xlu0 %v2633
        %v2635 = vpop.xlane.xlu0 %2634
        %v2636 = vsel %vm2301, %v2458, -inf
        %2637 = vmax.xlane.f32.xlu0 %v2636
        %v2638 = vpop.xlane.xlu0 %2637
        %v2639 = vsel %vm2301, %v2459, -inf
        %2640 = vmax.xlane.f32.xlu0 %v2639
        %v2641 = vpop.xlane.xlu0 %2640
        %v2642 = vsel %vm2301, %v2460, -inf
        %2643 = vmax.xlane.f32.xlu0 %v2642
        %v2644 = vpop.xlane.xlu0 %2643
        %v2645 = vsel %vm2301, %v2461, -inf
        %2646 = vmax.xlane.f32.xlu0 %v2645
        %v2647 = vpop.xlane.xlu0 %2646
        %v2648 = vsel %vm2301, %v2462, -inf
        %2649 = vmax.xlane.f32.xlu0 %v2648
        %v2650 = vpop.xlane.xlu0 %2649
        %v2651 = vsel %vm2301, %v2463, -inf
        %2652 = vmax.xlane.f32.xlu0 %v2651
        %v2653 = vpop.xlane.xlu0 %2652
        %v2654 = vsel %vm2301, %v2464, -inf
        %2655 = vmax.xlane.f32.xlu0 %v2654
        %v2656 = vpop.xlane.xlu0 %2655
        %v2657 = vsel %vm2301, %v2465, -inf
        %2658 = vmax.xlane.f32.xlu0 %v2657
        %v2659 = vpop.xlane.xlu0 %2658
        %v2660 = vsel %vm2301, %v2466, -inf
        %2661 = vmax.xlane.f32.xlu0 %v2660
        %v2662 = vpop.xlane.xlu0 %2661
        %v2663 = vsel %vm2301, %v2467, -inf
        %2664 = vmax.xlane.f32.xlu0 %v2663
        %v2665 = vpop.xlane.xlu0 %2664
        %v2666 = vsel %vm2301, %v2468, -inf
        %2667 = vmax.xlane.f32.xlu0 %v2666
        %v2668 = vpop.xlane.xlu0 %2667
        %v2669 = vsel %vm2301, %v2469, -inf
        %2670 = vmax.xlane.f32.xlu0 %v2669
        %v2671 = vpop.xlane.xlu0 %2670
        %v2672 = vsel %vm2301, %v2470, -inf
        %2673 = vmax.xlane.f32.xlu0 %v2672
        %v2674 = vpop.xlane.xlu0 %2673
        %v2675 = vsel %vm2301, %v2471, -inf
        %2676 = vmax.xlane.f32.xlu0 %v2675
        %v2677 = vpop.xlane.xlu0 %2676
        %v2678 = vsel %vm2301, %v2472, -inf
        %2679 = vmax.xlane.f32.xlu0 %v2678
        %v2680 = vpop.xlane.xlu0 %2679
        %v2681 = vsel %vm2301, %v2473, -inf
        %2682 = vmax.xlane.f32.xlu0 %v2681
        %v2683 = vpop.xlane.xlu0 %2682
        %v2684 = vsel %vm2301, %v2474, -inf
        %2685 = vmax.xlane.f32.xlu0 %v2684
        %v2686 = vpop.xlane.xlu0 %2685
        %v2687 = vsel %vm2301, %v2475, -inf
        %2688 = vmax.xlane.f32.xlu0 %v2687
        %v2689 = vpop.xlane.xlu0 %2688
        %v2690 = vsel %vm2301, %v2476, -inf
        %2691 = vmax.xlane.f32.xlu0 %v2690
        %v2692 = vpop.xlane.xlu0 %2691
        %v2693 = vsel %vm2301, %v2477, -inf
        %2694 = vmax.xlane.f32.xlu0 %v2693
        %v2695 = vpop.xlane.xlu0 %2694
        %v2696 = vsel %vm2301, %v2478, -inf
        %2697 = vmax.xlane.f32.xlu0 %v2696
        %v2698 = vpop.xlane.xlu0 %2697
        %v2699 = vsel %vm2301, %v2479, -inf
        %2700 = vmax.xlane.f32.xlu0 %v2699
        %v2701 = vpop.xlane.xlu0 %2700
        %v2702 = vsel %vm2301, %v2480, -inf
        %2703 = vmax.xlane.f32.xlu0 %v2702
        %v2704 = vpop.xlane.xlu0 %2703
        %v2705 = vsel %vm2301, %v2481, -inf
        %2706 = vmax.xlane.f32.xlu0 %v2705
        %v2707 = vpop.xlane.xlu0 %2706
        %v2708 = vsel %vm2301, %v2482, -inf
        %2709 = vmax.xlane.f32.xlu0 %v2708
        %v2710 = vpop.xlane.xlu0 %2709
        %v2711 = vsel %vm2301, %v2483, -inf
        %2712 = vmax.xlane.f32.xlu0 %v2711
        %v2713 = vpop.xlane.xlu0 %2712
        %v2714 = vsel %vm2301, %v2484, -inf
        %2715 = vmax.xlane.f32.xlu0 %v2714
        %v2716 = vpop.xlane.xlu0 %2715
        %v2717 = vsel %vm2301, %v2485, -inf
        %2718 = vmax.xlane.f32.xlu0 %v2717
        %v2719 = vpop.xlane.xlu0 %2718
        %v2720 = vsel %vm2301, %v2486, -inf
        %2721 = vmax.xlane.f32.xlu0 %v2720
        %v2722 = vpop.xlane.xlu0 %2721
        %v2723 = vsel %vm2301, %v2487, -inf
        %2724 = vmax.xlane.f32.xlu0 %v2723
        %v2725 = vpop.xlane.xlu0 %2724
        %v2726 = vsel %vm2301, %v2488, -inf
        %2727 = vmax.xlane.f32.xlu0 %v2726
        %v2728 = vpop.xlane.xlu0 %2727
        %v2729 = vsel %vm2301, %v2489, -inf
        %2730 = vmax.xlane.f32.xlu0 %v2729
        %v2731 = vpop.xlane.xlu0 %2730
        %v2732 = vsel %vm2301, %v2490, -inf
        %2733 = vmax.xlane.f32.xlu0 %v2732
        %v2734 = vpop.xlane.xlu0 %2733
        %v2735 = vsel %vm2301, %v2491, -inf
        %2736 = vmax.xlane.f32.xlu0 %v2735
        %v2737 = vpop.xlane.xlu0 %2736
        %v2738 = vsel %vm2301, %v2492, -inf
        %2739 = vmax.xlane.f32.xlu0 %v2738
        %v2740 = vpop.xlane.xlu0 %2739
        %v2741 = vsel %vm2301, %v2493, -inf
        %2742 = vmax.xlane.f32.xlu0 %v2741
        %v2743 = vpop.xlane.xlu0 %2742
        %v2744 = vsel %vm2301, %v2494, -inf
        %2745 = vmax.xlane.f32.xlu0 %v2744
        %v2746 = vpop.xlane.xlu0 %2745
        %v2747 = vsel %vm2301, %v2495, -inf
        %2748 = vmax.xlane.f32.xlu0 %v2747
        %v2749 = vpop.xlane.xlu0 %2748
        %v2750 = vsel %vm2301, %v2496, -inf
        %2751 = vmax.xlane.f32.xlu0 %v2750
        %v2752 = vpop.xlane.xlu0 %2751
        %v2753 = vsel %vm2301, %v2497, -inf
        %2754 = vmax.xlane.f32.xlu0 %v2753
        %v2755 = vpop.xlane.xlu0 %2754
        %v2756 = vsel %vm2301, %v2498, -inf
        %2757 = vmax.xlane.f32.xlu0 %v2756
        %v2758 = vpop.xlane.xlu0 %2757
        %v2759 = vsel %vm2301, %v2499, -inf
        %2760 = vmax.xlane.f32.xlu0 %v2759
        %v2761 = vpop.xlane.xlu0 %2760
        %v2762 = vsel %vm2301, %v2500, -inf
        %2763 = vmax.xlane.f32.xlu0 %v2762
        %v2764 = vpop.xlane.xlu0 %2763
        %v2765 = vsel %vm2301, %v2501, -inf
        %2766 = vmax.xlane.f32.xlu0 %v2765
        %v2767 = vpop.xlane.xlu0 %2766
        %v2768 = vsel %vm2301, %v2502, -inf
        %2769 = vmax.xlane.f32.xlu0 %v2768
        %v2770 = vpop.xlane.xlu0 %2769
        %v2771 = vsel %vm2301, %v2503, -inf
        %2772 = vmax.xlane.f32.xlu0 %v2771
        %v2773 = vpop.xlane.xlu0 %2772
        %v2774 = vsel %vm2301, %v2504, -inf
        %2775 = vmax.xlane.f32.xlu0 %v2774
        %v2776 = vpop.xlane.xlu0 %2775
        %v2777 = vsel %vm2301, %v2505, -inf
        %2778 = vmax.xlane.f32.xlu0 %v2777
        %v2779 = vpop.xlane.xlu0 %2778
        %v2780 = vsel %vm2301, %v2506, -inf
        %2781 = vmax.xlane.f32.xlu0 %v2780
        %v2782 = vpop.xlane.xlu0 %2781
        %v2783 = vsel %vm2301, %v2507, -inf
        %2784 = vmax.xlane.f32.xlu0 %v2783
        %v2785 = vpop.xlane.xlu0 %2784
        %v2786 = vsel %vm2301, %v2508, -inf
        %2787 = vmax.xlane.f32.xlu0 %v2786
        %v2788 = vpop.xlane.xlu0 %2787
        %v2789 = vsel %vm2301, %v2509, -inf
        %2790 = vmax.xlane.f32.xlu0 %v2789
        %v2791 = vpop.xlane.xlu0 %2790
        %v2792 = vsel %vm2301, %v2510, -inf
        %2793 = vmax.xlane.f32.xlu0 %v2792
        %v2794 = vpop.xlane.xlu0 %2793
        %v2795 = vsel %vm2301, %v2511, -inf
        %2796 = vmax.xlane.f32.xlu0 %v2795
        %v2797 = vpop.xlane.xlu0 %2796
        %v2798 = vsel %vm2301, %v2512, -inf
        %2799 = vmax.xlane.f32.xlu0 %v2798
        %v2800 = vpop.xlane.xlu0 %2799
        %v2801 = vsel %vm2301, %v2513, -inf
        %2802 = vmax.xlane.f32.xlu0 %v2801
        %v2803 = vpop.xlane.xlu0 %2802
        %v2804 = vsel %vm2301, %v2514, -inf
        %2805 = vmax.xlane.f32.xlu0 %v2804
        %v2806 = vpop.xlane.xlu0 %2805
        %v2807 = vsel %vm2301, %v2515, -inf
        %2808 = vmax.xlane.f32.xlu0 %v2807
        %v2809 = vpop.xlane.xlu0 %2808
        %v2810 = vsel %vm2301, %v2516, -inf
        %2811 = vmax.xlane.f32.xlu0 %v2810
        %v2812 = vpop.xlane.xlu0 %2811
        %v2813 = vsel %vm2301, %v2517, -inf
        %2814 = vmax.xlane.f32.xlu0 %v2813
        %v2815 = vpop.xlane.xlu0 %2814
        %v2816 = vsel %vm2301, %v2518, -inf
        %2817 = vmax.xlane.f32.xlu0 %v2816
        %v2818 = vpop.xlane.xlu0 %2817
        %v2819 = vsel %vm2301, %v2519, -inf
        %2820 = vmax.xlane.f32.xlu0 %v2819
        %v2821 = vpop.xlane.xlu0 %2820
        %v2822 = vsel %vm2301, %v2520, -inf
        %2823 = vmax.xlane.f32.xlu0 %v2822
        %v2824 = vpop.xlane.xlu0 %2823
        %v2825 = vsel %vm2301, %v2521, -inf
        %2826 = vmax.xlane.f32.xlu0 %v2825
        %v2827 = vpop.xlane.xlu0 %2826
        %v2828 = vsel %vm2301, %v2522, -inf
        %2829 = vmax.xlane.f32.xlu0 %v2828
        %v2830 = vpop.xlane.xlu0 %2829
        %v2831 = vsel %vm2301, %v2523, -inf
        %2832 = vmax.xlane.f32.xlu0 %v2831
        %v2833 = vpop.xlane.xlu0 %2832
        %v2834 = vsel %vm2301, %v2524, -inf
        %2835 = vmax.xlane.f32.xlu0 %v2834
        %v2836 = vpop.xlane.xlu0 %2835
        %v2837 = vsel %vm2301, %v2525, -inf
        %2838 = vmax.xlane.f32.xlu0 %v2837
        %v2839 = vpop.xlane.xlu0 %2838
        %v2840 = vsel %vm2301, %v2526, -inf
        %2841 = vmax.xlane.f32.xlu0 %v2840
        %v2842 = vpop.xlane.xlu0 %2841
        %v2843 = vsel %vm2301, %v2527, -inf
        %2844 = vmax.xlane.f32.xlu0 %v2843
        %v2845 = vpop.xlane.xlu0 %2844
        %v2846 = vsel %vm2301, %v2528, -inf
        %2847 = vmax.xlane.f32.xlu0 %v2846
        %v2848 = vpop.xlane.xlu0 %2847
        %v2849 = vsel %vm2301, %v2529, -inf
        %2850 = vmax.xlane.f32.xlu0 %v2849
        %v2851 = vpop.xlane.xlu0 %2850
        %v2852 = vsel %vm2301, %v2530, -inf
        %2853 = vmax.xlane.f32.xlu0 %v2852
        %v2854 = vpop.xlane.xlu0 %2853
        %v2855 = vsel %vm2301, %v2531, -inf
        %2856 = vmax.xlane.f32.xlu0 %v2855
        %v2857 = vpop.xlane.xlu0 %2856
        %v2858 = vsel %vm2301, %v2532, -inf
        %2859 = vmax.xlane.f32.xlu0 %v2858
        %v2860 = vpop.xlane.xlu0 %2859
        %v2861 = vsel %vm2301, %v2533, -inf
        %2862 = vmax.xlane.f32.xlu0 %v2861
        %v2863 = vpop.xlane.xlu0 %2862
        %v2864 = vsel %vm2301, %v2534, -inf
        %2865 = vmax.xlane.f32.xlu0 %v2864
        %v2866 = vpop.xlane.xlu0 %2865
        %v2867 = vsel %vm2301, %v2535, -inf
        %2868 = vmax.xlane.f32.xlu0 %v2867
        %v2869 = vpop.xlane.xlu0 %2868
        %v2870 = vsel %vm2301, %v2536, -inf
        %2871 = vmax.xlane.f32.xlu0 %v2870
        %v2872 = vpop.xlane.xlu0 %2871
        %v2873 = vsel %vm2301, %v2537, -inf
        %2874 = vmax.xlane.f32.xlu0 %v2873
        %v2875 = vpop.xlane.xlu0 %2874
        %v2876 = vsel %vm2301, %v2538, -inf
        %2877 = vmax.xlane.f32.xlu0 %v2876
        %v2878 = vpop.xlane.xlu0 %2877
        %v2879 = vsel %vm2301, %v2539, -inf
        %2880 = vmax.xlane.f32.xlu0 %v2879
        %v2881 = vpop.xlane.xlu0 %2880
        %v2882 = vsel %vm2301, %v2540, -inf
        %2883 = vmax.xlane.f32.xlu0 %v2882
        %v2884 = vpop.xlane.xlu0 %2883
        %v2885 = vsel %vm2301, %v2541, -inf
        %2886 = vmax.xlane.f32.xlu0 %v2885
        %v2887 = vpop.xlane.xlu0 %2886
        %v2888 = vsel %vm2301, %v2542, -inf
        %2889 = vmax.xlane.f32.xlu0 %v2888
        %v2890 = vpop.xlane.xlu0 %2889
        %v2891 = vsel %vm2301, %v2543, -inf
        %2892 = vmax.xlane.f32.xlu0 %v2891
        %v2893 = vpop.xlane.xlu0 %2892
        %v2894 = vsel %vm2301, %v2544, -inf
        %2895 = vmax.xlane.f32.xlu0 %v2894
        %v2896 = vpop.xlane.xlu0 %2895
        %v2897 = vsel %vm2301, %v2545, -inf
        %2898 = vmax.xlane.f32.xlu0 %v2897
        %v2899 = vpop.xlane.xlu0 %2898
        %v2900 = vsel %vm2301, %v2546, -inf
        %2901 = vmax.xlane.f32.xlu0 %v2900
        %v2902 = vpop.xlane.xlu0 %2901
        %v2903 = vsel %vm2301, %v2547, -inf
        %2904 = vmax.xlane.f32.xlu0 %v2903
        %v2905 = vpop.xlane.xlu0 %2904
        %v2906 = vsel %vm2301, %v2548, -inf
        %2907 = vmax.xlane.f32.xlu0 %v2906
        %v2908 = vpop.xlane.xlu0 %2907
        %v2909 = vsel %vm2301, %v2549, -inf
        %2910 = vmax.xlane.f32.xlu0 %v2909
        %v2911 = vpop.xlane.xlu0 %2910
        %v2912 = vsel %vm2301, %v2550, -inf
        %2913 = vmax.xlane.f32.xlu0 %v2912
        %v2914 = vpop.xlane.xlu0 %2913
        %v2915 = vsel %vm2301, %v2551, -inf
        %2916 = vmax.xlane.f32.xlu0 %v2915
        %v2917 = vpop.xlane.xlu0 %2916
        %v2918 = vsel %vm2301, %v2552, -inf
        %2919 = vmax.xlane.f32.xlu0 %v2918
        %v2920 = vpop.xlane.xlu0 %2919
        %v2921 = vsel %vm2301, %v2553, -inf
        %2922 = vmax.xlane.f32.xlu0 %v2921
        %v2923 = vpop.xlane.xlu0 %2922
        %v2924 = vsel %vm2301, %v2554, -inf
        %2925 = vmax.xlane.f32.xlu0 %v2924
        %v2926 = vpop.xlane.xlu0 %2925
        %v2927 = vsel %vm2301, %v2555, -inf
        %2928 = vmax.xlane.f32.xlu0 %v2927
        %v2929 = vpop.xlane.xlu0 %2928
        %v2930 = vsel %vm2301, %v2556, -inf
        %2931 = vmax.xlane.f32.xlu0 %v2930
        %v2932 = vpop.xlane.xlu0 %2931
        %v2933 = vsel %vm2301, %v2557, -inf
        %2934 = vmax.xlane.f32.xlu0 %v2933
        %v2935 = vpop.xlane.xlu0 %2934
        %v2936 = vsel %vm2301, %v2558, -inf
        %2937 = vmax.xlane.f32.xlu0 %v2936
        %v2938 = vpop.xlane.xlu0 %2937
        %v2939 = vsel %vm2301, %v2559, -inf
        %2940 = vmax.xlane.f32.xlu0 %v2939
        %v2941 = vpop.xlane.xlu0 %2940
        %v2942 = vsel %vm2301, %v2560, -inf
        %2943 = vmax.xlane.f32.xlu0 %v2942
        %v2944 = vpop.xlane.xlu0 %2943
        %v2945 = vld [vmem:[%s6] sm:$0xff]
        %v2946 = vld [vmem:[%s6 + $0x8] sm:$0xff]
        %v2947 = vld [vmem:[%s6 + $0x10] sm:$0xff]
        %v2948 = vld [vmem:[%s6 + $0x18] sm:$0xff]
        %v2949 = vld [vmem:[%s6 + $0x20] sm:$0xff]
        %v2950 = vld [vmem:[%s6 + $0x28] sm:$0xff]
        %v2951 = vld [vmem:[%s6 + $0x30] sm:$0xff]
        %v2952 = vld [vmem:[%s6 + $0x38] sm:$0xff]
        %v2953 = vld [vmem:[%s6 + $0x40] sm:$0xff]
        %v2954 = vld [vmem:[%s6 + $0x48] sm:$0xff]
        %v2955 = vld [vmem:[%s6 + $0x50] sm:$0xff]
        %v2956 = vld [vmem:[%s6 + $0x58] sm:$0xff]
        %v2957 = vld [vmem:[%s6 + $0x60] sm:$0xff]
        %v2958 = vld [vmem:[%s6 + $0x68] sm:$0xff]
        %v2959 = vld [vmem:[%s6 + $0x70] sm:$0xff]
        %v2960 = vld [vmem:[%s6 + $0x78] sm:$0xff]
        %v2961 = vld [vmem:[%s6 + $0x80] sm:$0xff]
        %v2962 = vld [vmem:[%s6 + $0x88] sm:$0xff]
        %v2963 = vld [vmem:[%s6 + $0x90] sm:$0xff]
        %v2964 = vld [vmem:[%s6 + $0x98] sm:$0xff]
        %v2965 = vld [vmem:[%s6 + $0xa0] sm:$0xff]
        %v2966 = vld [vmem:[%s6 + $0xa8] sm:$0xff]
        %v2967 = vld [vmem:[%s6 + $0xb0] sm:$0xff]
        %v2968 = vld [vmem:[%s6 + $0xb8] sm:$0xff]
        %v2969 = vld [vmem:[%s6 + $0xc0] sm:$0xff]
        %v2970 = vld [vmem:[%s6 + $0xc8] sm:$0xff]
        %v2971 = vld [vmem:[%s6 + $0xd0] sm:$0xff]
        %v2972 = vld [vmem:[%s6 + $0xd8] sm:$0xff]
        %v2973 = vld [vmem:[%s6 + $0xe0] sm:$0xff]
        %v2974 = vld [vmem:[%s6 + $0xe8] sm:$0xff]
        %v2975 = vld [vmem:[%s6 + $0xf0] sm:$0xff]
        %v2976 = vld [vmem:[%s6 + $0xf8] sm:$0xff]
        %v2977 = vld [vmem:[%s6 + $0x100] sm:$0xff]
        %v2978 = vld [vmem:[%s6 + $0x108] sm:$0xff]
        %v2979 = vld [vmem:[%s6 + $0x110] sm:$0xff]
        %v2980 = vld [vmem:[%s6 + $0x118] sm:$0xff]
        %v2981 = vld [vmem:[%s6 + $0x120] sm:$0xff]
        %v2982 = vld [vmem:[%s6 + $0x128] sm:$0xff]
        %v2983 = vld [vmem:[%s6 + $0x130] sm:$0xff]
        %v2984 = vld [vmem:[%s6 + $0x138] sm:$0xff]
        %v2985 = vld [vmem:[%s6 + $0x140] sm:$0xff]
        %v2986 = vld [vmem:[%s6 + $0x148] sm:$0xff]
        %v2987 = vld [vmem:[%s6 + $0x150] sm:$0xff]
        %v2988 = vld [vmem:[%s6 + $0x158] sm:$0xff]
        %v2989 = vld [vmem:[%s6 + $0x160] sm:$0xff]
        %v2990 = vld [vmem:[%s6 + $0x168] sm:$0xff]
        %v2991 = vld [vmem:[%s6 + $0x170] sm:$0xff]
        %v2992 = vld [vmem:[%s6 + $0x178] sm:$0xff]
        %v2993 = vld [vmem:[%s6 + $0x180] sm:$0xff]
        %v2994 = vld [vmem:[%s6 + $0x188] sm:$0xff]
        %v2995 = vld [vmem:[%s6 + $0x190] sm:$0xff]
        %v2996 = vld [vmem:[%s6 + $0x198] sm:$0xff]
        %v2997 = vld [vmem:[%s6 + $0x1a0] sm:$0xff]
        %v2998 = vld [vmem:[%s6 + $0x1a8] sm:$0xff]
        %v2999 = vld [vmem:[%s6 + $0x1b0] sm:$0xff]
        %v3000 = vld [vmem:[%s6 + $0x1b8] sm:$0xff]
        %v3001 = vld [vmem:[%s6 + $0x1c0] sm:$0xff]
        %v3002 = vld [vmem:[%s6 + $0x1c8] sm:$0xff]
        %v3003 = vld [vmem:[%s6 + $0x1d0] sm:$0xff]
        %v3004 = vld [vmem:[%s6 + $0x1d8] sm:$0xff]
        %v3005 = vld [vmem:[%s6 + $0x1e0] sm:$0xff]
        %v3006 = vld [vmem:[%s6 + $0x1e8] sm:$0xff]
        %v3007 = vld [vmem:[%s6 + $0x1f0] sm:$0xff]
        %v3008 = vld [vmem:[%s6 + $0x1f8] sm:$0xff]
        %v3009 = vld [vmem:[%s6 + $0x200] sm:$0xff]
        %v3010 = vld [vmem:[%s6 + $0x208] sm:$0xff]
        %v3011 = vld [vmem:[%s6 + $0x210] sm:$0xff]
        %v3012 = vld [vmem:[%s6 + $0x218] sm:$0xff]
        %v3013 = vld [vmem:[%s6 + $0x220] sm:$0xff]
        %v3014 = vld [vmem:[%s6 + $0x228] sm:$0xff]
        %v3015 = vld [vmem:[%s6 + $0x230] sm:$0xff]
        %v3016 = vld [vmem:[%s6 + $0x238] sm:$0xff]
        %v3017 = vld [vmem:[%s6 + $0x240] sm:$0xff]
        %v3018 = vld [vmem:[%s6 + $0x248] sm:$0xff]
        %v3019 = vld [vmem:[%s6 + $0x250] sm:$0xff]
        %v3020 = vld [vmem:[%s6 + $0x258] sm:$0xff]
        %v3021 = vld [vmem:[%s6 + $0x260] sm:$0xff]
        %v3022 = vld [vmem:[%s6 + $0x268] sm:$0xff]
        %v3023 = vld [vmem:[%s6 + $0x270] sm:$0xff]
        %v3024 = vld [vmem:[%s6 + $0x278] sm:$0xff]
        %v3025 = vld [vmem:[%s6 + $0x280] sm:$0xff]
        %v3026 = vld [vmem:[%s6 + $0x288] sm:$0xff]
        %v3027 = vld [vmem:[%s6 + $0x290] sm:$0xff]
        %v3028 = vld [vmem:[%s6 + $0x298] sm:$0xff]
        %v3029 = vld [vmem:[%s6 + $0x2a0] sm:$0xff]
        %v3030 = vld [vmem:[%s6 + $0x2a8] sm:$0xff]
        %v3031 = vld [vmem:[%s6 + $0x2b0] sm:$0xff]
        %v3032 = vld [vmem:[%s6 + $0x2b8] sm:$0xff]
        %v3033 = vld [vmem:[%s6 + $0x2c0] sm:$0xff]
        %v3034 = vld [vmem:[%s6 + $0x2c8] sm:$0xff]
        %v3035 = vld [vmem:[%s6 + $0x2d0] sm:$0xff]
        %v3036 = vld [vmem:[%s6 + $0x2d8] sm:$0xff]
        %v3037 = vld [vmem:[%s6 + $0x2e0] sm:$0xff]
        %v3038 = vld [vmem:[%s6 + $0x2e8] sm:$0xff]
        %v3039 = vld [vmem:[%s6 + $0x2f0] sm:$0xff]
        %v3040 = vld [vmem:[%s6 + $0x2f8] sm:$0xff]
        %v3041 = vld [vmem:[%s6 + $0x300] sm:$0xff]
        %v3042 = vld [vmem:[%s6 + $0x308] sm:$0xff]
        %v3043 = vld [vmem:[%s6 + $0x310] sm:$0xff]
        %v3044 = vld [vmem:[%s6 + $0x318] sm:$0xff]
        %v3045 = vld [vmem:[%s6 + $0x320] sm:$0xff]
        %v3046 = vld [vmem:[%s6 + $0x328] sm:$0xff]
        %v3047 = vld [vmem:[%s6 + $0x330] sm:$0xff]
        %v3048 = vld [vmem:[%s6 + $0x338] sm:$0xff]
        %v3049 = vld [vmem:[%s6 + $0x340] sm:$0xff]
        %v3050 = vld [vmem:[%s6 + $0x348] sm:$0xff]
        %v3051 = vld [vmem:[%s6 + $0x350] sm:$0xff]
        %v3052 = vld [vmem:[%s6 + $0x358] sm:$0xff]
        %v3053 = vld [vmem:[%s6 + $0x360] sm:$0xff]
        %v3054 = vld [vmem:[%s6 + $0x368] sm:$0xff]
        %v3055 = vld [vmem:[%s6 + $0x370] sm:$0xff]
        %v3056 = vld [vmem:[%s6 + $0x378] sm:$0xff]
        %v3057 = vld [vmem:[%s6 + $0x380] sm:$0xff]
        %v3058 = vld [vmem:[%s6 + $0x388] sm:$0xff]
        %v3059 = vld [vmem:[%s6 + $0x390] sm:$0xff]
        %v3060 = vld [vmem:[%s6 + $0x398] sm:$0xff]
        %v3061 = vld [vmem:[%s6 + $0x3a0] sm:$0xff]
        %v3062 = vld [vmem:[%s6 + $0x3a8] sm:$0xff]
        %v3063 = vld [vmem:[%s6 + $0x3b0] sm:$0xff]
        %v3064 = vld [vmem:[%s6 + $0x3b8] sm:$0xff]
        %v3065 = vld [vmem:[%s6 + $0x3c0] sm:$0xff]
        %v3066 = vld [vmem:[%s6 + $0x3c8] sm:$0xff]
        %v3067 = vld [vmem:[%s6 + $0x3d0] sm:$0xff]
        %v3068 = vld [vmem:[%s6 + $0x3d8] sm:$0xff]
        %v3069 = vld [vmem:[%s6 + $0x3e0] sm:$0xff]
        %v3070 = vld [vmem:[%s6 + $0x3e8] sm:$0xff]
        %v3071 = vld [vmem:[%s6 + $0x3f0] sm:$0xff]
        %v3072 = vld [vmem:[%s6 + $0x3f8] sm:$0xff]
        %v3073 = vadd.f32 %v2563, %v2945
        %v3074 = vadd.f32 %v2566, %v2946
        %v3075 = vadd.f32 %v2569, %v2947
        %v3076 = vadd.f32 %v2572, %v2948
        %v3077 = vadd.f32 %v2575, %v2949
        %v3078 = vadd.f32 %v2578, %v2950
        %v3079 = vadd.f32 %v2581, %v2951
        %v3080 = vadd.f32 %v2584, %v2952
        %v3081 = vadd.f32 %v2587, %v2953
        %v3082 = vadd.f32 %v2590, %v2954
        %v3083 = vadd.f32 %v2593, %v2955
        %v3084 = vadd.f32 %v2596, %v2956
        %v3085 = vadd.f32 %v2599, %v2957
        %v3086 = vadd.f32 %v2602, %v2958
        %v3087 = vadd.f32 %v2605, %v2959
        %v3088 = vadd.f32 %v2608, %v2960
        %v3089 = vadd.f32 %v2611, %v2961
        %v3090 = vadd.f32 %v2614, %v2962
        %v3091 = vadd.f32 %v2617, %v2963
        %v3092 = vadd.f32 %v2620, %v2964
        %v3093 = vadd.f32 %v2623, %v2965
        %v3094 = vadd.f32 %v2626, %v2966
        %v3095 = vadd.f32 %v2629, %v2967
        %v3096 = vadd.f32 %v2632, %v2968
        %v3097 = vadd.f32 %v2635, %v2969
        %v3098 = vadd.f32 %v2638, %v2970
        %v3099 = vadd.f32 %v2641, %v2971
        %v3100 = vadd.f32 %v2644, %v2972
        %v3101 = vadd.f32 %v2647, %v2973
        %v3102 = vadd.f32 %v2650, %v2974
        %v3103 = vadd.f32 %v2653, %v2975
        %v3104 = vadd.f32 %v2656, %v2976
        %v3105 = vadd.f32 %v2659, %v2977
        %v3106 = vadd.f32 %v2662, %v2978
        %v3107 = vadd.f32 %v2665, %v2979
        %v3108 = vadd.f32 %v2668, %v2980
        %v3109 = vadd.f32 %v2671, %v2981
        %v3110 = vadd.f32 %v2674, %v2982
        %v3111 = vadd.f32 %v2677, %v2983
        %v3112 = vadd.f32 %v2680, %v2984
        %v3113 = vadd.f32 %v2683, %v2985
        %v3114 = vadd.f32 %v2686, %v2986
        %v3115 = vadd.f32 %v2689, %v2987
        %v3116 = vadd.f32 %v2692, %v2988
        %v3117 = vadd.f32 %v2695, %v2989
        %v3118 = vadd.f32 %v2698, %v2990
        %v3119 = vadd.f32 %v2701, %v2991
        %v3120 = vadd.f32 %v2704, %v2992
        %v3121 = vadd.f32 %v2707, %v2993
        %v3122 = vadd.f32 %v2710, %v2994
        %v3123 = vadd.f32 %v2713, %v2995
        %v3124 = vadd.f32 %v2716, %v2996
        %v3125 = vadd.f32 %v2719, %v2997
        %v3126 = vadd.f32 %v2722, %v2998
        %v3127 = vadd.f32 %v2725, %v2999
        %v3128 = vadd.f32 %v2728, %v3000
        %v3129 = vadd.f32 %v2731, %v3001
        %v3130 = vadd.f32 %v2734, %v3002
        %v3131 = vadd.f32 %v2737, %v3003
        %v3132 = vadd.f32 %v2740, %v3004
        %v3133 = vadd.f32 %v2743, %v3005
        %v3134 = vadd.f32 %v2746, %v3006
        %v3135 = vadd.f32 %v2749, %v3007
        %v3136 = vadd.f32 %v2752, %v3008
        %v3137 = vadd.f32 %v2755, %v3009
        %v3138 = vadd.f32 %v2758, %v3010
        %v3139 = vadd.f32 %v2761, %v3011
        %v3140 = vadd.f32 %v2764, %v3012
        %v3141 = vadd.f32 %v2767, %v3013
        %v3142 = vadd.f32 %v2770, %v3014
        %v3143 = vadd.f32 %v2773, %v3015
        %v3144 = vadd.f32 %v2776, %v3016
        %v3145 = vadd.f32 %v2779, %v3017
        %v3146 = vadd.f32 %v2782, %v3018
        %v3147 = vadd.f32 %v2785, %v3019
        %v3148 = vadd.f32 %v2788, %v3020
        %v3149 = vadd.f32 %v2791, %v3021
        %v3150 = vadd.f32 %v2794, %v3022
        %v3151 = vadd.f32 %v2797, %v3023
        %v3152 = vadd.f32 %v2800, %v3024
        %v3153 = vadd.f32 %v2803, %v3025
        %v3154 = vadd.f32 %v2806, %v3026
        %v3155 = vadd.f32 %v2809, %v3027
        %v3156 = vadd.f32 %v2812, %v3028
        %v3157 = vadd.f32 %v2815, %v3029
        %v3158 = vadd.f32 %v2818, %v3030
        %v3159 = vadd.f32 %v2821, %v3031
        %v3160 = vadd.f32 %v2824, %v3032
        %v3161 = vadd.f32 %v2827, %v3033
        %v3162 = vadd.f32 %v2830, %v3034
        %v3163 = vadd.f32 %v2833, %v3035
        %v3164 = vadd.f32 %v2836, %v3036
        %v3165 = vadd.f32 %v2839, %v3037
        %v3166 = vadd.f32 %v2842, %v3038
        %v3167 = vadd.f32 %v2845, %v3039
        %v3168 = vadd.f32 %v2848, %v3040
        %v3169 = vadd.f32 %v2851, %v3041
        %v3170 = vadd.f32 %v2854, %v3042
        %v3171 = vadd.f32 %v2857, %v3043
        %v3172 = vadd.f32 %v2860, %v3044
        %v3173 = vadd.f32 %v2863, %v3045
        %v3174 = vadd.f32 %v2866, %v3046
        %v3175 = vadd.f32 %v2869, %v3047
        %v3176 = vadd.f32 %v2872, %v3048
        %v3177 = vadd.f32 %v2875, %v3049
        %v3178 = vadd.f32 %v2878, %v3050
        %v3179 = vadd.f32 %v2881, %v3051
        %v3180 = vadd.f32 %v2884, %v3052
        %v3181 = vadd.f32 %v2887, %v3053
        %v3182 = vadd.f32 %v2890, %v3054
        %v3183 = vadd.f32 %v2893, %v3055
        %v3184 = vadd.f32 %v2896, %v3056
        %v3185 = vadd.f32 %v2899, %v3057
        %v3186 = vadd.f32 %v2902, %v3058
        %v3187 = vadd.f32 %v2905, %v3059
        %v3188 = vadd.f32 %v2908, %v3060
        %v3189 = vadd.f32 %v2911, %v3061
        %v3190 = vadd.f32 %v2914, %v3062
        %v3191 = vadd.f32 %v2917, %v3063
        %v3192 = vadd.f32 %v2920, %v3064
        %v3193 = vadd.f32 %v2923, %v3065
        %v3194 = vadd.f32 %v2926, %v3066
        %v3195 = vadd.f32 %v2929, %v3067
        %v3196 = vadd.f32 %v2932, %v3068
        %v3197 = vadd.f32 %v2935, %v3069
        %v3198 = vadd.f32 %v2938, %v3070
        %v3199 = vadd.f32 %v2941, %v3071
        %v3200 = vadd.f32 %v2944, %v3072
        %v3201 = vmax.f32 %v3073, 0.0
        %v3202 = vmax.f32 %v3074, 0.0
        %v3203 = vmax.f32 %v3075, 0.0
        %v3204 = vmax.f32 %v3076, 0.0
        %v3205 = vmax.f32 %v3077, 0.0
        %v3206 = vmax.f32 %v3078, 0.0
        %v3207 = vmax.f32 %v3079, 0.0
        %v3208 = vmax.f32 %v3080, 0.0
        %v3209 = vmax.f32 %v3081, 0.0
        %v3210 = vmax.f32 %v3082, 0.0
        %v3211 = vmax.f32 %v3083, 0.0
        %v3212 = vmax.f32 %v3084, 0.0
        %v3213 = vmax.f32 %v3085, 0.0
        %v3214 = vmax.f32 %v3086, 0.0
        %v3215 = vmax.f32 %v3087, 0.0
        %v3216 = vmax.f32 %v3088, 0.0
        %v3217 = vmax.f32 %v3089, 0.0
        %v3218 = vmax.f32 %v3090, 0.0
        %v3219 = vmax.f32 %v3091, 0.0
        %v3220 = vmax.f32 %v3092, 0.0
        %v3221 = vmax.f32 %v3093, 0.0
        %v3222 = vmax.f32 %v3094, 0.0
        %v3223 = vmax.f32 %v3095, 0.0
        %v3224 = vmax.f32 %v3096, 0.0
        %v3225 = vmax.f32 %v3097, 0.0
        %v3226 = vmax.f32 %v3098, 0.0
        %v3227 = vmax.f32 %v3099, 0.0
        %v3228 = vmax.f32 %v3100, 0.0
        %v3229 = vmax.f32 %v3101, 0.0
        %v3230 = vmax.f32 %v3102, 0.0
        %v3231 = vmax.f32 %v3103, 0.0
        %v3232 = vmax.f32 %v3104, 0.0
        %v3233 = vmax.f32 %v3105, 0.0
        %v3234 = vmax.f32 %v3106, 0.0
        %v3235 = vmax.f32 %v3107, 0.0
        %v3236 = vmax.f32 %v3108, 0.0
        %v3237 = vmax.f32 %v3109, 0.0
        %v3238 = vmax.f32 %v3110, 0.0
        %v3239 = vmax.f32 %v3111, 0.0
        %v3240 = vmax.f32 %v3112, 0.0
        %v3241 = vmax.f32 %v3113, 0.0
        %v3242 = vmax.f32 %v3114, 0.0
        %v3243 = vmax.f32 %v3115, 0.0
        %v3244 = vmax.f32 %v3116, 0.0
        %v3245 = vmax.f32 %v3117, 0.0
        %v3246 = vmax.f32 %v3118, 0.0
        %v3247 = vmax.f32 %v3119, 0.0
        %v3248 = vmax.f32 %v3120, 0.0
        %v3249 = vmax.f32 %v3121, 0.0
        %v3250 = vmax.f32 %v3122, 0.0
        %v3251 = vmax.f32 %v3123, 0.0
        %v3252 = vmax.f32 %v3124, 0.0
        %v3253 = vmax.f32 %v3125, 0.0
        %v3254 = vmax.f32 %v3126, 0.0
        %v3255 = vmax.f32 %v3127, 0.0
        %v3256 = vmax.f32 %v3128, 0.0
        %v3257 = vmax.f32 %v3129, 0.0
        %v3258 = vmax.f32 %v3130, 0.0
        %v3259 = vmax.f32 %v3131, 0.0
        %v3260 = vmax.f32 %v3132, 0.0
        %v3261 = vmax.f32 %v3133, 0.0
        %v3262 = vmax.f32 %v3134, 0.0
        %v3263 = vmax.f32 %v3135, 0.0
        %v3264 = vmax.f32 %v3136, 0.0
        %v3265 = vmax.f32 %v3137, 0.0
        %v3266 = vmax.f32 %v3138, 0.0
        %v3267 = vmax.f32 %v3139, 0.0
        %v3268 = vmax.f32 %v3140, 0.0
        %v3269 = vmax.f32 %v3141, 0.0
        %v3270 = vmax.f32 %v3142, 0.0
        %v3271 = vmax.f32 %v3143, 0.0
        %v3272 = vmax.f32 %v3144, 0.0
        %v3273 = vmax.f32 %v3145, 0.0
        %v3274 = vmax.f32 %v3146, 0.0
        %v3275 = vmax.f32 %v3147, 0.0
        %v3276 = vmax.f32 %v3148, 0.0
        %v3277 = vmax.f32 %v3149, 0.0
        %v3278 = vmax.f32 %v3150, 0.0
        %v3279 = vmax.f32 %v3151, 0.0
        %v3280 = vmax.f32 %v3152, 0.0
        %v3281 = vmax.f32 %v3153, 0.0
        %v3282 = vmax.f32 %v3154, 0.0
        %v3283 = vmax.f32 %v3155, 0.0
        %v3284 = vmax.f32 %v3156, 0.0
        %v3285 = vmax.f32 %v3157, 0.0
        %v3286 = vmax.f32 %v3158, 0.0
        %v3287 = vmax.f32 %v3159, 0.0
        %v3288 = vmax.f32 %v3160, 0.0
        %v3289 = vmax.f32 %v3161, 0.0
        %v3290 = vmax.f32 %v3162, 0.0
        %v3291 = vmax.f32 %v3163, 0.0
        %v3292 = vmax.f32 %v3164, 0.0
        %v3293 = vmax.f32 %v3165, 0.0
        %v3294 = vmax.f32 %v3166, 0.0
        %v3295 = vmax.f32 %v3167, 0.0
        %v3296 = vmax.f32 %v3168, 0.0
        %v3297 = vmax.f32 %v3169, 0.0
        %v3298 = vmax.f32 %v3170, 0.0
        %v3299 = vmax.f32 %v3171, 0.0
        %v3300 = vmax.f32 %v3172, 0.0
        %v3301 = vmax.f32 %v3173, 0.0
        %v3302 = vmax.f32 %v3174, 0.0
        %v3303 = vmax.f32 %v3175, 0.0
        %v3304 = vmax.f32 %v3176, 0.0
        %v3305 = vmax.f32 %v3177, 0.0
        %v3306 = vmax.f32 %v3178, 0.0
        %v3307 = vmax.f32 %v3179, 0.0
        %v3308 = vmax.f32 %v3180, 0.0
        %v3309 = vmax.f32 %v3181, 0.0
        %v3310 = vmax.f32 %v3182, 0.0
        %v3311 = vmax.f32 %v3183, 0.0
        %v3312 = vmax.f32 %v3184, 0.0
        %v3313 = vmax.f32 %v3185, 0.0
        %v3314 = vmax.f32 %v3186, 0.0
        %v3315 = vmax.f32 %v3187, 0.0
        %v3316 = vmax.f32 %v3188, 0.0
        %v3317 = vmax.f32 %v3189, 0.0
        %v3318 = vmax.f32 %v3190, 0.0
        %v3319 = vmax.f32 %v3191, 0.0
        %v3320 = vmax.f32 %v3192, 0.0
        %v3321 = vmax.f32 %v3193, 0.0
        %v3322 = vmax.f32 %v3194, 0.0
        %v3323 = vmax.f32 %v3195, 0.0
        %v3324 = vmax.f32 %v3196, 0.0
        %v3325 = vmax.f32 %v3197, 0.0
        %v3326 = vmax.f32 %v3198, 0.0
        %v3327 = vmax.f32 %v3199, 0.0
        %v3328 = vmax.f32 %v3200, 0.0
        %vm3329 = vcmask 7168
        %3330 = vst.msk [vmem:[%s322] sm:$0xff] %vm3329, %v3201
        %3331 = vst.msk [vmem:[%s322 + $0x8] sm:$0xff] %vm3329, %v3202
        %3332 = vst.msk [vmem:[%s322 + $0x10] sm:$0xff] %vm3329, %v3203
        %3333 = vst.msk [vmem:[%s322 + $0x18] sm:$0xff] %vm3329, %v3204
        %3334 = vst.msk [vmem:[%s322 + $0x20] sm:$0xff] %vm3329, %v3205
        %3335 = vst.msk [vmem:[%s322 + $0x28] sm:$0xff] %vm3329, %v3206
        %3336 = vst.msk [vmem:[%s322 + $0x30] sm:$0xff] %vm3329, %v3207
        %3337 = vst.msk [vmem:[%s322 + $0x38] sm:$0xff] %vm3329, %v3208
        %3338 = vst.msk [vmem:[%s322 + $0x40] sm:$0xff] %vm3329, %v3209
        %3339 = vst.msk [vmem:[%s322 + $0x48] sm:$0xff] %vm3329, %v3210
        %3340 = vst.msk [vmem:[%s322 + $0x50] sm:$0xff] %vm3329, %v3211
        %3341 = vst.msk [vmem:[%s322 + $0x58] sm:$0xff] %vm3329, %v3212
        %3342 = vst.msk [vmem:[%s322 + $0x60] sm:$0xff] %vm3329, %v3213
        %3343 = vst.msk [vmem:[%s322 + $0x68] sm:$0xff] %vm3329, %v3214
        %3344 = vst.msk [vmem:[%s322 + $0x70] sm:$0xff] %vm3329, %v3215
        %3345 = vst.msk [vmem:[%s322 + $0x78] sm:$0xff] %vm3329, %v3216
        %3346 = vst.msk [vmem:[%s322 + $0x80] sm:$0xff] %vm3329, %v3217
        %3347 = vst.msk [vmem:[%s322 + $0x88] sm:$0xff] %vm3329, %v3218
        %3348 = vst.msk [vmem:[%s322 + $0x90] sm:$0xff] %vm3329, %v3219
        %3349 = vst.msk [vmem:[%s322 + $0x98] sm:$0xff] %vm3329, %v3220
        %3350 = vst.msk [vmem:[%s322 + $0xa0] sm:$0xff] %vm3329, %v3221
        %3351 = vst.msk [vmem:[%s322 + $0xa8] sm:$0xff] %vm3329, %v3222
        %3352 = vst.msk [vmem:[%s322 + $0xb0] sm:$0xff] %vm3329, %v3223
        %3353 = vst.msk [vmem:[%s322 + $0xb8] sm:$0xff] %vm3329, %v3224
        %3354 = vst.msk [vmem:[%s322 + $0xc0] sm:$0xff] %vm3329, %v3225
        %3355 = vst.msk [vmem:[%s322 + $0xc8] sm:$0xff] %vm3329, %v3226
        %3356 = vst.msk [vmem:[%s322 + $0xd0] sm:$0xff] %vm3329, %v3227
        %3357 = vst.msk [vmem:[%s322 + $0xd8] sm:$0xff] %vm3329, %v3228
        %3358 = vst.msk [vmem:[%s322 + $0xe0] sm:$0xff] %vm3329, %v3229
        %3359 = vst.msk [vmem:[%s322 + $0xe8] sm:$0xff] %vm3329, %v3230
        %3360 = vst.msk [vmem:[%s322 + $0xf0] sm:$0xff] %vm3329, %v3231
        %3361 = vst.msk [vmem:[%s322 + $0xf8] sm:$0xff] %vm3329, %v3232
        %3362 = vst.msk [vmem:[%s322 + $0x100] sm:$0xff] %vm3329, %v3233
        %3363 = vst.msk [vmem:[%s322 + $0x108] sm:$0xff] %vm3329, %v3234
        %3364 = vst.msk [vmem:[%s322 + $0x110] sm:$0xff] %vm3329, %v3235
        %3365 = vst.msk [vmem:[%s322 + $0x118] sm:$0xff] %vm3329, %v3236
        %3366 = vst.msk [vmem:[%s322 + $0x120] sm:$0xff] %vm3329, %v3237
        %3367 = vst.msk [vmem:[%s322 + $0x128] sm:$0xff] %vm3329, %v3238
        %3368 = vst.msk [vmem:[%s322 + $0x130] sm:$0xff] %vm3329, %v3239
        %3369 = vst.msk [vmem:[%s322 + $0x138] sm:$0xff] %vm3329, %v3240
        %3370 = vst.msk [vmem:[%s322 + $0x140] sm:$0xff] %vm3329, %v3241
        %3371 = vst.msk [vmem:[%s322 + $0x148] sm:$0xff] %vm3329, %v3242
        %3372 = vst.msk [vmem:[%s322 + $0x150] sm:$0xff] %vm3329, %v3243
        %3373 = vst.msk [vmem:[%s322 + $0x158] sm:$0xff] %vm3329, %v3244
        %3374 = vst.msk [vmem:[%s322 + $0x160] sm:$0xff] %vm3329, %v3245
        %3375 = vst.msk [vmem:[%s322 + $0x168] sm:$0xff] %vm3329, %v3246
        %3376 = vst.msk [vmem:[%s322 + $0x170] sm:$0xff] %vm3329, %v3247
        %3377 = vst.msk [vmem:[%s322 + $0x178] sm:$0xff] %vm3329, %v3248
        %3378 = vst.msk [vmem:[%s322 + $0x180] sm:$0xff] %vm3329, %v3249
        %3379 = vst.msk [vmem:[%s322 + $0x188] sm:$0xff] %vm3329, %v3250
        %3380 = vst.msk [vmem:[%s322 + $0x190] sm:$0xff] %vm3329, %v3251
        %3381 = vst.msk [vmem:[%s322 + $0x198] sm:$0xff] %vm3329, %v3252
        %3382 = vst.msk [vmem:[%s322 + $0x1a0] sm:$0xff] %vm3329, %v3253
        %3383 = vst.msk [vmem:[%s322 + $0x1a8] sm:$0xff] %vm3329, %v3254
        %3384 = vst.msk [vmem:[%s322 + $0x1b0] sm:$0xff] %vm3329, %v3255
        %3385 = vst.msk [vmem:[%s322 + $0x1b8] sm:$0xff] %vm3329, %v3256
        %3386 = vst.msk [vmem:[%s322 + $0x1c0] sm:$0xff] %vm3329, %v3257
        %3387 = vst.msk [vmem:[%s322 + $0x1c8] sm:$0xff] %vm3329, %v3258
        %3388 = vst.msk [vmem:[%s322 + $0x1d0] sm:$0xff] %vm3329, %v3259
        %3389 = vst.msk [vmem:[%s322 + $0x1d8] sm:$0xff] %vm3329, %v3260
        %3390 = vst.msk [vmem:[%s322 + $0x1e0] sm:$0xff] %vm3329, %v3261
        %3391 = vst.msk [vmem:[%s322 + $0x1e8] sm:$0xff] %vm3329, %v3262
        %3392 = vst.msk [vmem:[%s322 + $0x1f0] sm:$0xff] %vm3329, %v3263
        %3393 = vst.msk [vmem:[%s322 + $0x1f8] sm:$0xff] %vm3329, %v3264
        %3394 = vst.msk [vmem:[%s322 + $0x200] sm:$0xff] %vm3329, %v3265
        %3395 = vst.msk [vmem:[%s322 + $0x208] sm:$0xff] %vm3329, %v3266
        %3396 = vst.msk [vmem:[%s322 + $0x210] sm:$0xff] %vm3329, %v3267
        %3397 = vst.msk [vmem:[%s322 + $0x218] sm:$0xff] %vm3329, %v3268
        %3398 = vst.msk [vmem:[%s322 + $0x220] sm:$0xff] %vm3329, %v3269
        %3399 = vst.msk [vmem:[%s322 + $0x228] sm:$0xff] %vm3329, %v3270
        %3400 = vst.msk [vmem:[%s322 + $0x230] sm:$0xff] %vm3329, %v3271
        %3401 = vst.msk [vmem:[%s322 + $0x238] sm:$0xff] %vm3329, %v3272
        %3402 = vst.msk [vmem:[%s322 + $0x240] sm:$0xff] %vm3329, %v3273
        %3403 = vst.msk [vmem:[%s322 + $0x248] sm:$0xff] %vm3329, %v3274
        %3404 = vst.msk [vmem:[%s322 + $0x250] sm:$0xff] %vm3329, %v3275
        %3405 = vst.msk [vmem:[%s322 + $0x258] sm:$0xff] %vm3329, %v3276
        %3406 = vst.msk [vmem:[%s322 + $0x260] sm:$0xff] %vm3329, %v3277
        %3407 = vst.msk [vmem:[%s322 + $0x268] sm:$0xff] %vm3329, %v3278
        %3408 = vst.msk [vmem:[%s322 + $0x270] sm:$0xff] %vm3329, %v3279
        %3409 = vst.msk [vmem:[%s322 + $0x278] sm:$0xff] %vm3329, %v3280
        %3410 = vst.msk [vmem:[%s322 + $0x280] sm:$0xff] %vm3329, %v3281
        %3411 = vst.msk [vmem:[%s322 + $0x288] sm:$0xff] %vm3329, %v3282
        %3412 = vst.msk [vmem:[%s322 + $0x290] sm:$0xff] %vm3329, %v3283
        %3413 = vst.msk [vmem:[%s322 + $0x298] sm:$0xff] %vm3329, %v3284
        %3414 = vst.msk [vmem:[%s322 + $0x2a0] sm:$0xff] %vm3329, %v3285
        %3415 = vst.msk [vmem:[%s322 + $0x2a8] sm:$0xff] %vm3329, %v3286
        %3416 = vst.msk [vmem:[%s322 + $0x2b0] sm:$0xff] %vm3329, %v3287
        %3417 = vst.msk [vmem:[%s322 + $0x2b8] sm:$0xff] %vm3329, %v3288
        %3418 = vst.msk [vmem:[%s322 + $0x2c0] sm:$0xff] %vm3329, %v3289
        %3419 = vst.msk [vmem:[%s322 + $0x2c8] sm:$0xff] %vm3329, %v3290
        %3420 = vst.msk [vmem:[%s322 + $0x2d0] sm:$0xff] %vm3329, %v3291
        %3421 = vst.msk [vmem:[%s322 + $0x2d8] sm:$0xff] %vm3329, %v3292
        %3422 = vst.msk [vmem:[%s322 + $0x2e0] sm:$0xff] %vm3329, %v3293
        %3423 = vst.msk [vmem:[%s322 + $0x2e8] sm:$0xff] %vm3329, %v3294
        %3424 = vst.msk [vmem:[%s322 + $0x2f0] sm:$0xff] %vm3329, %v3295
        %3425 = vst.msk [vmem:[%s322 + $0x2f8] sm:$0xff] %vm3329, %v3296
        %3426 = vst.msk [vmem:[%s322 + $0x300] sm:$0xff] %vm3329, %v3297
        %3427 = vst.msk [vmem:[%s322 + $0x308] sm:$0xff] %vm3329, %v3298
        %3428 = vst.msk [vmem:[%s322 + $0x310] sm:$0xff] %vm3329, %v3299
        %3429 = vst.msk [vmem:[%s322 + $0x318] sm:$0xff] %vm3329, %v3300
        %3430 = vst.msk [vmem:[%s322 + $0x320] sm:$0xff] %vm3329, %v3301
        %3431 = vst.msk [vmem:[%s322 + $0x328] sm:$0xff] %vm3329, %v3302
        %3432 = vst.msk [vmem:[%s322 + $0x330] sm:$0xff] %vm3329, %v3303
        %3433 = vst.msk [vmem:[%s322 + $0x338] sm:$0xff] %vm3329, %v3304
        %3434 = vst.msk [vmem:[%s322 + $0x340] sm:$0xff] %vm3329, %v3305
        %3435 = vst.msk [vmem:[%s322 + $0x348] sm:$0xff] %vm3329, %v3306
        %3436 = vst.msk [vmem:[%s322 + $0x350] sm:$0xff] %vm3329, %v3307
        %3437 = vst.msk [vmem:[%s322 + $0x358] sm:$0xff] %vm3329, %v3308
        %3438 = vst.msk [vmem:[%s322 + $0x360] sm:$0xff] %vm3329, %v3309
        %3439 = vst.msk [vmem:[%s322 + $0x368] sm:$0xff] %vm3329, %v3310
        %3440 = vst.msk [vmem:[%s322 + $0x370] sm:$0xff] %vm3329, %v3311
        %3441 = vst.msk [vmem:[%s322 + $0x378] sm:$0xff] %vm3329, %v3312
        %3442 = vst.msk [vmem:[%s322 + $0x380] sm:$0xff] %vm3329, %v3313
        %3443 = vst.msk [vmem:[%s322 + $0x388] sm:$0xff] %vm3329, %v3314
        %3444 = vst.msk [vmem:[%s322 + $0x390] sm:$0xff] %vm3329, %v3315
        %3445 = vst.msk [vmem:[%s322 + $0x398] sm:$0xff] %vm3329, %v3316
        %3446 = vst.msk [vmem:[%s322 + $0x3a0] sm:$0xff] %vm3329, %v3317
        %3447 = vst.msk [vmem:[%s322 + $0x3a8] sm:$0xff] %vm3329, %v3318
        %3448 = vst.msk [vmem:[%s322 + $0x3b0] sm:$0xff] %vm3329, %v3319
        %3449 = vst.msk [vmem:[%s322 + $0x3b8] sm:$0xff] %vm3329, %v3320
        %3450 = vst.msk [vmem:[%s322 + $0x3c0] sm:$0xff] %vm3329, %v3321
        %3451 = vst.msk [vmem:[%s322 + $0x3c8] sm:$0xff] %vm3329, %v3322
        %3452 = vst.msk [vmem:[%s322 + $0x3d0] sm:$0xff] %vm3329, %v3323
        %3453 = vst.msk [vmem:[%s322 + $0x3d8] sm:$0xff] %vm3329, %v3324
        %3454 = vst.msk [vmem:[%s322 + $0x3e0] sm:$0xff] %vm3329, %v3325
        %3455 = vst.msk [vmem:[%s322 + $0x3e8] sm:$0xff] %vm3329, %v3326
        %3456 = vst.msk [vmem:[%s322 + $0x3f0] sm:$0xff] %vm3329, %v3327
        %3457 = vst.msk [vmem:[%s322 + $0x3f8] sm:$0xff] %vm3329, %v3328
      $region56: #{tpu_custom_call.1} parent=47 // pred_fallthru
        _
      %p3458 = scmp.lt.s32.totalorder %s23, 1
      %s3459 = scalar_select %p3458, %s23, 1
      %p3460 = scmp.lt.s32.totalorder %s24, 0
      %s3461 = scalar_select %p3460, %s24, 0
      %s3462 = smul.addr %s3461, 128
      %s3463 = smul.addr %s3459, 128
      %s3464 = sadd.s32 %s3462, %s3463
      %s3465 = smul.addr %s3464, 8
      %s3466 = scalar_lea.vmem %s7, %s3465
      // Predicated region
      $region57: #{tpu_custom_call.1} parent=47 // pred_check
        %p3467 = pneg %p213
      $region58: #{tpu_custom_call.1} parent=47 // pred_check_branch
        %3469 = sbr.rel (%p3467) target = $region60
      $region59: #{tpu_custom_call.1} parent=47 // pred_region
        _
      $region60: #{tpu_custom_call.1} parent=47 // pred_fallthru
        _
    $region48: #{tpu_custom_call.1} parent=5 // pred_fallthru
      _
    %p3470 = scmp.le.s32.totalorder 2, %s13
    // Predicated region
    $region61: #{tpu_custom_call.1} parent=5 // pred_check
      %p3471 = pneg %p3470
    $region62: #{tpu_custom_call.1} parent=5 // pred_check_branch
      %3473 = sbr.rel (%p3471) target = $region64
    $region63: #{tpu_custom_call.1} parent=5 // pred_region
      %s3474 = ssub.s32 %s13, 2
      // Predicated region
      $region65: #{tpu_custom_call.1} parent=63 // pred_check
        %p3475 = pneg %p219
      $region66: #{tpu_custom_call.1} parent=63 // pred_check_branch
        %3477 = sbr.rel (%p3475) target = $region68
      $region67: #{tpu_custom_call.1} parent=63 // pred_region
        %p3478 = scmp.lt.s32.totalorder %s26, 1
        %s3479 = scalar_select %p3478, %s26, 1
        %p3480 = scmp.lt.s32.totalorder %s27, 0
        %s3481 = scalar_select %p3480, %s27, 0
        %s3482 = smul.addr %s3481, 128
        %s3483 = smul.addr %s3479, 128
        %s3484 = sadd.s32 %s3482, %s3483
        %s3485 = smul.addr %s3484, 8
        %s3486 = scalar_lea.vmem %s7, %s3485
      $region68: #{tpu_custom_call.1} parent=63 // pred_fallthru
        _
    $region64: #{tpu_custom_call.1} parent=5 // pred_fallthru
      _
  $region6: #{tpu_custom_call.1} parent=0 // loop_footer
    %s17 = sadd.s32 1, %s13
  $region7: #{tpu_custom_call.1} parent=0 // loop_footer_branch
    %12 = sbr.rel target = $region3
  $region8: #{tpu_custom_call.1} parent=0 // loop_exit
    _

</llo_original>
